<compile_context>
chip_gen: v5e
topology: v5e:2x2
jax: 0.10.0
libtpu: 0.0.40
codegen_flags: <defaults>
</compile_context>

<pallas_src>
import functools

import jax
import jax.numpy as jnp
from jax.experimental import pallas as pl
from jax.experimental.pallas import tpu as pltpu

LANE = 128  # TPU lane width; K and N of every GEMM are padded to a multiple.


def _round_up(x, m):
    return (x + m - 1) // m * m


# ----------------------------------------------------------------------------
# Conv3d as a single K-packed GEMM (bias + ReLU fused)
# ----------------------------------------------------------------------------
def _conv_gemm_kernel(x_ref, w_ref, b_ref, o_ref):
    """One grid step = one (M tile, N tile).

    x_ref : (tm, Kp)  bf16   K-packed patches (all taps, real channels)
    w_ref : (Kp, tn)  bf16
    b_ref : (1, tn)   f32
    o_ref : (tm, tn)  bf16
    """
    acc = jnp.dot(x_ref[...], w_ref[...], preferred_element_type=jnp.float32)
    o_ref[...] = jnp.maximum(acc + b_ref[...], 0.0).astype(o_ref.dtype)


def _extract_patches(x, ksize, stride, padding):
    """x: (B, T, H, W, C) with REAL channel count C.

    Returns (B*To*Ho*Wo, n_taps*C) bf16 patches (taps concatenated along K in
    (dt, dh, dw) order, channel-minor) plus the output spatial shape.  Only
    cheap XLA strided slices + one concat -> ~n_taps/stride^2 of the (small,
    unpadded-channel) activation, not a lane-padded im2col.
    """
    kt, kh, kw = ksize
    st, sh, sw = stride
    pt, ph, pw = padding
    xp = jnp.pad(x, ((0, 0), (pt, pt), (ph, ph), (pw, pw), (0, 0)))
    B, Tp, Hp, Wp, C = xp.shape
    To = (Tp - kt) // st + 1
    Ho = (Hp - kh) // sh + 1
    Wo = (Wp - kw) // sw + 1
    taps = []
    for dt in range(kt):
        for dh in range(kh):
            for dw in range(kw):
                a = xp[:, dt:dt + (To - 1) * st + 1:st,
                       dh:dh + (Ho - 1) * sh + 1:sh,
                       dw:dw + (Wo - 1) * sw + 1:sw, :]
                taps.append(a)
    patches = jnp.concatenate(taps, axis=-1)          # (B, To, Ho, Wo, n_taps*C)
    K = patches.shape[-1]
    patches = patches.reshape(B * To * Ho * Wo, K).astype(jnp.bfloat16)
    return patches, (B, To, Ho, Wo)


def _prep_conv_weight(wl, bias, kp, np_pad):
    """(kt,kh,kw,Cin,Cout) -> (Kp, Np) bf16 in the same (dt,dh,dw,c) K order,
    plus (1, Np) f32 bias.  Padding rows/cols are zero."""
    kt, kh, kw, cin, cout = wl.shape
    w = wl.reshape(kt * kh * kw * cin, cout)
    w = jnp.pad(w, ((0, kp - w.shape[0]), (0, np_pad - cout))).astype(jnp.bfloat16)
    b = jnp.pad(bias, (0, np_pad - cout)).reshape(1, np_pad).astype(jnp.float32)
    return w, b


def conv3d_pallas(x, wl, bias, *, ksize, stride, padding):
    """Conv3d + bias + ReLU.  x: (B,T,H,W,Cin_real) -> (B,To,Ho,Wo,Np) bf16
    with Np = round_up(Cout, 128); channels >= Cout are exactly zero."""
    kt, kh, kw, cin, cout = wl.shape
    assert x.shape[-1] == cin, (x.shape, wl.shape)

    patches, (B, To, Ho, Wo) = _extract_patches(x, ksize, stride, padding)
    M, K = patches.shape
    Kp = _round_up(K, LANE)
    Np = _round_up(cout, LANE)
    if Kp > K:
        patches = jnp.pad(patches, ((0, 0), (0, Kp - K)))

    # M tiling: big rows for MXU fill, but keep >=2 parallel steps when we can.
    tm = 256 if M >= 512 else 128
    Mp = _round_up(M, tm)
    if Mp > M:
        patches = jnp.pad(patches, ((0, Mp - M), (0, 0)))
    m_tiles = Mp // tm
    tn = 256 if (Np % 256 == 0 and m_tiles >= 2) else 128
    n_tiles = Np // tn

    w, b = _prep_conv_weight(wl, bias, Kp, Np)

    flops = 2 * Mp * Kp * Np
    bytes_acc = int(Mp * Kp * 2 + Kp * Np * 2 + Mp * Np * 2 + Np * 4)

    out = pl.pallas_call(
        _conv_gemm_kernel,
        grid=(m_tiles, n_tiles),
        in_specs=[
            pl.BlockSpec((tm, Kp), lambda i, j: (i, 0)),
            pl.BlockSpec((Kp, tn), lambda i, j: (0, j)),
            pl.BlockSpec((1, tn), lambda i, j: (0, j)),
        ],
        out_specs=pl.BlockSpec((tm, tn), lambda i, j: (i, j)),
        out_shape=jax.ShapeDtypeStruct((Mp, Np), jnp.bfloat16),
        compiler_params=pltpu.CompilerParams(
            dimension_semantics=("parallel", "parallel"),
            vmem_limit_bytes=32 * 1024 * 1024),
        cost_estimate=pl.CostEstimate(flops=flops, transcendentals=0,
                                      bytes_accessed=bytes_acc),
    )(patches, w, b)
    return out[:M].reshape(B, To, Ho, Wo, Np)


# ----------------------------------------------------------------------------
# Fused tail: lateral concat (two K-split GEMMs) + 1x1x1 fuse conv + ReLU
#             + AdaptiveAvgPool3d((1,1,1)) + Dropout(identity) + Linear
# ----------------------------------------------------------------------------
def _tail_kernel(s_ref, f_ref, ws_ref, wf_ref, bl_ref, wfc_ref, bfc_ref, o_ref,
                 *, inv_s):
    # Concat-as-K-split: the concatenated tensor never exists.
    h = jnp.dot(s_ref[0], ws_ref[...], preferred_element_type=jnp.float32)
    h = h + jnp.dot(f_ref[0], wf_ref[...], preferred_element_type=jnp.float32)
    h = jnp.maximum(h + bl_ref[...], 0.0)                      # (S, 512) f32
    # TODO(synk): nn.Dropout(p=0.3) -> identity (inference mode).
    # Average over all positions FIRST (pool/FC commute), then one tiny f32 FC.
    pooled = jnp.sum(h, axis=0, keepdims=True) * inv_s         # (1, 512)
    pooled8 = jnp.broadcast_to(pooled, (8, pooled.shape[1]))   # fill sublanes
    logits = jnp.dot(pooled8, wfc_ref[...],
                     preferred_element_type=jnp.float32)       # (8, NCp) f32
    o_ref[0] = logits[0:1] + bfc_ref[...]


def tail_pallas(s, f, ws, wf, bl, wfc, bfc):
    B, S, Cs = s.shape
    Cf = f.shape[-1]
    H = ws.shape[1]
    NCp = wfc.shape[1]
    flops = 2 * B * S * (Cs + Cf) * H + 2 * B * H * NCp
    bytes_acc = int(s.size * 2 + f.size * 2 + ws.size * 2 + wf.size * 2 +
                    wfc.size * 4 + B * NCp * 4)
    out = pl.pallas_call(
        functools.partial(_tail_kernel, inv_s=1.0 / S),
        grid=(B,),
        in_specs=[
            pl.BlockSpec((1, S, Cs), lambda b: (b, 0, 0)),
            pl.BlockSpec((1, S, Cf), lambda b: (b, 0, 0)),
            pl.BlockSpec((Cs, H), lambda b: (0, 0)),
            pl.BlockSpec((Cf, H), lambda b: (0, 0)),
            pl.BlockSpec((1, H), lambda b: (0, 0)),
            pl.BlockSpec((H, NCp), lambda b: (0, 0)),
            pl.BlockSpec((1, NCp), lambda b: (0, 0)),
        ],
        out_specs=pl.BlockSpec((1, 1, NCp), lambda b: (b, 0, 0)),
        out_shape=jax.ShapeDtypeStruct((B, 1, NCp), jnp.float32),
        compiler_params=pltpu.CompilerParams(
            dimension_semantics=("parallel",),
            vmem_limit_bytes=32 * 1024 * 1024),
        cost_estimate=pl.CostEstimate(flops=flops, transcendentals=0,
                                      bytes_accessed=bytes_acc),
    )(s, f, ws, wf, bl, wfc, bfc)
    return out.reshape(B, NCp)


# ----------------------------------------------------------------------------
# Parameters
# ----------------------------------------------------------------------------
def init_params(key):
    ks = jax.random.split(key, 8)

    def conv_w(k, kt, kh, kw, cin, cout):
        fan = kt * kh * kw * cin
        return jax.random.normal(k, (kt, kh, kw, cin, cout), jnp.float32) / jnp.sqrt(float(fan))

    def lin_w(k, cin, cout):
        return jax.random.normal(k, (cin, cout), jnp.float32) / jnp.sqrt(float(cin))

    return {
        # slow pathway: 3 -> 64 -> 256
        "slow1_w": conv_w(ks[0], 1, 3, 3, 3, 64),  "slow1_b": jnp.zeros((64,), jnp.float32),
        "slow2_w": conv_w(ks[1], 1, 3, 3, 64, 256), "slow2_b": jnp.zeros((256,), jnp.float32),
        # fast pathway: 3 -> 8 -> 32
        "fast1_w": conv_w(ks[2], 3, 3, 3, 3, 8),   "fast1_b": jnp.zeros((8,), jnp.float32),
        "fast2_w": conv_w(ks[3], 3, 3, 3, 8, 32),  "fast2_b": jnp.zeros((32,), jnp.float32),
        # lateral: time-strided conv 32 -> 64, then 1x1x1 fuse (256 + 64) -> 512
        "latt_w": conv_w(ks[4], 2, 1, 1, 32, 64),  "latt_b": jnp.zeros((64,), jnp.float32),
        "latf_ws": lin_w(ks[5], 256, 512),
        "latf_wf": lin_w(ks[6], 64, 512),
        "latf_b": jnp.zeros((512,), jnp.float32),
        # classifier: Linear(512, 16)
        "fc_w": lin_w(ks[7], 512, 16), "fc_b": jnp.zeros((16,), jnp.float32),
    }


# ----------------------------------------------------------------------------
# Forward
# ----------------------------------------------------------------------------
def slowfast_forward(params, x_slow, x_fast):
    # PyTorch NCDHW -> NDHWC; channels stay at their REAL counts (K-packing
    # happens per layer in conv3d_pallas).
    xs = jnp.transpose(x_slow, (0, 2, 3, 4, 1)).astype(jnp.float32)
    xf = jnp.transpose(x_fast, (0, 2, 3, 4, 1)).astype(jnp.float32)

    # Slow pathway: two (1,3,3)/stride(1,2,2) conv+ReLU, 3 -> 64 -> 256.
    s = conv3d_pallas(xs, params["slow1_w"], params["slow1_b"],
                      ksize=(1, 3, 3), stride=(1, 2, 2), padding=(0, 1, 1))
    s = conv3d_pallas(s[..., :64], params["slow2_w"], params["slow2_b"],
                      ksize=(1, 3, 3), stride=(1, 2, 2), padding=(0, 1, 1))

    # Fast pathway: two (3,3,3)/stride(1,2,2) conv+ReLU, 3 -> 8 -> 32.
    f = conv3d_pallas(xf, params["fast1_w"], params["fast1_b"],
                      ksize=(3, 3, 3), stride=(1, 2, 2), padding=(1, 1, 1))
    f = conv3d_pallas(f[..., :8], params["fast2_w"], params["fast2_b"],
                      ksize=(3, 3, 3), stride=(1, 2, 2), padding=(1, 1, 1))

    # Lateral temporal alignment: (2,1,1)/stride(2,1,1) conv+ReLU, 32 -> 64.
    f2s = conv3d_pallas(f[..., :32], params["latt_w"], params["latt_b"],
                        ksize=(2, 1, 1), stride=(2, 1, 1), padding=(0, 0, 0))

    # Fused tail.
    B, T, H, W, Cs = s.shape
    S = T * H * W
    s2 = s.reshape(B, S, Cs)                       # (B, S, 256) bf16
    f2 = f2s.reshape(B, S, f2s.shape[-1])          # (B, S, 128) bf16, chans >=64 are zero
    ws = params["latf_ws"].astype(jnp.bfloat16)                            # (256, 512)
    wf = jnp.pad(params["latf_wf"], ((0, f2.shape[-1] - 64), (0, 0))).astype(jnp.bfloat16)
    bl = params["latf_b"].reshape(1, 512).astype(jnp.float32)
    wfc = jnp.pad(params["fc_w"], ((0, 0), (0, LANE - 16))).astype(jnp.float32)   # (512, 128)
    bfc = jnp.pad(params["fc_b"], (0, LANE - 16)).reshape(1, LANE).astype(jnp.float32)
    logits = tail_pallas(s2, f2, ws, wf, bl, wfc, bfc)
    return logits[:, :params["fc_b"].shape[0]]


if __name__ == "__main__":
    key = jax.random.PRNGKey(0)
    kp, k_slow, k_fast = jax.random.split(key, 3)
    params = init_params(kp)

    # Slow stream: 4 frames; fast stream: 8 frames (alpha = 2), 16x16 spatial.
    x_slow = jax.random.normal(k_slow, (2, 3, 4, 16, 16), jnp.float32)
    x_fast = jax.random.normal(k_fast, (2, 3, 8, 16, 16), jnp.float32)

    logits = jax.jit(slowfast_forward)(params, x_slow, x_fast)
    logits = jax.block_until_ready(logits)

    assert logits.shape == (2, 16), logits.shape
    assert bool(jnp.all(jnp.isfinite(logits)))
    print("KERNEL_OK")
</pallas_src>

<mosaic_0001>
module attributes {stable_mosaic.version = 11 : i64} {
  func.func @_conv_gemm_kernel(%arg0: i32, %arg1: i32, %arg2: memref<256x128xbf16, #tpu.memory_space<vmem>>, %arg3: memref<128x128xbf16, #tpu.memory_space<vmem>>, %arg4: memref<1x128xf32, #tpu.memory_space<vmem>>, %arg5: memref<256x128xbf16, #tpu.memory_space<vmem>>) attributes {dimension_semantics = [#tpu.dimension_semantics<parallel>, #tpu.dimension_semantics<parallel>], iteration_bounds = array<i64: 4, 1>, scalar_prefetch = 0 : i64, scratch_operands = 0 : i64, tpu.core_type = #tpu.core_type<tc>, window_params = [{transform_indices = @transform_0, window_bounds = array<i64: 256, 128>}, {transform_indices = @transform_1, window_bounds = array<i64: 128, 128>}, {transform_indices = @transform_2, window_bounds = array<i64: 1, 128>}, {transform_indices = @transform_3, window_bounds = array<i64: 256, 128>}]} {
    %c0 = arith.constant 0 : index
    %c0_0 = arith.constant 0 : index
    %0 = vector.load %arg2[%c0, %c0_0] : memref<256x128xbf16, #tpu.memory_space<vmem>>, vector<256x128xbf16>
    %c0_1 = arith.constant 0 : index
    %c0_2 = arith.constant 0 : index
    %1 = vector.load %arg3[%c0_1, %c0_2] : memref<128x128xbf16, #tpu.memory_space<vmem>>, vector<128x128xbf16>
    %cst = arith.constant dense<0.000000e+00> : vector<256x128xf32>
    %2 = tpu.matmul %0, %1, %cst {dimension_numbers = #tpu.dot_dimension_numbers<[1], [0], [0], [1], [0, 0, 1, 1], [], []>} : vector<256x128xbf16>, vector<128x128xbf16>, vector<256x128xf32> -> vector<256x128xf32>
    %c0_3 = arith.constant 0 : index
    %c0_4 = arith.constant 0 : index
    %3 = vector.load %arg4[%c0_3, %c0_4] : memref<1x128xf32, #tpu.memory_space<vmem>>, vector<1x128xf32>
    %4 = vector.broadcast %3 : vector<1x128xf32> to vector<256x128xf32>
    %5 = arith.addf %2, %4 : vector<256x128xf32>
    %cst_5 = arith.constant 0.000000e+00 : f32
    %6 = vector.broadcast %cst_5 : f32 to vector<256x128xf32>
    %7 = arith.maximumf %5, %6 : vector<256x128xf32>
    %8 = arith.truncf %7 : vector<256x128xf32> to vector<256x128xbf16>
    %c0_6 = arith.constant 0 : index
    %c0_7 = arith.constant 0 : index
    %9 = vector.load %arg5[%c0_6, %c0_7] : memref<256x128xbf16, #tpu.memory_space<vmem>>, vector<256x128xbf16>
    tpu.vector_store %arg5[%c0_6, %c0_7], %8 {strides = array<i32>} : memref<256x128xbf16, #tpu.memory_space<vmem>>, vector<256x128xbf16>,
    return
  }
  func.func @transform_0(%arg0: i32, %arg1: i32) -> (i32, i32) {
    %c0_i32 = arith.constant 0 : i32
    %c0_i32_0 = arith.constant 0 : i32
    return %arg0, %c0_i32 : i32, i32
  }
  func.func @transform_1(%arg0: i32, %arg1: i32) -> (i32, i32) {
    %c0_i32 = arith.constant 0 : i32
    %c0_i32_0 = arith.constant 0 : i32
    return %c0_i32, %arg1 : i32, i32
  }
  func.func @transform_2(%arg0: i32, %arg1: i32) -> (i32, i32) {
    %c0_i32 = arith.constant 0 : i32
    %c0_i32_0 = arith.constant 0 : i32
    return %c0_i32, %arg1 : i32, i32
  }
  func.func @transform_3(%arg0: i32, %arg1: i32) -> (i32, i32) {
    %c0_i32 = arith.constant 0 : i32
    return %arg0, %arg1 : i32, i32
  }
}

module attributes {stable_mosaic.version = 11 : i64} {
  func.func @_conv_gemm_kernel(%arg0: i32, %arg1: i32, %arg2: memref<128x256xbf16, #tpu.memory_space<vmem>>, %arg3: memref<256x128xbf16, #tpu.memory_space<vmem>>, %arg4: memref<1x128xf32, #tpu.memory_space<vmem>>, %arg5: memref<128x128xbf16, #tpu.memory_space<vmem>>) attributes {dimension_semantics = [#tpu.dimension_semantics<parallel>, #tpu.dimension_semantics<parallel>], iteration_bounds = array<i64: 2, 1>, scalar_prefetch = 0 : i64, scratch_operands = 0 : i64, tpu.core_type = #tpu.core_type<tc>, window_params = [{transform_indices = @transform_0, window_bounds = array<i64: 128, 256>}, {transform_indices = @transform_1, window_bounds = array<i64: 256, 128>}, {transform_indices = @transform_2, window_bounds = array<i64: 1, 128>}, {transform_indices = @transform_3, window_bounds = array<i64: 128, 128>}]} {
    %c0 = arith.constant 0 : index
    %c0_0 = arith.constant 0 : index
    %0 = vector.load %arg2[%c0, %c0_0] : memref<128x256xbf16, #tpu.memory_space<vmem>>, vector<128x256xbf16>
    %c0_1 = arith.constant 0 : index
    %c0_2 = arith.constant 0 : index
    %1 = vector.load %arg3[%c0_1, %c0_2] : memref<256x128xbf16, #tpu.memory_space<vmem>>, vector<256x128xbf16>
    %cst = arith.constant dense<0.000000e+00> : vector<128x128xf32>
    %2 = tpu.matmul %0, %1, %cst {dimension_numbers = #tpu.dot_dimension_numbers<[1], [0], [0], [1], [0, 0, 1, 1], [], []>} : vector<128x256xbf16>, vector<256x128xbf16>, vector<128x128xf32> -> vector<128x128xf32>
    %c0_3 = arith.constant 0 : index
    %c0_4 = arith.constant 0 : index
    %3 = vector.load %arg4[%c0_3, %c0_4] : memref<1x128xf32, #tpu.memory_space<vmem>>, vector<1x128xf32>
    %4 = vector.broadcast %3 : vector<1x128xf32> to vector<128x128xf32>
    %5 = arith.addf %2, %4 : vector<128x128xf32>
    %cst_5 = arith.constant 0.000000e+00 : f32
    %6 = vector.broadcast %cst_5 : f32 to vector<128x128xf32>
    %7 = arith.maximumf %5, %6 : vector<128x128xf32>
    %8 = arith.truncf %7 : vector<128x128xf32> to vector<128x128xbf16>
    %c0_6 = arith.constant 0 : index
    %c0_7 = arith.constant 0 : index
    %9 = vector.load %arg5[%c0_6, %c0_7] : memref<128x128xbf16, #tpu.memory_space<vmem>>, vector<128x128xbf16>
    tpu.vector_store %arg5[%c0_6, %c0_7], %8 {strides = array<i32>} : memref<128x128xbf16, #tpu.memory_space<vmem>>, vector<128x128xbf16>,
    return
  }
  func.func @transform_0(%arg0: i32, %arg1: i32) -> (i32, i32) {
    %c0_i32 = arith.constant 0 : i32
    %c0_i32_0 = arith.constant 0 : i32
    return %arg0, %c0_i32 : i32, i32
  }
  func.func @transform_1(%arg0: i32, %arg1: i32) -> (i32, i32) {
    %c0_i32 = arith.constant 0 : i32
    %c0_i32_0 = arith.constant 0 : i32
    return %c0_i32, %arg1 : i32, i32
  }
  func.func @transform_2(%arg0: i32, %arg1: i32) -> (i32, i32) {
    %c0_i32 = arith.constant 0 : i32
    %c0_i32_0 = arith.constant 0 : i32
    return %c0_i32, %arg1 : i32, i32
  }
  func.func @transform_3(%arg0: i32, %arg1: i32) -> (i32, i32) {
    %c0_i32 = arith.constant 0 : i32
    return %arg0, %arg1 : i32, i32
  }
}

module attributes {stable_mosaic.version = 11 : i64} {
  func.func @_conv_gemm_kernel(%arg0: i32, %arg1: i32, %arg2: memref<128x128xbf16, #tpu.memory_space<vmem>>, %arg3: memref<128x128xbf16, #tpu.memory_space<vmem>>, %arg4: memref<1x128xf32, #tpu.memory_space<vmem>>, %arg5: memref<128x128xbf16, #tpu.memory_space<vmem>>) attributes {dimension_semantics = [#tpu.dimension_semantics<parallel>, #tpu.dimension_semantics<parallel>], iteration_bounds = array<i64: 1, 1>, scalar_prefetch = 0 : i64, scratch_operands = 0 : i64, tpu.core_type = #tpu.core_type<tc>, window_params = [{transform_indices = @transform_0, window_bounds = array<i64: 128, 128>}, {transform_indices = @transform_1, window_bounds = array<i64: 128, 128>}, {transform_indices = @transform_2, window_bounds = array<i64: 1, 128>}, {transform_indices = @transform_3, window_bounds = array<i64: 128, 128>}]} {
    %c0 = arith.constant 0 : index
    %c0_0 = arith.constant 0 : index
    %0 = vector.load %arg2[%c0, %c0_0] : memref<128x128xbf16, #tpu.memory_space<vmem>>, vector<128x128xbf16>
    %c0_1 = arith.constant 0 : index
    %c0_2 = arith.constant 0 : index
    %1 = vector.load %arg3[%c0_1, %c0_2] : memref<128x128xbf16, #tpu.memory_space<vmem>>, vector<128x128xbf16>
    %cst = arith.constant dense<0.000000e+00> : vector<128x128xf32>
    %2 = tpu.matmul %0, %1, %cst {dimension_numbers = #tpu.dot_dimension_numbers<[1], [0], [0], [1], [0, 0, 1, 1], [], []>} : vector<128x128xbf16>, vector<128x128xbf16>, vector<128x128xf32> -> vector<128x128xf32>
    %c0_3 = arith.constant 0 : index
    %c0_4 = arith.constant 0 : index
    %3 = vector.load %arg4[%c0_3, %c0_4] : memref<1x128xf32, #tpu.memory_space<vmem>>, vector<1x128xf32>
    %4 = vector.broadcast %3 : vector<1x128xf32> to vector<128x128xf32>
    %5 = arith.addf %2, %4 : vector<128x128xf32>
    %cst_5 = arith.constant 0.000000e+00 : f32
    %6 = vector.broadcast %cst_5 : f32 to vector<128x128xf32>
    %7 = arith.maximumf %5, %6 : vector<128x128xf32>
    %8 = arith.truncf %7 : vector<128x128xf32> to vector<128x128xbf16>
    %c0_6 = arith.constant 0 : index
    %c0_7 = arith.constant 0 : index
    %9 = vector.load %arg5[%c0_6, %c0_7] : memref<128x128xbf16, #tpu.memory_space<vmem>>, vector<128x128xbf16>
    tpu.vector_store %arg5[%c0_6, %c0_7], %8 {strides = array<i32>} : memref<128x128xbf16, #tpu.memory_space<vmem>>, vector<128x128xbf16>,
    return
  }
  func.func @transform_0(%arg0: i32, %arg1: i32) -> (i32, i32) {
    %c0_i32 = arith.constant 0 : i32
    %c0_i32_0 = arith.constant 0 : i32
    return %arg0, %c0_i32 : i32, i32
  }
  func.func @transform_1(%arg0: i32, %arg1: i32) -> (i32, i32) {
    %c0_i32 = arith.constant 0 : i32
    %c0_i32_0 = arith.constant 0 : i32
    return %c0_i32, %arg1 : i32, i32
  }
  func.func @transform_2(%arg0: i32, %arg1: i32) -> (i32, i32) {
    %c0_i32 = arith.constant 0 : i32
    %c0_i32_0 = arith.constant 0 : i32
    return %c0_i32, %arg1 : i32, i32
  }
  func.func @transform_3(%arg0: i32, %arg1: i32) -> (i32, i32) {
    %c0_i32 = arith.constant 0 : i32
    return %arg0, %arg1 : i32, i32
  }
}

module attributes {stable_mosaic.version = 11 : i64} {
  func.func @_conv_gemm_kernel(%arg0: i32, %arg1: i32, %arg2: memref<256x128xbf16, #tpu.memory_space<vmem>>, %arg3: memref<128x128xbf16, #tpu.memory_space<vmem>>, %arg4: memref<1x128xf32, #tpu.memory_space<vmem>>, %arg5: memref<256x128xbf16, #tpu.memory_space<vmem>>) attributes {dimension_semantics = [#tpu.dimension_semantics<parallel>, #tpu.dimension_semantics<parallel>], iteration_bounds = array<i64: 2, 1>, scalar_prefetch = 0 : i64, scratch_operands = 0 : i64, tpu.core_type = #tpu.core_type<tc>, window_params = [{transform_indices = @transform_0, window_bounds = array<i64: 256, 128>}, {transform_indices = @transform_1, window_bounds = array<i64: 128, 128>}, {transform_indices = @transform_2, window_bounds = array<i64: 1, 128>}, {transform_indices = @transform_3, window_bounds = array<i64: 256, 128>}]} {
    %c0 = arith.constant 0 : index
    %c0_0 = arith.constant 0 : index
    %0 = vector.load %arg2[%c0, %c0_0] : memref<256x128xbf16, #tpu.memory_space<vmem>>, vector<256x128xbf16>
    %c0_1 = arith.constant 0 : index
    %c0_2 = arith.constant 0 : index
    %1 = vector.load %arg3[%c0_1, %c0_2] : memref<128x128xbf16, #tpu.memory_space<vmem>>, vector<128x128xbf16>
    %cst = arith.constant dense<0.000000e+00> : vector<256x128xf32>
    %2 = tpu.matmul %0, %1, %cst {dimension_numbers = #tpu.dot_dimension_numbers<[1], [0], [0], [1], [0, 0, 1, 1], [], []>} : vector<256x128xbf16>, vector<128x128xbf16>, vector<256x128xf32> -> vector<256x128xf32>
    %c0_3 = arith.constant 0 : index
    %c0_4 = arith.constant 0 : index
    %3 = vector.load %arg4[%c0_3, %c0_4] : memref<1x128xf32, #tpu.memory_space<vmem>>, vector<1x128xf32>
    %4 = vector.broadcast %3 : vector<1x128xf32> to vector<256x128xf32>
    %5 = arith.addf %2, %4 : vector<256x128xf32>
    %cst_5 = arith.constant 0.000000e+00 : f32
    %6 = vector.broadcast %cst_5 : f32 to vector<256x128xf32>
    %7 = arith.maximumf %5, %6 : vector<256x128xf32>
    %8 = arith.truncf %7 : vector<256x128xf32> to vector<256x128xbf16>
    %c0_6 = arith.constant 0 : index
    %c0_7 = arith.constant 0 : index
    %9 = vector.load %arg5[%c0_6, %c0_7] : memref<256x128xbf16, #tpu.memory_space<vmem>>, vector<256x128xbf16>
    tpu.vector_store %arg5[%c0_6, %c0_7], %8 {strides = array<i32>} : memref<256x128xbf16, #tpu.memory_space<vmem>>, vector<256x128xbf16>,
    return
  }
  func.func @transform_0(%arg0: i32, %arg1: i32) -> (i32, i32) {
    %c0_i32 = arith.constant 0 : i32
    %c0_i32_0 = arith.constant 0 : i32
    return %arg0, %c0_i32 : i32, i32
  }
  func.func @transform_1(%arg0: i32, %arg1: i32) -> (i32, i32) {
    %c0_i32 = arith.constant 0 : i32
    %c0_i32_0 = arith.constant 0 : i32
    return %c0_i32, %arg1 : i32, i32
  }
  func.func @transform_2(%arg0: i32, %arg1: i32) -> (i32, i32) {
    %c0_i32 = arith.constant 0 : i32
    %c0_i32_0 = arith.constant 0 : i32
    return %c0_i32, %arg1 : i32, i32
  }
  func.func @transform_3(%arg0: i32, %arg1: i32) -> (i32, i32) {
    %c0_i32 = arith.constant 0 : i32
    return %arg0, %arg1 : i32, i32
  }
}

module attributes {stable_mosaic.version = 11 : i64} {
  func.func @_conv_gemm_kernel(%arg0: i32, %arg1: i32, %arg2: memref<128x640xbf16, #tpu.memory_space<vmem>>, %arg3: memref<640x128xbf16, #tpu.memory_space<vmem>>, %arg4: memref<1x128xf32, #tpu.memory_space<vmem>>, %arg5: memref<128x128xbf16, #tpu.memory_space<vmem>>) attributes {dimension_semantics = [#tpu.dimension_semantics<parallel>, #tpu.dimension_semantics<parallel>], iteration_bounds = array<i64: 1, 2>, scalar_prefetch = 0 : i64, scratch_operands = 0 : i64, tpu.core_type = #tpu.core_type<tc>, window_params = [{transform_indices = @transform_0, window_bounds = array<i64: 128, 640>}, {transform_indices = @transform_1, window_bounds = array<i64: 640, 128>}, {transform_indices = @transform_2, window_bounds = array<i64: 1, 128>}, {transform_indices = @transform_3, window_bounds = array<i64: 128, 128>}]} {
    %c0 = arith.constant 0 : index
    %c0_0 = arith.constant 0 : index
    %0 = vector.load %arg2[%c0, %c0_0] : memref<128x640xbf16, #tpu.memory_space<vmem>>, vector<128x640xbf16>
    %c0_1 = arith.constant 0 : index
    %c0_2 = arith.constant 0 : index
    %1 = vector.load %arg3[%c0_1, %c0_2] : memref<640x128xbf16, #tpu.memory_space<vmem>>, vector<640x128xbf16>
    %cst = arith.constant dense<0.000000e+00> : vector<128x128xf32>
    %2 = tpu.matmul %0, %1, %cst {dimension_numbers = #tpu.dot_dimension_numbers<[1], [0], [0], [1], [0, 0, 1, 1], [], []>} : vector<128x640xbf16>, vector<640x128xbf16>, vector<128x128xf32> -> vector<128x128xf32>
    %c0_3 = arith.constant 0 : index
    %c0_4 = arith.constant 0 : index
    %3 = vector.load %arg4[%c0_3, %c0_4] : memref<1x128xf32, #tpu.memory_space<vmem>>, vector<1x128xf32>
    %4 = vector.broadcast %3 : vector<1x128xf32> to vector<128x128xf32>
    %5 = arith.addf %2, %4 : vector<128x128xf32>
    %cst_5 = arith.constant 0.000000e+00 : f32
    %6 = vector.broadcast %cst_5 : f32 to vector<128x128xf32>
    %7 = arith.maximumf %5, %6 : vector<128x128xf32>
    %8 = arith.truncf %7 : vector<128x128xf32> to vector<128x128xbf16>
    %c0_6 = arith.constant 0 : index
    %c0_7 = arith.constant 0 : index
    %9 = vector.load %arg5[%c0_6, %c0_7] : memref<128x128xbf16, #tpu.memory_space<vmem>>, vector<128x128xbf16>
    tpu.vector_store %arg5[%c0_6, %c0_7], %8 {strides = array<i32>} : memref<128x128xbf16, #tpu.memory_space<vmem>>, vector<128x128xbf16>,
    return
  }
  func.func @transform_0(%arg0: i32, %arg1: i32) -> (i32, i32) {
    %c0_i32 = arith.constant 0 : i32
    %c0_i32_0 = arith.constant 0 : i32
    return %arg0, %c0_i32 : i32, i32
  }
  func.func @transform_1(%arg0: i32, %arg1: i32) -> (i32, i32) {
    %c0_i32 = arith.constant 0 : i32
    %c0_i32_0 = arith.constant 0 : i32
    return %c0_i32, %arg1 : i32, i32
  }
  func.func @transform_2(%arg0: i32, %arg1: i32) -> (i32, i32) {
    %c0_i32 = arith.constant 0 : i32
    %c0_i32_0 = arith.constant 0 : i32
    return %c0_i32, %arg1 : i32, i32
  }
  func.func @transform_3(%arg0: i32, %arg1: i32) -> (i32, i32) {
    %c0_i32 = arith.constant 0 : i32
    return %arg0, %arg1 : i32, i32
  }
}

module attributes {stable_mosaic.version = 11 : i64} {
  func.func @_tail_kernel(%arg0: i32, %arg1: memref<1x64x256xbf16, #tpu.memory_space<vmem>>, %arg2: memref<1x64x128xbf16, #tpu.memory_space<vmem>>, %arg3: memref<256x512xbf16, #tpu.memory_space<vmem>>, %arg4: memref<128x512xbf16, #tpu.memory_space<vmem>>, %arg5: memref<1x512xf32, #tpu.memory_space<vmem>>, %arg6: memref<512x128xf32, #tpu.memory_space<vmem>>, %arg7: memref<1x128xf32, #tpu.memory_space<vmem>>, %arg8: memref<1x1x128xf32, #tpu.memory_space<vmem>>) attributes {dimension_semantics = [#tpu.dimension_semantics<parallel>], iteration_bounds = array<i64: 2>, scalar_prefetch = 0 : i64, scratch_operands = 0 : i64, tpu.core_type = #tpu.core_type<tc>, window_params = [{transform_indices = @transform_0, window_bounds = array<i64: 1, 64, 256>}, {transform_indices = @transform_1, window_bounds = array<i64: 1, 64, 128>}, {pipeline_mode = #tpu.pipeline_mode<synchronous>, transform_indices = @transform_2, window_bounds = array<i64: 256, 512>}, {pipeline_mode = #tpu.pipeline_mode<synchronous>, transform_indices = @transform_3, window_bounds = array<i64: 128, 512>}, {pipeline_mode = #tpu.pipeline_mode<synchronous>, transform_indices = @transform_4, window_bounds = array<i64: 1, 512>}, {pipeline_mode = #tpu.pipeline_mode<synchronous>, transform_indices = @transform_5, window_bounds = array<i64: 512, 128>}, {pipeline_mode = #tpu.pipeline_mode<synchronous>, transform_indices = @transform_6, window_bounds = array<i64: 1, 128>}, {transform_indices = @transform_7, window_bounds = array<i64: 1, 1, 128>}]} {
    %c0 = arith.constant 0 : index
    %c0_0 = arith.constant 0 : index
    %c0_1 = arith.constant 0 : index
    %0 = vector.load %arg1[%c0, %c0_0, %c0_1] : memref<1x64x256xbf16, #tpu.memory_space<vmem>>, vector<1x64x256xbf16>
    %1 = vector.shape_cast %0 : vector<1x64x256xbf16> to vector<64x256xbf16>
    %c0_2 = arith.constant 0 : index
    %c0_3 = arith.constant 0 : index
    %2 = vector.load %arg3[%c0_2, %c0_3] : memref<256x512xbf16, #tpu.memory_space<vmem>>, vector<256x512xbf16>
    %cst = arith.constant dense<0.000000e+00> : vector<64x512xf32>
    %3 = tpu.matmul %1, %2, %cst {dimension_numbers = #tpu.dot_dimension_numbers<[1], [0], [0], [1], [0, 0, 1, 1], [], []>} : vector<64x256xbf16>, vector<256x512xbf16>, vector<64x512xf32> -> vector<64x512xf32>
    %c0_4 = arith.constant 0 : index
    %c0_5 = arith.constant 0 : index
    %c0_6 = arith.constant 0 : index
    %4 = vector.load %arg2[%c0_4, %c0_5, %c0_6] : memref<1x64x128xbf16, #tpu.memory_space<vmem>>, vector<1x64x128xbf16>
    %5 = vector.shape_cast %4 : vector<1x64x128xbf16> to vector<64x128xbf16>
    %c0_7 = arith.constant 0 : index
    %c0_8 = arith.constant 0 : index
    %6 = vector.load %arg4[%c0_7, %c0_8] : memref<128x512xbf16, #tpu.memory_space<vmem>>, vector<128x512xbf16>
    %cst_9 = arith.constant dense<0.000000e+00> : vector<64x512xf32>
    %7 = tpu.matmul %5, %6, %cst_9 {dimension_numbers = #tpu.dot_dimension_numbers<[1], [0], [0], [1], [0, 0, 1, 1], [], []>} : vector<64x128xbf16>, vector<128x512xbf16>, vector<64x512xf32> -> vector<64x512xf32>
    %8 = arith.addf %3, %7 : vector<64x512xf32>
    %c0_10 = arith.constant 0 : index
    %c0_11 = arith.constant 0 : index
    %9 = vector.load %arg5[%c0_10, %c0_11] : memref<1x512xf32, #tpu.memory_space<vmem>>, vector<1x512xf32>
    %10 = vector.broadcast %9 : vector<1x512xf32> to vector<64x512xf32>
    %11 = arith.addf %8, %10 : vector<64x512xf32>
    %cst_12 = arith.constant 0.000000e+00 : f32
    %12 = vector.broadcast %cst_12 : f32 to vector<64x512xf32>
    %13 = arith.maximumf %11, %12 : vector<64x512xf32>
    %cst_13 = arith.constant dense<0.000000e+00> : vector<512xf32>
    %14 = vector.multi_reduction <add>, %13, %cst_13 [0] : vector<64x512xf32> to vector<512xf32>
    %15 = vector.shape_cast %14 : vector<512xf32> to vector<1x512xf32>
    %cst_14 = arith.constant 1.562500e-02 : f32
    %16 = vector.broadcast %cst_14 : f32 to vector<1x512xf32>
    %17 = arith.mulf %15, %16 : vector<1x512xf32>
    %18 = vector.shape_cast %17 : vector<1x512xf32> to vector<1x512xf32>
    %19 = vector.broadcast %18 : vector<1x512xf32> to vector<8x512xf32>
    %c0_15 = arith.constant 0 : index
    %c0_16 = arith.constant 0 : index
    %20 = vector.load %arg6[%c0_15, %c0_16] : memref<512x128xf32, #tpu.memory_space<vmem>>, vector<512x128xf32>
    %cst_17 = arith.constant dense<0.000000e+00> : vector<8x128xf32>
    %21 = tpu.matmul %19, %20, %cst_17 {dimension_numbers = #tpu.dot_dimension_numbers<[1], [0], [0], [1], [0, 0, 1, 1], [], []>} : vector<8x512xf32>, vector<512x128xf32>, vector<8x128xf32> -> vector<8x128xf32>
    %22 = vector.extract_strided_slice %21 {offsets = [0, 0], sizes = [1, 128], strides = [1, 1]} : vector<8x128xf32> to vector<1x128xf32>
    %c0_18 = arith.constant 0 : index
    %c0_19 = arith.constant 0 : index
    %23 = vector.load %arg7[%c0_18, %c0_19] : memref<1x128xf32, #tpu.memory_space<vmem>>, vector<1x128xf32>
    %24 = arith.addf %22, %23 : vector<1x128xf32>
    %c0_20 = arith.constant 0 : index
    %c0_21 = arith.constant 0 : index
    %c0_22 = arith.constant 0 : index
    %25 = vector.load %arg8[%c0_20, %c0_21, %c0_22] : memref<1x1x128xf32, #tpu.memory_space<vmem>>, vector<1x1x128xf32>
    %26 = vector.shape_cast %25 : vector<1x1x128xf32> to vector<1x128xf32>
    %27 = vector.shape_cast %24 : vector<1x128xf32> to vector<1x1x128xf32>
    tpu.vector_store %arg8[%c0_20, %c0_21, %c0_22], %27 {strides = array<i32>} : memref<1x1x128xf32, #tpu.memory_space<vmem>>, vector<1x1x128xf32>,
    return
  }
  func.func @transform_0(%arg0: i32) -> (i32, i32, i32) {
    %c0_i32 = arith.constant 0 : i32
    %c0_i32_0 = arith.constant 0 : i32
    %c0_i32_1 = arith.constant 0 : i32
    return %arg0, %c0_i32, %c0_i32_0 : i32, i32, i32
  }
  func.func @transform_1(%arg0: i32) -> (i32, i32, i32) {
    %c0_i32 = arith.constant 0 : i32
    %c0_i32_0 = arith.constant 0 : i32
    %c0_i32_1 = arith.constant 0 : i32
    return %arg0, %c0_i32, %c0_i32_0 : i32, i32, i32
  }
  func.func @transform_2(%arg0: i32) -> (i32, i32) {
    %c0_i32 = arith.constant 0 : i32
    %c0_i32_0 = arith.constant 0 : i32
    %c0_i32_1 = arith.constant 0 : i32
    return %c0_i32, %c0_i32_0 : i32, i32
  }
  func.func @transform_3(%arg0: i32) -> (i32, i32) {
    %c0_i32 = arith.constant 0 : i32
    %c0_i32_0 = arith.constant 0 : i32
    %c0_i32_1 = arith.constant 0 : i32
    return %c0_i32, %c0_i32_0 : i32, i32
  }
  func.func @transform_4(%arg0: i32) -> (i32, i32) {
    %c0_i32 = arith.constant 0 : i32
    %c0_i32_0 = arith.constant 0 : i32
    %c0_i32_1 = arith.constant 0 : i32
    return %c0_i32, %c0_i32_0 : i32, i32
  }
  func.func @transform_5(%arg0: i32) -> (i32, i32) {
    %c0_i32 = arith.constant 0 : i32
    %c0_i32_0 = arith.constant 0 : i32
    %c0_i32_1 = arith.constant 0 : i32
    return %c0_i32, %c0_i32_0 : i32, i32
  }
  func.func @transform_6(%arg0: i32) -> (i32, i32) {
    %c0_i32 = arith.constant 0 : i32
    %c0_i32_0 = arith.constant 0 : i32
    %c0_i32_1 = arith.constant 0 : i32
    return %c0_i32, %c0_i32_0 : i32, i32
  }
  func.func @transform_7(%arg0: i32) -> (i32, i32, i32) {
    %c0_i32 = arith.constant 0 : i32
    %c0_i32_0 = arith.constant 0 : i32
    %c0_i32_1 = arith.constant 0 : i32
    return %arg0, %c0_i32, %c0_i32_0 : i32, i32, i32
  }
}

</mosaic_0001>

<llo_original>
// kernel: slowfast_forward.8
$region0: #{slowfast_forward.8}
  #allocation0 [shape = 'u32[]', space=smem, size = 0x4, offset = 0x4, fixed_abs, tag = 'smem constant byte address 0x4 - core index']
  #allocation1 [shape = 'u32[72,128]{1,0:T(1,128)}', space=vmem, size = 0x9000, scoped, tag = 'internal scratch']
  %s0 = inlined_call_operand.vmem [shape: bf16[1024,128], index: 0, kind: input, shape index: {}]
  %s1 = inlined_call_operand.vmem [shape: bf16[128,128], index: 1, kind: input, shape index: {}]
  %s2 = inlined_call_operand.vmem [shape: f32[1,128], index: 2, kind: input, shape index: {}]
  %s3 = inlined_call_operand.vmem [shape: bf16[1024,128], index: 3, kind: output, shape index: {}]
  %s4 = sld [smem:[#allocation0]]
  $region45: #{slowfast_forward.8} parent=0
    _
  %s6 = ssub.s32 1, %s4
  %s7 = scalar_select 0, %s6, %s4
  loop: start=0, step=1, limit=6
  $region2: #{slowfast_forward.8} parent=0 // loop_pre_header
    _
  $region3: #{slowfast_forward.8} parent=0 // loop_header
    %s9 = sphi 0, %s13
    %p10 = scmp.ge.s32.totalorder %s9, 6
    %s16 = sphi 0, %s28
    %s17 = sphi 0, %s24
    %s18 = sphi 0, %s16
    %s19 = sphi 0, %s17
    %s20 = sphi 0, %s18
    %s21 = sphi 0, %s19
    %s31 = sphi 0, %s33
    %s34 = sphi 0, %s31
    %s35 = sphi 0, %s34
    %s51 = sphi 0, %s35
    %s57 = sphi 0, %s59
    %s60 = sphi 0, %s57
    %s61 = sphi 0, %s60
    %s77 = sphi 0, %s61
    %s83 = sphi 0, %s85
    %s86 = sphi 0, %s83
    %s87 = sphi 0, %s86
    %s103 = sphi 0, %s87
    %s111 = sphi 0, %s113
    %s114 = sphi 0, %s111
    %s115 = sphi 0, %s114
    %s131 = sphi 0, %s115
  $region4: #{slowfast_forward.8} parent=0 // loop_header_branch
    %12 = sbr.rel (%p10) target = $region8
  $region5: #{slowfast_forward.8} parent=0 // loop_body
    %s14 = ssub.s32 %s9, 1
    %s15 = ssub.s32 %s9, 2
    %s22 = sadd.s32 1, %s17
    %p23 = scmp.ge.s32.totalorder %s22, 1
    %s24 = scalar_select %p23, 0, %s22
    %s25 = sadd.s32 1, %s16
    %s26 = scalar_select %p23, %s25, %s16
    %p27 = scmp.ge.s32.totalorder %s26, 4
    %s28 = scalar_select %p27, 0, %s26
    %s29 = ssub.s32 %s16, %s28
    %p30 = scmp.eq.s32.totalorder %s29, 0
    %s32 = sadd.s32 %s31, 1
    %s33 = scalar_select %p30, %s31, %s32
    %p36 = pneg %p30
    %p37 = scmp.eq.s32.totalorder %s9, 3
    %p38 = por %p36, %p37
    %p39 = scmp.ne.s32.totalorder %s31, %s34
    %p40 = scmp.eq.s32.totalorder %s9, 0
    %p41 = por %p39, %p40
    %p42 = scmp.ne.s32.totalorder %s31, %s34
    %p43 = scmp.eq.s32.totalorder %s14, 3
    %p44 = por %p42, %p43
    %p45 = scmp.ne.s32.totalorder %s34, %s35
    %p46 = scmp.eq.s32.totalorder %s14, 0
    %p47 = por %p45, %p46
    %p48 = scmp.ne.s32.totalorder %s34, %s35
    %p49 = scmp.eq.s32.totalorder %s15, 3
    %p50 = por %p48, %p49
    %p52 = scmp.ne.s32.totalorder %s35, %s51
    %p53 = scmp.eq.s32.totalorder %s15, 0
    %p54 = por %p52, %p53
    %s55 = ssub.s32 %s17, %s24
    %p56 = scmp.eq.s32.totalorder %s55, 0
    %s58 = sadd.s32 %s57, 1
    %s59 = scalar_select %p56, %s57, %s58
    %p62 = pneg %p56
    %p63 = scmp.eq.s32.totalorder %s9, 3
    %p64 = por %p62, %p63
    %p65 = scmp.ne.s32.totalorder %s57, %s60
    %p66 = scmp.eq.s32.totalorder %s9, 0
    %p67 = por %p65, %p66
    %p68 = scmp.ne.s32.totalorder %s57, %s60
    %p69 = scmp.eq.s32.totalorder %s14, 3
    %p70 = por %p68, %p69
    %p71 = scmp.ne.s32.totalorder %s60, %s61
    %p72 = scmp.eq.s32.totalorder %s14, 0
    %p73 = por %p71, %p72
    %p74 = scmp.ne.s32.totalorder %s60, %s61
    %p75 = scmp.eq.s32.totalorder %s15, 3
    %p76 = por %p74, %p75
    %p78 = scmp.ne.s32.totalorder %s61, %s77
    %p79 = scmp.eq.s32.totalorder %s15, 0
    %p80 = por %p78, %p79
    %s81 = ssub.s32 %s17, %s24
    %p82 = scmp.eq.s32.totalorder %s81, 0
    %s84 = sadd.s32 %s83, 1
    %s85 = scalar_select %p82, %s83, %s84
    %p88 = pneg %p82
    %p89 = scmp.eq.s32.totalorder %s9, 3
    %p90 = por %p88, %p89
    %p91 = scmp.ne.s32.totalorder %s83, %s86
    %p92 = scmp.eq.s32.totalorder %s9, 0
    %p93 = por %p91, %p92
    %p94 = scmp.ne.s32.totalorder %s83, %s86
    %p95 = scmp.eq.s32.totalorder %s14, 3
    %p96 = por %p94, %p95
    %p97 = scmp.ne.s32.totalorder %s86, %s87
    %p98 = scmp.eq.s32.totalorder %s14, 0
    %p99 = por %p97, %p98
    %p100 = scmp.ne.s32.totalorder %s86, %s87
    %p101 = scmp.eq.s32.totalorder %s15, 3
    %p102 = por %p100, %p101
    %p104 = scmp.ne.s32.totalorder %s87, %s103
    %p105 = scmp.eq.s32.totalorder %s15, 0
    %p106 = por %p104, %p105
    %s107 = ssub.s32 %s16, %s28
    %s108 = ssub.s32 %s17, %s24
    %s109 = sor.u32 %s107, %s108
    %p110 = scmp.eq.s32.totalorder %s109, 0
    %s112 = sadd.s32 %s111, 1
    %s113 = scalar_select %p110, %s111, %s112
    %p116 = pneg %p110
    %p117 = scmp.eq.s32.totalorder %s9, 3
    %p118 = por %p116, %p117
    %p119 = scmp.ne.s32.totalorder %s111, %s114
    %p120 = scmp.eq.s32.totalorder %s9, 0
    %p121 = por %p119, %p120
    %p122 = scmp.ne.s32.totalorder %s111, %s114
    %p123 = scmp.eq.s32.totalorder %s14, 3
    %p124 = por %p122, %p123
    %p125 = scmp.ne.s32.totalorder %s114, %s115
    %p126 = scmp.eq.s32.totalorder %s14, 0
    %p127 = por %p125, %p126
    %p128 = scmp.ne.s32.totalorder %s114, %s115
    %p129 = scmp.eq.s32.totalorder %s15, 3
    %p130 = por %p128, %p129
    %p132 = scmp.ne.s32.totalorder %s115, %s131
    %p133 = scmp.eq.s32.totalorder %s15, 0
    %p134 = por %p132, %p133
    %p135 = scmp.le.s32.totalorder 1, %s9
    %p136 = scmp.lt.s32.totalorder %s9, 5
    %p137 = pnand %p135, %p136
    %p138 = pneg %p137
    // Predicated region
    $region9: #{slowfast_forward.8} parent=5 // pred_check
      _
    $region10: #{slowfast_forward.8} parent=5 // pred_check_branch
      %140 = sbr.rel (%p137) target = $region12
    $region11: #{slowfast_forward.8} parent=5 // pred_region
      %s141 = ssub.s32 %s9, 1
      // Predicated region
      $region13: #{slowfast_forward.8} parent=11 // pred_check
        %p142 = pneg %p73
      $region14: #{slowfast_forward.8} parent=11 // pred_check_branch
        %144 = sbr.rel (%p142) target = $region16
      $region15: #{slowfast_forward.8} parent=11 // pred_region
        %p145 = scmp.lt.s32.totalorder %s19, 0
        %s146 = scalar_select %p145, %s19, 0
        %s147 = smul.addr %s146, 4
        %s148 = scalar_lea.vmem %s1, %s147
      $region16: #{slowfast_forward.8} parent=11 // pred_fallthru
        _
      // Predicated region
      $region17: #{slowfast_forward.8} parent=11 // pred_check
        %p149 = pneg %p99
      $region18: #{slowfast_forward.8} parent=11 // pred_check_branch
        %151 = sbr.rel (%p149) target = $region20
      $region19: #{slowfast_forward.8} parent=11 // pred_region
        %p152 = scmp.lt.s32.totalorder %s19, 0
        %s153 = scalar_select %p152, %s19, 0
        %s154 = scalar_lea.vmem %s2, %s153
      $region20: #{slowfast_forward.8} parent=11 // pred_fallthru
        _
    $region12: #{slowfast_forward.8} parent=5 // pred_fallthru
      _
    %p155 = scmp.lt.s32.totalorder %s9, 4
    // Predicated region
    $region21: #{slowfast_forward.8} parent=5 // pred_check
      %p156 = pneg %p155
    $region22: #{slowfast_forward.8} parent=5 // pred_check_branch
      %158 = sbr.rel (%p156) target = $region24
    $region23: #{slowfast_forward.8} parent=5 // pred_region
      // Predicated region
      $region25: #{slowfast_forward.8} parent=23 // pred_check
        %p159 = pneg %p41
      $region26: #{slowfast_forward.8} parent=23 // pred_check_branch
        %161 = sbr.rel (%p159) target = $region28
      $region27: #{slowfast_forward.8} parent=23 // pred_region
        %s162 = smul.u32 32, %s16
        %p163 = scmp.lt.s32.totalorder %s162, 127
        %s164 = scalar_select %p163, %s162, 127
        %s165 = smul.addr %s164, 4
        %s166 = scalar_lea.vmem %s0, %s165
        %s167 = smul.u32 32, %s16
      $region28: #{slowfast_forward.8} parent=23 // pred_fallthru
        _
    $region24: #{slowfast_forward.8} parent=5 // pred_fallthru
      _
    %p168 = scmp.le.s32.totalorder 1, %s9
    %p169 = scmp.lt.s32.totalorder %s9, 5
    %p170 = pnand %p168, %p169
    %p171 = pneg %p170
    // Predicated region
    $region29: #{slowfast_forward.8} parent=5 // pred_check
      _
    $region30: #{slowfast_forward.8} parent=5 // pred_check_branch
      %173 = sbr.rel (%p170) target = $region32
    $region31: #{slowfast_forward.8} parent=5 // pred_region
      %s174 = ssub.s32 %s9, 1
      %s175 = smul.u32 32, %s18
      %p176 = scmp.lt.s32.totalorder %s175, 127
      %s177 = scalar_select %p176, %s175, 127
      %s178 = smul.addr %s177, 4
      %s179 = scalar_lea.vmem %s0, %s178
      %p180 = pneg %p47
      %p181 = pneg %p44
      %p182 = scmp.lt.s32.totalorder %s19, 0
      %s183 = scalar_select %p182, %s19, 0
      %s184 = smul.addr %s183, 4
      %s185 = scalar_lea.vmem %s1, %s184
      %p186 = pneg %p73
      %p187 = pneg %p70
      %p188 = scmp.lt.s32.totalorder %s19, 0
      %s189 = scalar_select %p188, %s19, 0
      %s190 = scalar_lea.vmem %s2, %s189
      %p191 = pneg %p99
      %p192 = pneg %p96
      %p193 = pneg %p127
      %p194 = pneg %p124
      %s195 = smul.u32 32, %s18
      %p196 = scmp.lt.s32.totalorder %s195, 127
      %s197 = scalar_select %p196, %s195, 127
      %p198 = scmp.lt.s32.totalorder %s19, 0
      %s199 = scalar_select %p198, %s19, 0
      %s200 = sadd.s32 %s199, %s197
      %s201 = smul.addr %s200, 4
      %s202 = scalar_lea.vmem %s3, %s201
      %s203 = smul.u32 32, %s18
      %p204 = scmp.lt.s32.totalorder %s203, 127
      %s205 = scalar_select %p204, %s203, 127
      %s206 = smul.addr %s205, 4
      %s207 = scalar_lea.vmem %s0, %s206
      %s208 = smul.u32 32, %s18
      %p209 = scmp.lt.s32.totalorder %s19, 0
      %s210 = scalar_select %p209, %s19, 0
      %s211 = smul.addr %s210, 4
      %s212 = scalar_lea.vmem %s1, %s211
      %p213 = scmp.lt.s32.totalorder %s19, 0
      %s214 = scalar_select %p213, %s19, 0
      %s215 = scalar_lea.vmem %s2, %s214
      %s216 = smul.u32 32, %s18
      %p217 = scmp.lt.s32.totalorder %s216, 127
      %s218 = scalar_select %p217, %s216, 127
      %p219 = scmp.lt.s32.totalorder %s19, 0
      %s220 = scalar_select %p219, %s19, 0
      %s221 = sadd.s32 %s220, %s218
      %s222 = smul.addr %s221, 4
      %s223 = scalar_lea.vmem %s3, %s222
      %s224 = smul.u32 32, %s18
      %v225 = vld [vmem:[%s207] sm:$0xf]
      %v226 = vld [vmem:[%s207 + $0x4] sm:$0xf]
      %v227 = vld [vmem:[%s207 + $0x8] sm:$0xf]
      %v228 = vld [vmem:[%s207 + $0xc] sm:$0xf]
      %v229 = vld [vmem:[%s207 + $0x10] sm:$0xf]
      %v230 = vld [vmem:[%s207 + $0x14] sm:$0xf]
      %v231 = vld [vmem:[%s207 + $0x18] sm:$0xf]
      %v232 = vld [vmem:[%s207 + $0x1c] sm:$0xf]
      %v233 = vld [vmem:[%s207 + $0x20] sm:$0xf]
      %v234 = vld [vmem:[%s207 + $0x24] sm:$0xf]
      %v235 = vld [vmem:[%s207 + $0x28] sm:$0xf]
      %v236 = vld [vmem:[%s207 + $0x2c] sm:$0xf]
      %v237 = vld [vmem:[%s207 + $0x30] sm:$0xf]
      %v238 = vld [vmem:[%s207 + $0x34] sm:$0xf]
      %v239 = vld [vmem:[%s207 + $0x38] sm:$0xf]
      %v240 = vld [vmem:[%s207 + $0x3c] sm:$0xf]
      %v241 = vld [vmem:[%s207 + $0x40] sm:$0xf]
      %v242 = vld [vmem:[%s207 + $0x44] sm:$0xf]
      %v243 = vld [vmem:[%s207 + $0x48] sm:$0xf]
      %v244 = vld [vmem:[%s207 + $0x4c] sm:$0xf]
      %v245 = vld [vmem:[%s207 + $0x50] sm:$0xf]
      %v246 = vld [vmem:[%s207 + $0x54] sm:$0xf]
      %v247 = vld [vmem:[%s207 + $0x58] sm:$0xf]
      %v248 = vld [vmem:[%s207 + $0x5c] sm:$0xf]
      %v249 = vld [vmem:[%s207 + $0x60] sm:$0xf]
      %v250 = vld [vmem:[%s207 + $0x64] sm:$0xf]
      %v251 = vld [vmem:[%s207 + $0x68] sm:$0xf]
      %v252 = vld [vmem:[%s207 + $0x6c] sm:$0xf]
      %v253 = vld [vmem:[%s207 + $0x70] sm:$0xf]
      %v254 = vld [vmem:[%s207 + $0x74] sm:$0xf]
      %v255 = vld [vmem:[%s207 + $0x78] sm:$0xf]
      %v256 = vld [vmem:[%s207 + $0x7c] sm:$0xf]
      %v257 = vld [vmem:[%s212] sm:$0xf]
      %v258 = vld [vmem:[%s212 + $0x4] sm:$0xf]
      %v259 = vld [vmem:[%s212 + $0x8] sm:$0xf]
      %v260 = vld [vmem:[%s212 + $0xc] sm:$0xf]
      %v261 = vld [vmem:[%s212 + $0x10] sm:$0xf]
      %v262 = vld [vmem:[%s212 + $0x14] sm:$0xf]
      %v263 = vld [vmem:[%s212 + $0x18] sm:$0xf]
      %v264 = vld [vmem:[%s212 + $0x1c] sm:$0xf]
      %v265 = vld [vmem:[%s212 + $0x20] sm:$0xf]
      %v266 = vld [vmem:[%s212 + $0x24] sm:$0xf]
      %v267 = vld [vmem:[%s212 + $0x28] sm:$0xf]
      %v268 = vld [vmem:[%s212 + $0x2c] sm:$0xf]
      %v269 = vld [vmem:[%s212 + $0x30] sm:$0xf]
      %v270 = vld [vmem:[%s212 + $0x34] sm:$0xf]
      %v271 = vld [vmem:[%s212 + $0x38] sm:$0xf]
      %v272 = vld [vmem:[%s212 + $0x3c] sm:$0xf]
      %v273 = vld [vmem:[%s215] sm:$0x1]
      %v275 = vperm.slane %v273, 0
      %v309 = vunpack.c.l.b16 %v225
      %v310 = vunpack.c.l.b16 %v226
      %v311 = vunpack.c.l.b16 %v227
      %v312 = vunpack.c.l.b16 %v228
      %v313 = vunpack.c.l.b16 %v229
      %v314 = vunpack.c.l.b16 %v230
      %v315 = vunpack.c.l.b16 %v231
      %v316 = vunpack.c.l.b16 %v232
      %v317 = vunpack.c.l.b16 %v233
      %v318 = vunpack.c.l.b16 %v234
      %v319 = vunpack.c.l.b16 %v235
      %v320 = vunpack.c.l.b16 %v236
      %v321 = vunpack.c.l.b16 %v237
      %v322 = vunpack.c.l.b16 %v238
      %v323 = vunpack.c.l.b16 %v239
      %v324 = vunpack.c.l.b16 %v240
      %v325 = vunpack.c.l.b16 %v241
      %v326 = vunpack.c.l.b16 %v242
      %v327 = vunpack.c.l.b16 %v243
      %v328 = vunpack.c.l.b16 %v244
      %v329 = vunpack.c.l.b16 %v245
      %v330 = vunpack.c.l.b16 %v246
      %v331 = vunpack.c.l.b16 %v247
      %v332 = vunpack.c.l.b16 %v248
      %v333 = vunpack.c.l.b16 %v249
      %v334 = vunpack.c.l.b16 %v250
      %v335 = vunpack.c.l.b16 %v251
      %v336 = vunpack.c.l.b16 %v252
      %v337 = vunpack.c.l.b16 %v253
      %v338 = vunpack.c.l.b16 %v254
      %v339 = vunpack.c.l.b16 %v255
      %v340 = vunpack.c.l.b16 %v256
      %v341 = vpack.c.b16 %v310, %v309
      %v342 = vpack.c.b16 %v312, %v311
      %v343 = vpack.c.b16 %v314, %v313
      %v344 = vpack.c.b16 %v316, %v315
      %v345 = vpack.c.b16 %v318, %v317
      %v346 = vpack.c.b16 %v320, %v319
      %v347 = vpack.c.b16 %v322, %v321
      %v348 = vpack.c.b16 %v324, %v323
      %v349 = vpack.c.b16 %v326, %v325
      %v350 = vpack.c.b16 %v328, %v327
      %v351 = vpack.c.b16 %v330, %v329
      %v352 = vpack.c.b16 %v332, %v331
      %v353 = vpack.c.b16 %v334, %v333
      %v354 = vpack.c.b16 %v336, %v335
      %v355 = vpack.c.b16 %v338, %v337
      %v356 = vpack.c.b16 %v340, %v339
      %v389 = vunpack.c.l.b16 %v257
      %v390 = vunpack.c.l.b16 %v258
      %v391 = vunpack.c.l.b16 %v259
      %v392 = vunpack.c.l.b16 %v260
      %v393 = vunpack.c.l.b16 %v261
      %v394 = vunpack.c.l.b16 %v262
      %v395 = vunpack.c.l.b16 %v263
      %v396 = vunpack.c.l.b16 %v264
      %v397 = vunpack.c.l.b16 %v265
      %v398 = vunpack.c.l.b16 %v266
      %v399 = vunpack.c.l.b16 %v267
      %v400 = vunpack.c.l.b16 %v268
      %v401 = vunpack.c.l.b16 %v269
      %v402 = vunpack.c.l.b16 %v270
      %v403 = vunpack.c.l.b16 %v271
      %v404 = vunpack.c.l.b16 %v272
      %v405 = vpack.c.b16 %v390, %v389
      %v406 = vpack.c.b16 %v392, %v391
      %v407 = vpack.c.b16 %v394, %v393
      %v408 = vpack.c.b16 %v396, %v395
      %v409 = vpack.c.b16 %v398, %v397
      %v410 = vpack.c.b16 %v400, %v399
      %v411 = vpack.c.b16 %v402, %v401
      %v412 = vpack.c.b16 %v404, %v403
      %421 = vmatpush.bf16.msra.mxu0 %v412
      %422 = vmatpush.bf16.msra.mxu0 %v411
      %423 = vmatpush.bf16.msra.mxu0 %v410
      %424 = vmatpush.bf16.msra.mxu0 %v409
      %425 = vmatpush.bf16.msra.mxu0 %v408
      %426 = vmatpush.bf16.msra.mxu0 %v407
      %427 = vmatpush.bf16.msra.mxu0 %v406
      %428 = vmatpush.bf16.msra.mxu0 %v405
      %429 = vmatmul.bf16.gmra.mxu0 %v341
      %v430 = vpop.f32.mrf.mxu0
      %v431 = vadd.f32 %v275, %v430
      %v432 = vpop.f32.mrf.mxu0
      %v433 = vadd.f32 %v275, %v432
      %434 = vmatmul.bf16.gmra.mxu0 %v342
      %v435 = vpop.f32.mrf.mxu0
      %v436 = vadd.f32 %v275, %v435
      %v437 = vpop.f32.mrf.mxu0
      %v438 = vadd.f32 %v275, %v437
      %439 = vmatmul.bf16.gmra.mxu0 %v343
      %v440 = vpop.f32.mrf.mxu0
      %v441 = vadd.f32 %v275, %v440
      %v442 = vpop.f32.mrf.mxu0
      %v443 = vadd.f32 %v275, %v442
      %444 = vmatmul.bf16.gmra.mxu0 %v344
      %v445 = vpop.f32.mrf.mxu0
      %v446 = vadd.f32 %v275, %v445
      %v447 = vpop.f32.mrf.mxu0
      %v448 = vadd.f32 %v275, %v447
      %449 = vmatmul.bf16.gmra.mxu0 %v345
      %v450 = vpop.f32.mrf.mxu0
      %v451 = vadd.f32 %v275, %v450
      %v452 = vpop.f32.mrf.mxu0
      %v453 = vadd.f32 %v275, %v452
      %454 = vmatmul.bf16.gmra.mxu0 %v346
      %v455 = vpop.f32.mrf.mxu0
      %v456 = vadd.f32 %v275, %v455
      %v457 = vpop.f32.mrf.mxu0
      %v458 = vadd.f32 %v275, %v457
      %459 = vmatmul.bf16.gmra.mxu0 %v347
      %v460 = vpop.f32.mrf.mxu0
      %v461 = vadd.f32 %v275, %v460
      %v462 = vpop.f32.mrf.mxu0
      %v463 = vadd.f32 %v275, %v462
      %464 = vmatmul.bf16.gmra.mxu0 %v348
      %v465 = vpop.f32.mrf.mxu0
      %v466 = vadd.f32 %v275, %v465
      %v467 = vpop.f32.mrf.mxu0
      %v468 = vadd.f32 %v275, %v467
      %469 = vmatmul.bf16.gmra.mxu0 %v349
      %v470 = vpop.f32.mrf.mxu0
      %v471 = vadd.f32 %v275, %v470
      %v472 = vpop.f32.mrf.mxu0
      %v473 = vadd.f32 %v275, %v472
      %474 = vmatmul.bf16.gmra.mxu0 %v350
      %v475 = vpop.f32.mrf.mxu0
      %v476 = vadd.f32 %v275, %v475
      %v477 = vpop.f32.mrf.mxu0
      %v478 = vadd.f32 %v275, %v477
      %479 = vmatmul.bf16.gmra.mxu0 %v351
      %v480 = vpop.f32.mrf.mxu0
      %v481 = vadd.f32 %v275, %v480
      %v482 = vpop.f32.mrf.mxu0
      %v483 = vadd.f32 %v275, %v482
      %484 = vmatmul.bf16.gmra.mxu0 %v352
      %v485 = vpop.f32.mrf.mxu0
      %v486 = vadd.f32 %v275, %v485
      %v487 = vpop.f32.mrf.mxu0
      %v488 = vadd.f32 %v275, %v487
      %489 = vmatmul.bf16.gmra.mxu0 %v353
      %v490 = vpop.f32.mrf.mxu0
      %v491 = vadd.f32 %v275, %v490
      %v492 = vpop.f32.mrf.mxu0
      %v493 = vadd.f32 %v275, %v492
      %494 = vmatmul.bf16.gmra.mxu0 %v354
      %v495 = vpop.f32.mrf.mxu0
      %v496 = vadd.f32 %v275, %v495
      %v497 = vpop.f32.mrf.mxu0
      %v498 = vadd.f32 %v275, %v497
      %499 = vmatmul.bf16.gmra.mxu0 %v355
      %v500 = vpop.f32.mrf.mxu0
      %v501 = vadd.f32 %v275, %v500
      %v502 = vpop.f32.mrf.mxu0
      %v503 = vadd.f32 %v275, %v502
      %504 = vmatmul.bf16.gmra.mxu0 %v356
      %v505 = vpop.f32.mrf.mxu0
      %v506 = vadd.f32 %v275, %v505
      %v507 = vpop.f32.mrf.mxu0
      %v508 = vadd.f32 %v275, %v507
      %509 = vdwg.mxu0
      %v510 = vmax.f32 %v431, 0.0
      %v511 = vmax.f32 %v433, 0.0
      %v512 = vmax.f32 %v436, 0.0
      %v513 = vmax.f32 %v438, 0.0
      %v514 = vmax.f32 %v441, 0.0
      %v515 = vmax.f32 %v443, 0.0
      %v516 = vmax.f32 %v446, 0.0
      %v517 = vmax.f32 %v448, 0.0
      %v518 = vmax.f32 %v451, 0.0
      %v519 = vmax.f32 %v453, 0.0
      %v520 = vmax.f32 %v456, 0.0
      %v521 = vmax.f32 %v458, 0.0
      %v522 = vmax.f32 %v461, 0.0
      %v523 = vmax.f32 %v463, 0.0
      %v524 = vmax.f32 %v466, 0.0
      %v525 = vmax.f32 %v468, 0.0
      %v526 = vmax.f32 %v471, 0.0
      %v527 = vmax.f32 %v473, 0.0
      %v528 = vmax.f32 %v476, 0.0
      %v529 = vmax.f32 %v478, 0.0
      %v530 = vmax.f32 %v481, 0.0
      %v531 = vmax.f32 %v483, 0.0
      %v532 = vmax.f32 %v486, 0.0
      %v533 = vmax.f32 %v488, 0.0
      %v534 = vmax.f32 %v491, 0.0
      %v535 = vmax.f32 %v493, 0.0
      %v536 = vmax.f32 %v496, 0.0
      %v537 = vmax.f32 %v498, 0.0
      %v538 = vmax.f32 %v501, 0.0
      %v539 = vmax.f32 %v503, 0.0
      %v540 = vmax.f32 %v506, 0.0
      %v541 = vmax.f32 %v508, 0.0
      %v542 = vpack.c.bf16 %v510, %v510
      %v543 = vpack.c.bf16 %v511, %v511
      %v544 = vpack.c.bf16 %v512, %v512
      %v545 = vpack.c.bf16 %v513, %v513
      %v546 = vpack.c.bf16 %v514, %v514
      %v547 = vpack.c.bf16 %v515, %v515
      %v548 = vpack.c.bf16 %v516, %v516
      %v549 = vpack.c.bf16 %v517, %v517
      %v550 = vpack.c.bf16 %v518, %v518
      %v551 = vpack.c.bf16 %v519, %v519
      %v552 = vpack.c.bf16 %v520, %v520
      %v553 = vpack.c.bf16 %v521, %v521
      %v554 = vpack.c.bf16 %v522, %v522
      %v555 = vpack.c.bf16 %v523, %v523
      %v556 = vpack.c.bf16 %v524, %v524
      %v557 = vpack.c.bf16 %v525, %v525
      %v558 = vpack.c.bf16 %v526, %v526
      %v559 = vpack.c.bf16 %v527, %v527
      %v560 = vpack.c.bf16 %v528, %v528
      %v561 = vpack.c.bf16 %v529, %v529
      %v562 = vpack.c.bf16 %v530, %v530
      %v563 = vpack.c.bf16 %v531, %v531
      %v564 = vpack.c.bf16 %v532, %v532
      %v565 = vpack.c.bf16 %v533, %v533
      %v566 = vpack.c.bf16 %v534, %v534
      %v567 = vpack.c.bf16 %v535, %v535
      %v568 = vpack.c.bf16 %v536, %v536
      %v569 = vpack.c.bf16 %v537, %v537
      %v570 = vpack.c.bf16 %v538, %v538
      %v571 = vpack.c.bf16 %v539, %v539
      %v572 = vpack.c.bf16 %v540, %v540
      %v573 = vpack.c.bf16 %v541, %v541
      %574 = vst [vmem:[%s223] sm:$0xf] %v542
      %575 = vst [vmem:[%s223 + $0x4] sm:$0xf] %v543
      %576 = vst [vmem:[%s223 + $0x8] sm:$0xf] %v544
      %577 = vst [vmem:[%s223 + $0xc] sm:$0xf] %v545
      %578 = vst [vmem:[%s223 + $0x10] sm:$0xf] %v546
      %579 = vst [vmem:[%s223 + $0x14] sm:$0xf] %v547
      %580 = vst [vmem:[%s223 + $0x18] sm:$0xf] %v548
      %581 = vst [vmem:[%s223 + $0x1c] sm:$0xf] %v549
      %582 = vst [vmem:[%s223 + $0x20] sm:$0xf] %v550
      %583 = vst [vmem:[%s223 + $0x24] sm:$0xf] %v551
      %584 = vst [vmem:[%s223 + $0x28] sm:$0xf] %v552
      %585 = vst [vmem:[%s223 + $0x2c] sm:$0xf] %v553
      %586 = vst [vmem:[%s223 + $0x30] sm:$0xf] %v554
      %587 = vst [vmem:[%s223 + $0x34] sm:$0xf] %v555
      %588 = vst [vmem:[%s223 + $0x38] sm:$0xf] %v556
      %589 = vst [vmem:[%s223 + $0x3c] sm:$0xf] %v557
      %590 = vst [vmem:[%s223 + $0x40] sm:$0xf] %v558
      %591 = vst [vmem:[%s223 + $0x44] sm:$0xf] %v559
      %592 = vst [vmem:[%s223 + $0x48] sm:$0xf] %v560
      %593 = vst [vmem:[%s223 + $0x4c] sm:$0xf] %v561
      %594 = vst [vmem:[%s223 + $0x50] sm:$0xf] %v562
      %595 = vst [vmem:[%s223 + $0x54] sm:$0xf] %v563
      %596 = vst [vmem:[%s223 + $0x58] sm:$0xf] %v564
      %597 = vst [vmem:[%s223 + $0x5c] sm:$0xf] %v565
      %598 = vst [vmem:[%s223 + $0x60] sm:$0xf] %v566
      %599 = vst [vmem:[%s223 + $0x64] sm:$0xf] %v567
      %600 = vst [vmem:[%s223 + $0x68] sm:$0xf] %v568
      %601 = vst [vmem:[%s223 + $0x6c] sm:$0xf] %v569
      %602 = vst [vmem:[%s223 + $0x70] sm:$0xf] %v570
      %603 = vst [vmem:[%s223 + $0x74] sm:$0xf] %v571
      %604 = vst [vmem:[%s223 + $0x78] sm:$0xf] %v572
      %605 = vst [vmem:[%s223 + $0x7c] sm:$0xf] %v573
      %s606 = smul.u32 32, %s18
      %p607 = scmp.lt.s32.totalorder %s606, 127
      %s608 = scalar_select %p607, %s606, 127
      %p609 = scmp.lt.s32.totalorder %s19, 0
      %s610 = scalar_select %p609, %s19, 0
      %s611 = sadd.s32 %s610, %s608
      %s612 = smul.addr %s611, 4
      %s613 = scalar_lea.vmem %s3, %s612
      // Predicated region
      $region33: #{slowfast_forward.8} parent=31 // pred_check
        %p614 = pneg %p124
      $region34: #{slowfast_forward.8} parent=31 // pred_check_branch
        %616 = sbr.rel (%p614) target = $region36
      $region35: #{slowfast_forward.8} parent=31 // pred_region
        %s617 = smul.u32 32, %s18
      $region36: #{slowfast_forward.8} parent=31 // pred_fallthru
        _
    $region32: #{slowfast_forward.8} parent=5 // pred_fallthru
      _
    %p618 = scmp.le.s32.totalorder 2, %s9
    // Predicated region
    $region37: #{slowfast_forward.8} parent=5 // pred_check
      %p619 = pneg %p618
    $region38: #{slowfast_forward.8} parent=5 // pred_check_branch
      %621 = sbr.rel (%p619) target = $region40
    $region39: #{slowfast_forward.8} parent=5 // pred_region
      %s622 = ssub.s32 %s9, 2
      // Predicated region
      $region41: #{slowfast_forward.8} parent=39 // pred_check
        %p623 = pneg %p130
      $region42: #{slowfast_forward.8} parent=39 // pred_check_branch
        %625 = sbr.rel (%p623) target = $region44
      $region43: #{slowfast_forward.8} parent=39 // pred_region
        %s626 = smul.u32 32, %s20
        %p627 = scmp.lt.s32.totalorder %s626, 127
        %s628 = scalar_select %p627, %s626, 127
        %p629 = scmp.lt.s32.totalorder %s21, 0
        %s630 = scalar_select %p629, %s21, 0
        %s631 = sadd.s32 %s630, %s628
        %s632 = smul.addr %s631, 4
        %s633 = scalar_lea.vmem %s3, %s632
      $region44: #{slowfast_forward.8} parent=39 // pred_fallthru
        _
    $region40: #{slowfast_forward.8} parent=5 // pred_fallthru
      _
  $region6: #{slowfast_forward.8} parent=0 // loop_footer
    %s13 = sadd.s32 1, %s9
  $region7: #{slowfast_forward.8} parent=0 // loop_footer_branch
    %8 = sbr.rel target = $region3
  $region8: #{slowfast_forward.8} parent=0 // loop_exit
    _

// kernel: slowfast_forward.9
$region0: #{slowfast_forward.9}
  #allocation0 [shape = 'u32[]', space=smem, size = 0x4, offset = 0x4, fixed_abs, tag = 'smem constant byte address 0x4 - core index']
  #allocation1 [shape = 'u32[72,128]{1,0:T(1,128)}', space=vmem, size = 0x9000, scoped, tag = 'internal scratch']
  %s0 = inlined_call_operand.vmem [shape: bf16[256,256], index: 0, kind: input, shape index: {}]
  %s1 = inlined_call_operand.vmem [shape: bf16[256,128], index: 1, kind: input, shape index: {}]
  %s2 = inlined_call_operand.vmem [shape: f32[1,128], index: 2, kind: input, shape index: {}]
  %s3 = inlined_call_operand.vmem [shape: bf16[256,128], index: 3, kind: output, shape index: {}]
  %s4 = sld [smem:[#allocation0]]
  $region45: #{slowfast_forward.9} parent=0
    _
  %s6 = ssub.s32 1, %s4
  %s7 = scalar_select 0, %s6, %s4
  loop: start=0, step=1, limit=4
  $region2: #{slowfast_forward.9} parent=0 // loop_pre_header
    _
  $region3: #{slowfast_forward.9} parent=0 // loop_header
    %s9 = sphi 0, %s13
    %p10 = scmp.ge.s32.totalorder %s9, 4
    %s16 = sphi 0, %s28
    %s17 = sphi 0, %s24
    %s18 = sphi 0, %s16
    %s19 = sphi 0, %s17
    %s20 = sphi 0, %s18
    %s21 = sphi 0, %s19
    %s31 = sphi 0, %s33
    %s34 = sphi 0, %s31
    %s35 = sphi 0, %s34
    %s51 = sphi 0, %s35
    %s57 = sphi 0, %s59
    %s60 = sphi 0, %s57
    %s61 = sphi 0, %s60
    %s77 = sphi 0, %s61
    %s83 = sphi 0, %s85
    %s86 = sphi 0, %s83
    %s87 = sphi 0, %s86
    %s103 = sphi 0, %s87
    %s111 = sphi 0, %s113
    %s114 = sphi 0, %s111
    %s115 = sphi 0, %s114
    %s131 = sphi 0, %s115
  $region4: #{slowfast_forward.9} parent=0 // loop_header_branch
    %12 = sbr.rel (%p10) target = $region8
  $region5: #{slowfast_forward.9} parent=0 // loop_body
    %s14 = ssub.s32 %s9, 1
    %s15 = ssub.s32 %s9, 2
    %s22 = sadd.s32 1, %s17
    %p23 = scmp.ge.s32.totalorder %s22, 1
    %s24 = scalar_select %p23, 0, %s22
    %s25 = sadd.s32 1, %s16
    %s26 = scalar_select %p23, %s25, %s16
    %p27 = scmp.ge.s32.totalorder %s26, 2
    %s28 = scalar_select %p27, 0, %s26
    %s29 = ssub.s32 %s16, %s28
    %p30 = scmp.eq.s32.totalorder %s29, 0
    %s32 = sadd.s32 %s31, 1
    %s33 = scalar_select %p30, %s31, %s32
    %p36 = pneg %p30
    %p37 = scmp.eq.s32.totalorder %s9, 1
    %p38 = por %p36, %p37
    %p39 = scmp.ne.s32.totalorder %s31, %s34
    %p40 = scmp.eq.s32.totalorder %s9, 0
    %p41 = por %p39, %p40
    %p42 = scmp.ne.s32.totalorder %s31, %s34
    %p43 = scmp.eq.s32.totalorder %s14, 1
    %p44 = por %p42, %p43
    %p45 = scmp.ne.s32.totalorder %s34, %s35
    %p46 = scmp.eq.s32.totalorder %s14, 0
    %p47 = por %p45, %p46
    %p48 = scmp.ne.s32.totalorder %s34, %s35
    %p49 = scmp.eq.s32.totalorder %s15, 1
    %p50 = por %p48, %p49
    %p52 = scmp.ne.s32.totalorder %s35, %s51
    %p53 = scmp.eq.s32.totalorder %s15, 0
    %p54 = por %p52, %p53
    %s55 = ssub.s32 %s17, %s24
    %p56 = scmp.eq.s32.totalorder %s55, 0
    %s58 = sadd.s32 %s57, 1
    %s59 = scalar_select %p56, %s57, %s58
    %p62 = pneg %p56
    %p63 = scmp.eq.s32.totalorder %s9, 1
    %p64 = por %p62, %p63
    %p65 = scmp.ne.s32.totalorder %s57, %s60
    %p66 = scmp.eq.s32.totalorder %s9, 0
    %p67 = por %p65, %p66
    %p68 = scmp.ne.s32.totalorder %s57, %s60
    %p69 = scmp.eq.s32.totalorder %s14, 1
    %p70 = por %p68, %p69
    %p71 = scmp.ne.s32.totalorder %s60, %s61
    %p72 = scmp.eq.s32.totalorder %s14, 0
    %p73 = por %p71, %p72
    %p74 = scmp.ne.s32.totalorder %s60, %s61
    %p75 = scmp.eq.s32.totalorder %s15, 1
    %p76 = por %p74, %p75
    %p78 = scmp.ne.s32.totalorder %s61, %s77
    %p79 = scmp.eq.s32.totalorder %s15, 0
    %p80 = por %p78, %p79
    %s81 = ssub.s32 %s17, %s24
    %p82 = scmp.eq.s32.totalorder %s81, 0
    %s84 = sadd.s32 %s83, 1
    %s85 = scalar_select %p82, %s83, %s84
    %p88 = pneg %p82
    %p89 = scmp.eq.s32.totalorder %s9, 1
    %p90 = por %p88, %p89
    %p91 = scmp.ne.s32.totalorder %s83, %s86
    %p92 = scmp.eq.s32.totalorder %s9, 0
    %p93 = por %p91, %p92
    %p94 = scmp.ne.s32.totalorder %s83, %s86
    %p95 = scmp.eq.s32.totalorder %s14, 1
    %p96 = por %p94, %p95
    %p97 = scmp.ne.s32.totalorder %s86, %s87
    %p98 = scmp.eq.s32.totalorder %s14, 0
    %p99 = por %p97, %p98
    %p100 = scmp.ne.s32.totalorder %s86, %s87
    %p101 = scmp.eq.s32.totalorder %s15, 1
    %p102 = por %p100, %p101
    %p104 = scmp.ne.s32.totalorder %s87, %s103
    %p105 = scmp.eq.s32.totalorder %s15, 0
    %p106 = por %p104, %p105
    %s107 = ssub.s32 %s16, %s28
    %s108 = ssub.s32 %s17, %s24
    %s109 = sor.u32 %s107, %s108
    %p110 = scmp.eq.s32.totalorder %s109, 0
    %s112 = sadd.s32 %s111, 1
    %s113 = scalar_select %p110, %s111, %s112
    %p116 = pneg %p110
    %p117 = scmp.eq.s32.totalorder %s9, 1
    %p118 = por %p116, %p117
    %p119 = scmp.ne.s32.totalorder %s111, %s114
    %p120 = scmp.eq.s32.totalorder %s9, 0
    %p121 = por %p119, %p120
    %p122 = scmp.ne.s32.totalorder %s111, %s114
    %p123 = scmp.eq.s32.totalorder %s14, 1
    %p124 = por %p122, %p123
    %p125 = scmp.ne.s32.totalorder %s114, %s115
    %p126 = scmp.eq.s32.totalorder %s14, 0
    %p127 = por %p125, %p126
    %p128 = scmp.ne.s32.totalorder %s114, %s115
    %p129 = scmp.eq.s32.totalorder %s15, 1
    %p130 = por %p128, %p129
    %p132 = scmp.ne.s32.totalorder %s115, %s131
    %p133 = scmp.eq.s32.totalorder %s15, 0
    %p134 = por %p132, %p133
    %p135 = scmp.le.s32.totalorder 1, %s9
    %p136 = scmp.lt.s32.totalorder %s9, 3
    %p137 = pnand %p135, %p136
    %p138 = pneg %p137
    // Predicated region
    $region9: #{slowfast_forward.9} parent=5 // pred_check
      _
    $region10: #{slowfast_forward.9} parent=5 // pred_check_branch
      %140 = sbr.rel (%p137) target = $region12
    $region11: #{slowfast_forward.9} parent=5 // pred_region
      %s141 = ssub.s32 %s9, 1
      // Predicated region
      $region13: #{slowfast_forward.9} parent=11 // pred_check
        %p142 = pneg %p73
      $region14: #{slowfast_forward.9} parent=11 // pred_check_branch
        %144 = sbr.rel (%p142) target = $region16
      $region15: #{slowfast_forward.9} parent=11 // pred_region
        %p145 = scmp.lt.s32.totalorder %s19, 0
        %s146 = scalar_select %p145, %s19, 0
        %s147 = smul.addr %s146, 4
        %s148 = scalar_lea.vmem %s1, %s147
      $region16: #{slowfast_forward.9} parent=11 // pred_fallthru
        _
      // Predicated region
      $region17: #{slowfast_forward.9} parent=11 // pred_check
        %p149 = pneg %p99
      $region18: #{slowfast_forward.9} parent=11 // pred_check_branch
        %151 = sbr.rel (%p149) target = $region20
      $region19: #{slowfast_forward.9} parent=11 // pred_region
        %p152 = scmp.lt.s32.totalorder %s19, 0
        %s153 = scalar_select %p152, %s19, 0
        %s154 = scalar_lea.vmem %s2, %s153
      $region20: #{slowfast_forward.9} parent=11 // pred_fallthru
        _
    $region12: #{slowfast_forward.9} parent=5 // pred_fallthru
      _
    %p155 = scmp.lt.s32.totalorder %s9, 2
    // Predicated region
    $region21: #{slowfast_forward.9} parent=5 // pred_check
      %p156 = pneg %p155
    $region22: #{slowfast_forward.9} parent=5 // pred_check_branch
      %158 = sbr.rel (%p156) target = $region24
    $region23: #{slowfast_forward.9} parent=5 // pred_region
      // Predicated region
      $region25: #{slowfast_forward.9} parent=23 // pred_check
        %p159 = pneg %p41
      $region26: #{slowfast_forward.9} parent=23 // pred_check_branch
        %161 = sbr.rel (%p159) target = $region28
      $region27: #{slowfast_forward.9} parent=23 // pred_region
        %s162 = smul.u32 16, %s16
        %p163 = scmp.lt.s32.totalorder %s162, 31
        %s164 = scalar_select %p163, %s162, 31
        %s165 = smul.addr %s164, 2
        %s166 = smul.addr %s165, 4
        %s167 = scalar_lea.vmem %s0, %s166
        %s168 = smul.u32 16, %s16
      $region28: #{slowfast_forward.9} parent=23 // pred_fallthru
        _
    $region24: #{slowfast_forward.9} parent=5 // pred_fallthru
      _
    %p169 = scmp.le.s32.totalorder 1, %s9
    %p170 = scmp.lt.s32.totalorder %s9, 3
    %p171 = pnand %p169, %p170
    %p172 = pneg %p171
    // Predicated region
    $region29: #{slowfast_forward.9} parent=5 // pred_check
      _
    $region30: #{slowfast_forward.9} parent=5 // pred_check_branch
      %174 = sbr.rel (%p171) target = $region32
    $region31: #{slowfast_forward.9} parent=5 // pred_region
      %s175 = ssub.s32 %s9, 1
      %s176 = smul.u32 16, %s18
      %p177 = scmp.lt.s32.totalorder %s176, 31
      %s178 = scalar_select %p177, %s176, 31
      %s179 = smul.addr %s178, 2
      %s180 = smul.addr %s179, 4
      %s181 = scalar_lea.vmem %s0, %s180
      %p182 = pneg %p47
      %p183 = pneg %p44
      %p184 = scmp.lt.s32.totalorder %s19, 0
      %s185 = scalar_select %p184, %s19, 0
      %s186 = smul.addr %s185, 4
      %s187 = scalar_lea.vmem %s1, %s186
      %p188 = pneg %p73
      %p189 = pneg %p70
      %p190 = scmp.lt.s32.totalorder %s19, 0
      %s191 = scalar_select %p190, %s19, 0
      %s192 = scalar_lea.vmem %s2, %s191
      %p193 = pneg %p99
      %p194 = pneg %p96
      %p195 = pneg %p127
      %p196 = pneg %p124
      %s197 = smul.u32 16, %s18
      %p198 = scmp.lt.s32.totalorder %s197, 31
      %s199 = scalar_select %p198, %s197, 31
      %p200 = scmp.lt.s32.totalorder %s19, 0
      %s201 = scalar_select %p200, %s19, 0
      %s202 = sadd.s32 %s201, %s199
      %s203 = smul.addr %s202, 4
      %s204 = scalar_lea.vmem %s3, %s203
      %s205 = smul.u32 16, %s18
      %p206 = scmp.lt.s32.totalorder %s205, 31
      %s207 = scalar_select %p206, %s205, 31
      %s208 = smul.addr %s207, 2
      %s209 = smul.addr %s208, 4
      %s210 = scalar_lea.vmem %s0, %s209
      %s211 = smul.u32 16, %s18
      %p212 = scmp.lt.s32.totalorder %s19, 0
      %s213 = scalar_select %p212, %s19, 0
      %s214 = smul.addr %s213, 4
      %s215 = scalar_lea.vmem %s1, %s214
      %p216 = scmp.lt.s32.totalorder %s19, 0
      %s217 = scalar_select %p216, %s19, 0
      %s218 = scalar_lea.vmem %s2, %s217
      %s219 = smul.u32 16, %s18
      %p220 = scmp.lt.s32.totalorder %s219, 31
      %s221 = scalar_select %p220, %s219, 31
      %p222 = scmp.lt.s32.totalorder %s19, 0
      %s223 = scalar_select %p222, %s19, 0
      %s224 = sadd.s32 %s223, %s221
      %s225 = smul.addr %s224, 4
      %s226 = scalar_lea.vmem %s3, %s225
      %s227 = smul.u32 16, %s18
      %v228 = vld [vmem:[%s210] sm:$0xff]
      %v229 = vld [vmem:[%s210 + $0x8] sm:$0xff]
      %v230 = vld [vmem:[%s210 + $0x10] sm:$0xff]
      %v231 = vld [vmem:[%s210 + $0x18] sm:$0xff]
      %v232 = vld [vmem:[%s210 + $0x20] sm:$0xff]
      %v233 = vld [vmem:[%s210 + $0x28] sm:$0xff]
      %v234 = vld [vmem:[%s210 + $0x30] sm:$0xff]
      %v235 = vld [vmem:[%s210 + $0x38] sm:$0xff]
      %v236 = vld [vmem:[%s210 + $0x40] sm:$0xff]
      %v237 = vld [vmem:[%s210 + $0x48] sm:$0xff]
      %v238 = vld [vmem:[%s210 + $0x50] sm:$0xff]
      %v239 = vld [vmem:[%s210 + $0x58] sm:$0xff]
      %v240 = vld [vmem:[%s210 + $0x60] sm:$0xff]
      %v241 = vld [vmem:[%s210 + $0x68] sm:$0xff]
      %v242 = vld [vmem:[%s210 + $0x70] sm:$0xff]
      %v243 = vld [vmem:[%s210 + $0x78] sm:$0xff]
      %v244 = vld [vmem:[%s215] sm:$0xf]
      %v245 = vld [vmem:[%s215 + $0x4] sm:$0xf]
      %v246 = vld [vmem:[%s215 + $0x8] sm:$0xf]
      %v247 = vld [vmem:[%s215 + $0xc] sm:$0xf]
      %v248 = vld [vmem:[%s215 + $0x10] sm:$0xf]
      %v249 = vld [vmem:[%s215 + $0x14] sm:$0xf]
      %v250 = vld [vmem:[%s215 + $0x18] sm:$0xf]
      %v251 = vld [vmem:[%s215 + $0x1c] sm:$0xf]
      %v252 = vld [vmem:[%s215 + $0x20] sm:$0xf]
      %v253 = vld [vmem:[%s215 + $0x24] sm:$0xf]
      %v254 = vld [vmem:[%s215 + $0x28] sm:$0xf]
      %v255 = vld [vmem:[%s215 + $0x2c] sm:$0xf]
      %v256 = vld [vmem:[%s215 + $0x30] sm:$0xf]
      %v257 = vld [vmem:[%s215 + $0x34] sm:$0xf]
      %v258 = vld [vmem:[%s215 + $0x38] sm:$0xf]
      %v259 = vld [vmem:[%s215 + $0x3c] sm:$0xf]
      %v260 = vld [vmem:[%s215 + $0x40] sm:$0xf]
      %v261 = vld [vmem:[%s215 + $0x44] sm:$0xf]
      %v262 = vld [vmem:[%s215 + $0x48] sm:$0xf]
      %v263 = vld [vmem:[%s215 + $0x4c] sm:$0xf]
      %v264 = vld [vmem:[%s215 + $0x50] sm:$0xf]
      %v265 = vld [vmem:[%s215 + $0x54] sm:$0xf]
      %v266 = vld [vmem:[%s215 + $0x58] sm:$0xf]
      %v267 = vld [vmem:[%s215 + $0x5c] sm:$0xf]
      %v268 = vld [vmem:[%s215 + $0x60] sm:$0xf]
      %v269 = vld [vmem:[%s215 + $0x64] sm:$0xf]
      %v270 = vld [vmem:[%s215 + $0x68] sm:$0xf]
      %v271 = vld [vmem:[%s215 + $0x6c] sm:$0xf]
      %v272 = vld [vmem:[%s215 + $0x70] sm:$0xf]
      %v273 = vld [vmem:[%s215 + $0x74] sm:$0xf]
      %v274 = vld [vmem:[%s215 + $0x78] sm:$0xf]
      %v275 = vld [vmem:[%s215 + $0x7c] sm:$0xf]
      %v276 = vld [vmem:[%s218] sm:$0x1]
      %v278 = vperm.slane %v276, 0
      %v296 = vunpack.c.l.b16 %v228
      %v297 = vunpack.c.h.b16 %v228
      %v298 = vunpack.c.l.b16 %v229
      %v299 = vunpack.c.h.b16 %v229
      %v300 = vunpack.c.l.b16 %v230
      %v301 = vunpack.c.h.b16 %v230
      %v302 = vunpack.c.l.b16 %v231
      %v303 = vunpack.c.h.b16 %v231
      %v304 = vunpack.c.l.b16 %v232
      %v305 = vunpack.c.h.b16 %v232
      %v306 = vunpack.c.l.b16 %v233
      %v307 = vunpack.c.h.b16 %v233
      %v308 = vunpack.c.l.b16 %v234
      %v309 = vunpack.c.h.b16 %v234
      %v310 = vunpack.c.l.b16 %v235
      %v311 = vunpack.c.h.b16 %v235
      %v312 = vunpack.c.l.b16 %v236
      %v313 = vunpack.c.h.b16 %v236
      %v314 = vunpack.c.l.b16 %v237
      %v315 = vunpack.c.h.b16 %v237
      %v316 = vunpack.c.l.b16 %v238
      %v317 = vunpack.c.h.b16 %v238
      %v318 = vunpack.c.l.b16 %v239
      %v319 = vunpack.c.h.b16 %v239
      %v320 = vunpack.c.l.b16 %v240
      %v321 = vunpack.c.h.b16 %v240
      %v322 = vunpack.c.l.b16 %v241
      %v323 = vunpack.c.h.b16 %v241
      %v324 = vunpack.c.l.b16 %v242
      %v325 = vunpack.c.h.b16 %v242
      %v326 = vunpack.c.l.b16 %v243
      %v327 = vunpack.c.h.b16 %v243
      %v328 = vpack.c.b16 %v298, %v296
      %v329 = vpack.c.b16 %v299, %v297
      %v330 = vpack.c.b16 %v302, %v300
      %v331 = vpack.c.b16 %v303, %v301
      %v332 = vpack.c.b16 %v306, %v304
      %v333 = vpack.c.b16 %v307, %v305
      %v334 = vpack.c.b16 %v310, %v308
      %v335 = vpack.c.b16 %v311, %v309
      %v336 = vpack.c.b16 %v314, %v312
      %v337 = vpack.c.b16 %v315, %v313
      %v338 = vpack.c.b16 %v318, %v316
      %v339 = vpack.c.b16 %v319, %v317
      %v340 = vpack.c.b16 %v322, %v320
      %v341 = vpack.c.b16 %v323, %v321
      %v342 = vpack.c.b16 %v326, %v324
      %v343 = vpack.c.b16 %v327, %v325
      %v392 = vunpack.c.l.b16 %v244
      %v393 = vunpack.c.l.b16 %v245
      %v394 = vunpack.c.l.b16 %v246
      %v395 = vunpack.c.l.b16 %v247
      %v396 = vunpack.c.l.b16 %v248
      %v397 = vunpack.c.l.b16 %v249
      %v398 = vunpack.c.l.b16 %v250
      %v399 = vunpack.c.l.b16 %v251
      %v400 = vunpack.c.l.b16 %v252
      %v401 = vunpack.c.l.b16 %v253
      %v402 = vunpack.c.l.b16 %v254
      %v403 = vunpack.c.l.b16 %v255
      %v404 = vunpack.c.l.b16 %v256
      %v405 = vunpack.c.l.b16 %v257
      %v406 = vunpack.c.l.b16 %v258
      %v407 = vunpack.c.l.b16 %v259
      %v408 = vunpack.c.l.b16 %v260
      %v409 = vunpack.c.l.b16 %v261
      %v410 = vunpack.c.l.b16 %v262
      %v411 = vunpack.c.l.b16 %v263
      %v412 = vunpack.c.l.b16 %v264
      %v413 = vunpack.c.l.b16 %v265
      %v414 = vunpack.c.l.b16 %v266
      %v415 = vunpack.c.l.b16 %v267
      %v416 = vunpack.c.l.b16 %v268
      %v417 = vunpack.c.l.b16 %v269
      %v418 = vunpack.c.l.b16 %v270
      %v419 = vunpack.c.l.b16 %v271
      %v420 = vunpack.c.l.b16 %v272
      %v421 = vunpack.c.l.b16 %v273
      %v422 = vunpack.c.l.b16 %v274
      %v423 = vunpack.c.l.b16 %v275
      %v424 = vpack.c.b16 %v393, %v392
      %v425 = vpack.c.b16 %v395, %v394
      %v426 = vpack.c.b16 %v397, %v396
      %v427 = vpack.c.b16 %v399, %v398
      %v428 = vpack.c.b16 %v401, %v400
      %v429 = vpack.c.b16 %v403, %v402
      %v430 = vpack.c.b16 %v405, %v404
      %v431 = vpack.c.b16 %v407, %v406
      %v432 = vpack.c.b16 %v409, %v408
      %v433 = vpack.c.b16 %v411, %v410
      %v434 = vpack.c.b16 %v413, %v412
      %v435 = vpack.c.b16 %v415, %v414
      %v436 = vpack.c.b16 %v417, %v416
      %v437 = vpack.c.b16 %v419, %v418
      %v438 = vpack.c.b16 %v421, %v420
      %v439 = vpack.c.b16 %v423, %v422
      %456 = vmatpush.bf16.msra.mxu0 %v431
      %457 = vmatpush.bf16.msra.mxu0 %v430
      %458 = vmatpush.bf16.msra.mxu0 %v429
      %459 = vmatpush.bf16.msra.mxu0 %v428
      %460 = vmatpush.bf16.msra.mxu0 %v427
      %461 = vmatpush.bf16.msra.mxu0 %v426
      %462 = vmatpush.bf16.msra.mxu0 %v425
      %463 = vmatpush.bf16.msra.mxu0 %v424
      %464 = vmatmul.bf16.gmra.mxu0 %v328
      %v465 = vpop.f32.mrf.mxu0
      %v466 = vadd.f32 %v278, %v465
      %v467 = vpop.f32.mrf.mxu0
      %v468 = vadd.f32 %v278, %v467
      %469 = vmatmul.bf16.gmra.mxu0 %v330
      %v470 = vpop.f32.mrf.mxu0
      %v471 = vadd.f32 %v278, %v470
      %v472 = vpop.f32.mrf.mxu0
      %v473 = vadd.f32 %v278, %v472
      %474 = vmatmul.bf16.gmra.mxu0 %v332
      %v475 = vpop.f32.mrf.mxu0
      %v476 = vadd.f32 %v278, %v475
      %v477 = vpop.f32.mrf.mxu0
      %v478 = vadd.f32 %v278, %v477
      %479 = vmatmul.bf16.gmra.mxu0 %v334
      %v480 = vpop.f32.mrf.mxu0
      %v481 = vadd.f32 %v278, %v480
      %v482 = vpop.f32.mrf.mxu0
      %v483 = vadd.f32 %v278, %v482
      %484 = vmatmul.bf16.gmra.mxu0 %v336
      %v485 = vpop.f32.mrf.mxu0
      %v486 = vadd.f32 %v278, %v485
      %v487 = vpop.f32.mrf.mxu0
      %v488 = vadd.f32 %v278, %v487
      %489 = vmatmul.bf16.gmra.mxu0 %v338
      %v490 = vpop.f32.mrf.mxu0
      %v491 = vadd.f32 %v278, %v490
      %v492 = vpop.f32.mrf.mxu0
      %v493 = vadd.f32 %v278, %v492
      %494 = vmatmul.bf16.gmra.mxu0 %v340
      %v495 = vpop.f32.mrf.mxu0
      %v496 = vadd.f32 %v278, %v495
      %v497 = vpop.f32.mrf.mxu0
      %v498 = vadd.f32 %v278, %v497
      %499 = vmatmul.bf16.gmra.mxu0 %v342
      %v500 = vpop.f32.mrf.mxu0
      %v501 = vadd.f32 %v278, %v500
      %v502 = vpop.f32.mrf.mxu0
      %v503 = vadd.f32 %v278, %v502
      %504 = vdwg.mxu0
      %505 = vmatpush.bf16.msra.mxu0 %v439
      %506 = vmatpush.bf16.msra.mxu0 %v438
      %507 = vmatpush.bf16.msra.mxu0 %v437
      %508 = vmatpush.bf16.msra.mxu0 %v436
      %509 = vmatpush.bf16.msra.mxu0 %v435
      %510 = vmatpush.bf16.msra.mxu0 %v434
      %511 = vmatpush.bf16.msra.mxu0 %v433
      %512 = vmatpush.bf16.msra.mxu0 %v432
      %513 = vmatmul.bf16.gmra.mxu0 %v329
      %v514 = vpop.f32.mrf.mxu0
      %v515 = vadd.f32 %v466, %v514
      %v516 = vpop.f32.mrf.mxu0
      %v517 = vadd.f32 %v468, %v516
      %518 = vmatmul.bf16.gmra.mxu0 %v331
      %v519 = vpop.f32.mrf.mxu0
      %v520 = vadd.f32 %v471, %v519
      %v521 = vpop.f32.mrf.mxu0
      %v522 = vadd.f32 %v473, %v521
      %523 = vmatmul.bf16.gmra.mxu0 %v333
      %v524 = vpop.f32.mrf.mxu0
      %v525 = vadd.f32 %v476, %v524
      %v526 = vpop.f32.mrf.mxu0
      %v527 = vadd.f32 %v478, %v526
      %528 = vmatmul.bf16.gmra.mxu0 %v335
      %v529 = vpop.f32.mrf.mxu0
      %v530 = vadd.f32 %v481, %v529
      %v531 = vpop.f32.mrf.mxu0
      %v532 = vadd.f32 %v483, %v531
      %533 = vmatmul.bf16.gmra.mxu0 %v337
      %v534 = vpop.f32.mrf.mxu0
      %v535 = vadd.f32 %v486, %v534
      %v536 = vpop.f32.mrf.mxu0
      %v537 = vadd.f32 %v488, %v536
      %538 = vmatmul.bf16.gmra.mxu0 %v339
      %v539 = vpop.f32.mrf.mxu0
      %v540 = vadd.f32 %v491, %v539
      %v541 = vpop.f32.mrf.mxu0
      %v542 = vadd.f32 %v493, %v541
      %543 = vmatmul.bf16.gmra.mxu0 %v341
      %v544 = vpop.f32.mrf.mxu0
      %v545 = vadd.f32 %v496, %v544
      %v546 = vpop.f32.mrf.mxu0
      %v547 = vadd.f32 %v498, %v546
      %548 = vmatmul.bf16.gmra.mxu0 %v343
      %v549 = vpop.f32.mrf.mxu0
      %v550 = vadd.f32 %v501, %v549
      %v551 = vpop.f32.mrf.mxu0
      %v552 = vadd.f32 %v503, %v551
      %553 = vdwg.mxu0
      %v554 = vmax.f32 %v515, 0.0
      %v555 = vmax.f32 %v517, 0.0
      %v556 = vmax.f32 %v520, 0.0
      %v557 = vmax.f32 %v522, 0.0
      %v558 = vmax.f32 %v525, 0.0
      %v559 = vmax.f32 %v527, 0.0
      %v560 = vmax.f32 %v530, 0.0
      %v561 = vmax.f32 %v532, 0.0
      %v562 = vmax.f32 %v535, 0.0
      %v563 = vmax.f32 %v537, 0.0
      %v564 = vmax.f32 %v540, 0.0
      %v565 = vmax.f32 %v542, 0.0
      %v566 = vmax.f32 %v545, 0.0
      %v567 = vmax.f32 %v547, 0.0
      %v568 = vmax.f32 %v550, 0.0
      %v569 = vmax.f32 %v552, 0.0
      %v570 = vpack.c.bf16 %v554, %v554
      %v571 = vpack.c.bf16 %v555, %v555
      %v572 = vpack.c.bf16 %v556, %v556
      %v573 = vpack.c.bf16 %v557, %v557
      %v574 = vpack.c.bf16 %v558, %v558
      %v575 = vpack.c.bf16 %v559, %v559
      %v576 = vpack.c.bf16 %v560, %v560
      %v577 = vpack.c.bf16 %v561, %v561
      %v578 = vpack.c.bf16 %v562, %v562
      %v579 = vpack.c.bf16 %v563, %v563
      %v580 = vpack.c.bf16 %v564, %v564
      %v581 = vpack.c.bf16 %v565, %v565
      %v582 = vpack.c.bf16 %v566, %v566
      %v583 = vpack.c.bf16 %v567, %v567
      %v584 = vpack.c.bf16 %v568, %v568
      %v585 = vpack.c.bf16 %v569, %v569
      %586 = vst [vmem:[%s226] sm:$0xf] %v570
      %587 = vst [vmem:[%s226 + $0x4] sm:$0xf] %v571
      %588 = vst [vmem:[%s226 + $0x8] sm:$0xf] %v572
      %589 = vst [vmem:[%s226 + $0xc] sm:$0xf] %v573
      %590 = vst [vmem:[%s226 + $0x10] sm:$0xf] %v574
      %591 = vst [vmem:[%s226 + $0x14] sm:$0xf] %v575
      %592 = vst [vmem:[%s226 + $0x18] sm:$0xf] %v576
      %593 = vst [vmem:[%s226 + $0x1c] sm:$0xf] %v577
      %594 = vst [vmem:[%s226 + $0x20] sm:$0xf] %v578
      %595 = vst [vmem:[%s226 + $0x24] sm:$0xf] %v579
      %596 = vst [vmem:[%s226 + $0x28] sm:$0xf] %v580
      %597 = vst [vmem:[%s226 + $0x2c] sm:$0xf] %v581
      %598 = vst [vmem:[%s226 + $0x30] sm:$0xf] %v582
      %599 = vst [vmem:[%s226 + $0x34] sm:$0xf] %v583
      %600 = vst [vmem:[%s226 + $0x38] sm:$0xf] %v584
      %601 = vst [vmem:[%s226 + $0x3c] sm:$0xf] %v585
      %s602 = smul.u32 16, %s18
      %p603 = scmp.lt.s32.totalorder %s602, 31
      %s604 = scalar_select %p603, %s602, 31
      %p605 = scmp.lt.s32.totalorder %s19, 0
      %s606 = scalar_select %p605, %s19, 0
      %s607 = sadd.s32 %s606, %s604
      %s608 = smul.addr %s607, 4
      %s609 = scalar_lea.vmem %s3, %s608
      // Predicated region
      $region33: #{slowfast_forward.9} parent=31 // pred_check
        %p610 = pneg %p124
      $region34: #{slowfast_forward.9} parent=31 // pred_check_branch
        %612 = sbr.rel (%p610) target = $region36
      $region35: #{slowfast_forward.9} parent=31 // pred_region
        %s613 = smul.u32 16, %s18
      $region36: #{slowfast_forward.9} parent=31 // pred_fallthru
        _
    $region32: #{slowfast_forward.9} parent=5 // pred_fallthru
      _
    %p614 = scmp.le.s32.totalorder 2, %s9
    // Predicated region
    $region37: #{slowfast_forward.9} parent=5 // pred_check
      %p615 = pneg %p614
    $region38: #{slowfast_forward.9} parent=5 // pred_check_branch
      %617 = sbr.rel (%p615) target = $region40
    $region39: #{slowfast_forward.9} parent=5 // pred_region
      %s618 = ssub.s32 %s9, 2
      // Predicated region
      $region41: #{slowfast_forward.9} parent=39 // pred_check
        %p619 = pneg %p130
      $region42: #{slowfast_forward.9} parent=39 // pred_check_branch
        %621 = sbr.rel (%p619) target = $region44
      $region43: #{slowfast_forward.9} parent=39 // pred_region
        %s622 = smul.u32 16, %s20
        %p623 = scmp.lt.s32.totalorder %s622, 31
        %s624 = scalar_select %p623, %s622, 31
        %p625 = scmp.lt.s32.totalorder %s21, 0
        %s626 = scalar_select %p625, %s21, 0
        %s627 = sadd.s32 %s626, %s624
        %s628 = smul.addr %s627, 4
        %s629 = scalar_lea.vmem %s3, %s628
      $region44: #{slowfast_forward.9} parent=39 // pred_fallthru
        _
    $region40: #{slowfast_forward.9} parent=5 // pred_fallthru
      _
  $region6: #{slowfast_forward.9} parent=0 // loop_footer
    %s13 = sadd.s32 1, %s9
  $region7: #{slowfast_forward.9} parent=0 // loop_footer_branch
    %8 = sbr.rel target = $region3
  $region8: #{slowfast_forward.9} parent=0 // loop_exit
    _

// kernel: slowfast_forward.10
$region0: #{slowfast_forward.10}
  #allocation0 [shape = 'u32[]', space=smem, size = 0x4, offset = 0x4, fixed_abs, tag = 'smem constant byte address 0x4 - core index']
  #allocation1 [shape = 'u32[72,128]{1,0:T(1,128)}', space=vmem, size = 0x9000, scoped, tag = 'internal scratch']
  %s0 = inlined_call_operand.vmem [shape: bf16[128,128], index: 0, kind: input, shape index: {}]
  %s1 = inlined_call_operand.vmem [shape: bf16[128,128], index: 1, kind: input, shape index: {}]
  %s2 = inlined_call_operand.vmem [shape: f32[1,128], index: 2, kind: input, shape index: {}]
  %s3 = inlined_call_operand.vmem [shape: bf16[128,128], index: 3, kind: output, shape index: {}]
  %s4 = sld [smem:[#allocation0]]
  $region22: #{slowfast_forward.10} parent=0
    _
  %s6 = ssub.s32 1, %s4
  %s7 = scalar_select 0, %s6, %s4
  // Predicated region
  $region2: #{slowfast_forward.10} parent=0 // pred_check
    _
  $region3: #{slowfast_forward.10} parent=0 // pred_check_branch
    %9 = sbr.rel (0) target = $region5
  $region4: #{slowfast_forward.10} parent=0 // pred_region
    _
  $region5: #{slowfast_forward.10} parent=0 // pred_fallthru
    _
  // Predicated region
  $region6: #{slowfast_forward.10} parent=0 // pred_check
    _
  $region7: #{slowfast_forward.10} parent=0 // pred_check_branch
    %11 = sbr.rel (0) target = $region9
  $region8: #{slowfast_forward.10} parent=0 // pred_region
    _
  $region9: #{slowfast_forward.10} parent=0 // pred_fallthru
    _
  // Predicated region
  $region10: #{slowfast_forward.10} parent=0 // pred_check
    _
  $region11: #{slowfast_forward.10} parent=0 // pred_check_branch
    %13 = sbr.rel (0) target = $region13
  $region12: #{slowfast_forward.10} parent=0 // pred_region
    _
  $region13: #{slowfast_forward.10} parent=0 // pred_fallthru
    _
  %v14 = vld [vmem:[%s0] sm:$0xf]
  %v15 = vld [vmem:[%s0 + $0x4] sm:$0xf]
  %v16 = vld [vmem:[%s0 + $0x8] sm:$0xf]
  %v17 = vld [vmem:[%s0 + $0xc] sm:$0xf]
  %v18 = vld [vmem:[%s0 + $0x10] sm:$0xf]
  %v19 = vld [vmem:[%s0 + $0x14] sm:$0xf]
  %v20 = vld [vmem:[%s0 + $0x18] sm:$0xf]
  %v21 = vld [vmem:[%s0 + $0x1c] sm:$0xf]
  %v22 = vld [vmem:[%s0 + $0x20] sm:$0xf]
  %v23 = vld [vmem:[%s0 + $0x24] sm:$0xf]
  %v24 = vld [vmem:[%s0 + $0x28] sm:$0xf]
  %v25 = vld [vmem:[%s0 + $0x2c] sm:$0xf]
  %v26 = vld [vmem:[%s0 + $0x30] sm:$0xf]
  %v27 = vld [vmem:[%s0 + $0x34] sm:$0xf]
  %v28 = vld [vmem:[%s0 + $0x38] sm:$0xf]
  %v29 = vld [vmem:[%s0 + $0x3c] sm:$0xf]
  %v30 = vld [vmem:[%s1] sm:$0xf]
  %v31 = vld [vmem:[%s1 + $0x4] sm:$0xf]
  %v32 = vld [vmem:[%s1 + $0x8] sm:$0xf]
  %v33 = vld [vmem:[%s1 + $0xc] sm:$0xf]
  %v34 = vld [vmem:[%s1 + $0x10] sm:$0xf]
  %v35 = vld [vmem:[%s1 + $0x14] sm:$0xf]
  %v36 = vld [vmem:[%s1 + $0x18] sm:$0xf]
  %v37 = vld [vmem:[%s1 + $0x1c] sm:$0xf]
  %v38 = vld [vmem:[%s1 + $0x20] sm:$0xf]
  %v39 = vld [vmem:[%s1 + $0x24] sm:$0xf]
  %v40 = vld [vmem:[%s1 + $0x28] sm:$0xf]
  %v41 = vld [vmem:[%s1 + $0x2c] sm:$0xf]
  %v42 = vld [vmem:[%s1 + $0x30] sm:$0xf]
  %v43 = vld [vmem:[%s1 + $0x34] sm:$0xf]
  %v44 = vld [vmem:[%s1 + $0x38] sm:$0xf]
  %v45 = vld [vmem:[%s1 + $0x3c] sm:$0xf]
  %v46 = vld [vmem:[%s2] sm:$0x1]
  %v48 = vperm.slane %v46, 0
  %v66 = vunpack.c.l.b16 %v14
  %v67 = vunpack.c.l.b16 %v15
  %v68 = vunpack.c.l.b16 %v16
  %v69 = vunpack.c.l.b16 %v17
  %v70 = vunpack.c.l.b16 %v18
  %v71 = vunpack.c.l.b16 %v19
  %v72 = vunpack.c.l.b16 %v20
  %v73 = vunpack.c.l.b16 %v21
  %v74 = vunpack.c.l.b16 %v22
  %v75 = vunpack.c.l.b16 %v23
  %v76 = vunpack.c.l.b16 %v24
  %v77 = vunpack.c.l.b16 %v25
  %v78 = vunpack.c.l.b16 %v26
  %v79 = vunpack.c.l.b16 %v27
  %v80 = vunpack.c.l.b16 %v28
  %v81 = vunpack.c.l.b16 %v29
  %v82 = vpack.c.b16 %v67, %v66
  %v83 = vpack.c.b16 %v69, %v68
  %v84 = vpack.c.b16 %v71, %v70
  %v85 = vpack.c.b16 %v73, %v72
  %v86 = vpack.c.b16 %v75, %v74
  %v87 = vpack.c.b16 %v77, %v76
  %v88 = vpack.c.b16 %v79, %v78
  %v89 = vpack.c.b16 %v81, %v80
  %v114 = vunpack.c.l.b16 %v30
  %v115 = vunpack.c.l.b16 %v31
  %v116 = vunpack.c.l.b16 %v32
  %v117 = vunpack.c.l.b16 %v33
  %v118 = vunpack.c.l.b16 %v34
  %v119 = vunpack.c.l.b16 %v35
  %v120 = vunpack.c.l.b16 %v36
  %v121 = vunpack.c.l.b16 %v37
  %v122 = vunpack.c.l.b16 %v38
  %v123 = vunpack.c.l.b16 %v39
  %v124 = vunpack.c.l.b16 %v40
  %v125 = vunpack.c.l.b16 %v41
  %v126 = vunpack.c.l.b16 %v42
  %v127 = vunpack.c.l.b16 %v43
  %v128 = vunpack.c.l.b16 %v44
  %v129 = vunpack.c.l.b16 %v45
  %v130 = vpack.c.b16 %v115, %v114
  %v131 = vpack.c.b16 %v117, %v116
  %v132 = vpack.c.b16 %v119, %v118
  %v133 = vpack.c.b16 %v121, %v120
  %v134 = vpack.c.b16 %v123, %v122
  %v135 = vpack.c.b16 %v125, %v124
  %v136 = vpack.c.b16 %v127, %v126
  %v137 = vpack.c.b16 %v129, %v128
  %146 = vmatpush.bf16.msra.mxu0 %v137
  %147 = vmatpush.bf16.msra.mxu0 %v136
  %148 = vmatpush.bf16.msra.mxu0 %v135
  %149 = vmatpush.bf16.msra.mxu0 %v134
  %150 = vmatpush.bf16.msra.mxu0 %v133
  %151 = vmatpush.bf16.msra.mxu0 %v132
  %152 = vmatpush.bf16.msra.mxu0 %v131
  %153 = vmatpush.bf16.msra.mxu0 %v130
  %154 = vmatmul.bf16.gmra.mxu0 %v82
  %v155 = vpop.f32.mrf.mxu0
  %v156 = vadd.f32 %v48, %v155
  %v157 = vpop.f32.mrf.mxu0
  %v158 = vadd.f32 %v48, %v157
  %159 = vmatmul.bf16.gmra.mxu0 %v83
  %v160 = vpop.f32.mrf.mxu0
  %v161 = vadd.f32 %v48, %v160
  %v162 = vpop.f32.mrf.mxu0
  %v163 = vadd.f32 %v48, %v162
  %164 = vmatmul.bf16.gmra.mxu0 %v84
  %v165 = vpop.f32.mrf.mxu0
  %v166 = vadd.f32 %v48, %v165
  %v167 = vpop.f32.mrf.mxu0
  %v168 = vadd.f32 %v48, %v167
  %169 = vmatmul.bf16.gmra.mxu0 %v85
  %v170 = vpop.f32.mrf.mxu0
  %v171 = vadd.f32 %v48, %v170
  %v172 = vpop.f32.mrf.mxu0
  %v173 = vadd.f32 %v48, %v172
  %174 = vmatmul.bf16.gmra.mxu0 %v86
  %v175 = vpop.f32.mrf.mxu0
  %v176 = vadd.f32 %v48, %v175
  %v177 = vpop.f32.mrf.mxu0
  %v178 = vadd.f32 %v48, %v177
  %179 = vmatmul.bf16.gmra.mxu0 %v87
  %v180 = vpop.f32.mrf.mxu0
  %v181 = vadd.f32 %v48, %v180
  %v182 = vpop.f32.mrf.mxu0
  %v183 = vadd.f32 %v48, %v182
  %184 = vmatmul.bf16.gmra.mxu0 %v88
  %v185 = vpop.f32.mrf.mxu0
  %v186 = vadd.f32 %v48, %v185
  %v187 = vpop.f32.mrf.mxu0
  %v188 = vadd.f32 %v48, %v187
  %189 = vmatmul.bf16.gmra.mxu0 %v89
  %v190 = vpop.f32.mrf.mxu0
  %v191 = vadd.f32 %v48, %v190
  %v192 = vpop.f32.mrf.mxu0
  %v193 = vadd.f32 %v48, %v192
  %194 = vdwg.mxu0
  %v195 = vmax.f32 %v156, 0.0
  %v196 = vmax.f32 %v158, 0.0
  %v197 = vmax.f32 %v161, 0.0
  %v198 = vmax.f32 %v163, 0.0
  %v199 = vmax.f32 %v166, 0.0
  %v200 = vmax.f32 %v168, 0.0
  %v201 = vmax.f32 %v171, 0.0
  %v202 = vmax.f32 %v173, 0.0
  %v203 = vmax.f32 %v176, 0.0
  %v204 = vmax.f32 %v178, 0.0
  %v205 = vmax.f32 %v181, 0.0
  %v206 = vmax.f32 %v183, 0.0
  %v207 = vmax.f32 %v186, 0.0
  %v208 = vmax.f32 %v188, 0.0
  %v209 = vmax.f32 %v191, 0.0
  %v210 = vmax.f32 %v193, 0.0
  %v211 = vpack.c.bf16 %v195, %v195
  %v212 = vpack.c.bf16 %v196, %v196
  %v213 = vpack.c.bf16 %v197, %v197
  %v214 = vpack.c.bf16 %v198, %v198
  %v215 = vpack.c.bf16 %v199, %v199
  %v216 = vpack.c.bf16 %v200, %v200
  %v217 = vpack.c.bf16 %v201, %v201
  %v218 = vpack.c.bf16 %v202, %v202
  %v219 = vpack.c.bf16 %v203, %v203
  %v220 = vpack.c.bf16 %v204, %v204
  %v221 = vpack.c.bf16 %v205, %v205
  %v222 = vpack.c.bf16 %v206, %v206
  %v223 = vpack.c.bf16 %v207, %v207
  %v224 = vpack.c.bf16 %v208, %v208
  %v225 = vpack.c.bf16 %v209, %v209
  %v226 = vpack.c.bf16 %v210, %v210
  %227 = vst [vmem:[%s3] sm:$0xf] %v211
  %228 = vst [vmem:[%s3 + $0x4] sm:$0xf] %v212
  %229 = vst [vmem:[%s3 + $0x8] sm:$0xf] %v213
  %230 = vst [vmem:[%s3 + $0xc] sm:$0xf] %v214
  %231 = vst [vmem:[%s3 + $0x10] sm:$0xf] %v215
  %232 = vst [vmem:[%s3 + $0x14] sm:$0xf] %v216
  %233 = vst [vmem:[%s3 + $0x18] sm:$0xf] %v217
  %234 = vst [vmem:[%s3 + $0x1c] sm:$0xf] %v218
  %235 = vst [vmem:[%s3 + $0x20] sm:$0xf] %v219
  %236 = vst [vmem:[%s3 + $0x24] sm:$0xf] %v220
  %237 = vst [vmem:[%s3 + $0x28] sm:$0xf] %v221
  %238 = vst [vmem:[%s3 + $0x2c] sm:$0xf] %v222
  %239 = vst [vmem:[%s3 + $0x30] sm:$0xf] %v223
  %240 = vst [vmem:[%s3 + $0x34] sm:$0xf] %v224
  %241 = vst [vmem:[%s3 + $0x38] sm:$0xf] %v225
  %242 = vst [vmem:[%s3 + $0x3c] sm:$0xf] %v226
  // Predicated region
  $region14: #{slowfast_forward.10} parent=0 // pred_check
    _
  $region15: #{slowfast_forward.10} parent=0 // pred_check_branch
    %244 = sbr.rel (0) target = $region17
  $region16: #{slowfast_forward.10} parent=0 // pred_region
    _
  $region17: #{slowfast_forward.10} parent=0 // pred_fallthru
    _
  // Predicated region
  $region18: #{slowfast_forward.10} parent=0 // pred_check
    _
  $region19: #{slowfast_forward.10} parent=0 // pred_check_branch
    %246 = sbr.rel (0) target = $region21
  $region20: #{slowfast_forward.10} parent=0 // pred_region
    _
  $region21: #{slowfast_forward.10} parent=0 // pred_fallthru
    _

// kernel: slowfast_forward.6
$region0: #{slowfast_forward.6}
  #allocation0 [shape = 'u32[]', space=smem, size = 0x4, offset = 0x4, fixed_abs, tag = 'smem constant byte address 0x4 - core index']
  #allocation1 [shape = 'u32[72,128]{1,0:T(1,128)}', space=vmem, size = 0x9000, scoped, tag = 'internal scratch']
  %s0 = inlined_call_operand.vmem [shape: bf16[512,128], index: 0, kind: input, shape index: {}]
  %s1 = inlined_call_operand.vmem [shape: bf16[128,128], index: 1, kind: input, shape index: {}]
  %s2 = inlined_call_operand.vmem [shape: f32[1,128], index: 2, kind: input, shape index: {}]
  %s3 = inlined_call_operand.vmem [shape: bf16[512,128], index: 3, kind: output, shape index: {}]
  %s4 = sld [smem:[#allocation0]]
  $region45: #{slowfast_forward.6} parent=0
    _
  %s6 = ssub.s32 1, %s4
  %s7 = scalar_select 0, %s6, %s4
  loop: start=0, step=1, limit=4
  $region2: #{slowfast_forward.6} parent=0 // loop_pre_header
    _
  $region3: #{slowfast_forward.6} parent=0 // loop_header
    %s9 = sphi 0, %s13
    %p10 = scmp.ge.s32.totalorder %s9, 4
    %s16 = sphi 0, %s28
    %s17 = sphi 0, %s24
    %s18 = sphi 0, %s16
    %s19 = sphi 0, %s17
    %s20 = sphi 0, %s18
    %s21 = sphi 0, %s19
    %s31 = sphi 0, %s33
    %s34 = sphi 0, %s31
    %s35 = sphi 0, %s34
    %s51 = sphi 0, %s35
    %s57 = sphi 0, %s59
    %s60 = sphi 0, %s57
    %s61 = sphi 0, %s60
    %s77 = sphi 0, %s61
    %s83 = sphi 0, %s85
    %s86 = sphi 0, %s83
    %s87 = sphi 0, %s86
    %s103 = sphi 0, %s87
    %s111 = sphi 0, %s113
    %s114 = sphi 0, %s111
    %s115 = sphi 0, %s114
    %s131 = sphi 0, %s115
  $region4: #{slowfast_forward.6} parent=0 // loop_header_branch
    %12 = sbr.rel (%p10) target = $region8
  $region5: #{slowfast_forward.6} parent=0 // loop_body
    %s14 = ssub.s32 %s9, 1
    %s15 = ssub.s32 %s9, 2
    %s22 = sadd.s32 1, %s17
    %p23 = scmp.ge.s32.totalorder %s22, 1
    %s24 = scalar_select %p23, 0, %s22
    %s25 = sadd.s32 1, %s16
    %s26 = scalar_select %p23, %s25, %s16
    %p27 = scmp.ge.s32.totalorder %s26, 2
    %s28 = scalar_select %p27, 0, %s26
    %s29 = ssub.s32 %s16, %s28
    %p30 = scmp.eq.s32.totalorder %s29, 0
    %s32 = sadd.s32 %s31, 1
    %s33 = scalar_select %p30, %s31, %s32
    %p36 = pneg %p30
    %p37 = scmp.eq.s32.totalorder %s9, 1
    %p38 = por %p36, %p37
    %p39 = scmp.ne.s32.totalorder %s31, %s34
    %p40 = scmp.eq.s32.totalorder %s9, 0
    %p41 = por %p39, %p40
    %p42 = scmp.ne.s32.totalorder %s31, %s34
    %p43 = scmp.eq.s32.totalorder %s14, 1
    %p44 = por %p42, %p43
    %p45 = scmp.ne.s32.totalorder %s34, %s35
    %p46 = scmp.eq.s32.totalorder %s14, 0
    %p47 = por %p45, %p46
    %p48 = scmp.ne.s32.totalorder %s34, %s35
    %p49 = scmp.eq.s32.totalorder %s15, 1
    %p50 = por %p48, %p49
    %p52 = scmp.ne.s32.totalorder %s35, %s51
    %p53 = scmp.eq.s32.totalorder %s15, 0
    %p54 = por %p52, %p53
    %s55 = ssub.s32 %s17, %s24
    %p56 = scmp.eq.s32.totalorder %s55, 0
    %s58 = sadd.s32 %s57, 1
    %s59 = scalar_select %p56, %s57, %s58
    %p62 = pneg %p56
    %p63 = scmp.eq.s32.totalorder %s9, 1
    %p64 = por %p62, %p63
    %p65 = scmp.ne.s32.totalorder %s57, %s60
    %p66 = scmp.eq.s32.totalorder %s9, 0
    %p67 = por %p65, %p66
    %p68 = scmp.ne.s32.totalorder %s57, %s60
    %p69 = scmp.eq.s32.totalorder %s14, 1
    %p70 = por %p68, %p69
    %p71 = scmp.ne.s32.totalorder %s60, %s61
    %p72 = scmp.eq.s32.totalorder %s14, 0
    %p73 = por %p71, %p72
    %p74 = scmp.ne.s32.totalorder %s60, %s61
    %p75 = scmp.eq.s32.totalorder %s15, 1
    %p76 = por %p74, %p75
    %p78 = scmp.ne.s32.totalorder %s61, %s77
    %p79 = scmp.eq.s32.totalorder %s15, 0
    %p80 = por %p78, %p79
    %s81 = ssub.s32 %s17, %s24
    %p82 = scmp.eq.s32.totalorder %s81, 0
    %s84 = sadd.s32 %s83, 1
    %s85 = scalar_select %p82, %s83, %s84
    %p88 = pneg %p82
    %p89 = scmp.eq.s32.totalorder %s9, 1
    %p90 = por %p88, %p89
    %p91 = scmp.ne.s32.totalorder %s83, %s86
    %p92 = scmp.eq.s32.totalorder %s9, 0
    %p93 = por %p91, %p92
    %p94 = scmp.ne.s32.totalorder %s83, %s86
    %p95 = scmp.eq.s32.totalorder %s14, 1
    %p96 = por %p94, %p95
    %p97 = scmp.ne.s32.totalorder %s86, %s87
    %p98 = scmp.eq.s32.totalorder %s14, 0
    %p99 = por %p97, %p98
    %p100 = scmp.ne.s32.totalorder %s86, %s87
    %p101 = scmp.eq.s32.totalorder %s15, 1
    %p102 = por %p100, %p101
    %p104 = scmp.ne.s32.totalorder %s87, %s103
    %p105 = scmp.eq.s32.totalorder %s15, 0
    %p106 = por %p104, %p105
    %s107 = ssub.s32 %s16, %s28
    %s108 = ssub.s32 %s17, %s24
    %s109 = sor.u32 %s107, %s108
    %p110 = scmp.eq.s32.totalorder %s109, 0
    %s112 = sadd.s32 %s111, 1
    %s113 = scalar_select %p110, %s111, %s112
    %p116 = pneg %p110
    %p117 = scmp.eq.s32.totalorder %s9, 1
    %p118 = por %p116, %p117
    %p119 = scmp.ne.s32.totalorder %s111, %s114
    %p120 = scmp.eq.s32.totalorder %s9, 0
    %p121 = por %p119, %p120
    %p122 = scmp.ne.s32.totalorder %s111, %s114
    %p123 = scmp.eq.s32.totalorder %s14, 1
    %p124 = por %p122, %p123
    %p125 = scmp.ne.s32.totalorder %s114, %s115
    %p126 = scmp.eq.s32.totalorder %s14, 0
    %p127 = por %p125, %p126
    %p128 = scmp.ne.s32.totalorder %s114, %s115
    %p129 = scmp.eq.s32.totalorder %s15, 1
    %p130 = por %p128, %p129
    %p132 = scmp.ne.s32.totalorder %s115, %s131
    %p133 = scmp.eq.s32.totalorder %s15, 0
    %p134 = por %p132, %p133
    %p135 = scmp.le.s32.totalorder 1, %s9
    %p136 = scmp.lt.s32.totalorder %s9, 3
    %p137 = pnand %p135, %p136
    %p138 = pneg %p137
    // Predicated region
    $region9: #{slowfast_forward.6} parent=5 // pred_check
      _
    $region10: #{slowfast_forward.6} parent=5 // pred_check_branch
      %140 = sbr.rel (%p137) target = $region12
    $region11: #{slowfast_forward.6} parent=5 // pred_region
      %s141 = ssub.s32 %s9, 1
      // Predicated region
      $region13: #{slowfast_forward.6} parent=11 // pred_check
        %p142 = pneg %p73
      $region14: #{slowfast_forward.6} parent=11 // pred_check_branch
        %144 = sbr.rel (%p142) target = $region16
      $region15: #{slowfast_forward.6} parent=11 // pred_region
        %p145 = scmp.lt.s32.totalorder %s19, 0
        %s146 = scalar_select %p145, %s19, 0
        %s147 = smul.addr %s146, 4
        %s148 = scalar_lea.vmem %s1, %s147
      $region16: #{slowfast_forward.6} parent=11 // pred_fallthru
        _
      // Predicated region
      $region17: #{slowfast_forward.6} parent=11 // pred_check
        %p149 = pneg %p99
      $region18: #{slowfast_forward.6} parent=11 // pred_check_branch
        %151 = sbr.rel (%p149) target = $region20
      $region19: #{slowfast_forward.6} parent=11 // pred_region
        %p152 = scmp.lt.s32.totalorder %s19, 0
        %s153 = scalar_select %p152, %s19, 0
        %s154 = scalar_lea.vmem %s2, %s153
      $region20: #{slowfast_forward.6} parent=11 // pred_fallthru
        _
    $region12: #{slowfast_forward.6} parent=5 // pred_fallthru
      _
    %p155 = scmp.lt.s32.totalorder %s9, 2
    // Predicated region
    $region21: #{slowfast_forward.6} parent=5 // pred_check
      %p156 = pneg %p155
    $region22: #{slowfast_forward.6} parent=5 // pred_check_branch
      %158 = sbr.rel (%p156) target = $region24
    $region23: #{slowfast_forward.6} parent=5 // pred_region
      // Predicated region
      $region25: #{slowfast_forward.6} parent=23 // pred_check
        %p159 = pneg %p41
      $region26: #{slowfast_forward.6} parent=23 // pred_check_branch
        %161 = sbr.rel (%p159) target = $region28
      $region27: #{slowfast_forward.6} parent=23 // pred_region
        %s162 = smul.u32 32, %s16
        %p163 = scmp.lt.s32.totalorder %s162, 63
        %s164 = scalar_select %p163, %s162, 63
        %s165 = smul.addr %s164, 4
        %s166 = scalar_lea.vmem %s0, %s165
        %s167 = smul.u32 32, %s16
      $region28: #{slowfast_forward.6} parent=23 // pred_fallthru
        _
    $region24: #{slowfast_forward.6} parent=5 // pred_fallthru
      _
    %p168 = scmp.le.s32.totalorder 1, %s9
    %p169 = scmp.lt.s32.totalorder %s9, 3
    %p170 = pnand %p168, %p169
    %p171 = pneg %p170
    // Predicated region
    $region29: #{slowfast_forward.6} parent=5 // pred_check
      _
    $region30: #{slowfast_forward.6} parent=5 // pred_check_branch
      %173 = sbr.rel (%p170) target = $region32
    $region31: #{slowfast_forward.6} parent=5 // pred_region
      %s174 = ssub.s32 %s9, 1
      %s175 = smul.u32 32, %s18
      %p176 = scmp.lt.s32.totalorder %s175, 63
      %s177 = scalar_select %p176, %s175, 63
      %s178 = smul.addr %s177, 4
      %s179 = scalar_lea.vmem %s0, %s178
      %p180 = pneg %p47
      %p181 = pneg %p44
      %p182 = scmp.lt.s32.totalorder %s19, 0
      %s183 = scalar_select %p182, %s19, 0
      %s184 = smul.addr %s183, 4
      %s185 = scalar_lea.vmem %s1, %s184
      %p186 = pneg %p73
      %p187 = pneg %p70
      %p188 = scmp.lt.s32.totalorder %s19, 0
      %s189 = scalar_select %p188, %s19, 0
      %s190 = scalar_lea.vmem %s2, %s189
      %p191 = pneg %p99
      %p192 = pneg %p96
      %p193 = pneg %p127
      %p194 = pneg %p124
      %s195 = smul.u32 32, %s18
      %p196 = scmp.lt.s32.totalorder %s195, 63
      %s197 = scalar_select %p196, %s195, 63
      %p198 = scmp.lt.s32.totalorder %s19, 0
      %s199 = scalar_select %p198, %s19, 0
      %s200 = sadd.s32 %s199, %s197
      %s201 = smul.addr %s200, 4
      %s202 = scalar_lea.vmem %s3, %s201
      %s203 = smul.u32 32, %s18
      %p204 = scmp.lt.s32.totalorder %s203, 63
      %s205 = scalar_select %p204, %s203, 63
      %s206 = smul.addr %s205, 4
      %s207 = scalar_lea.vmem %s0, %s206
      %s208 = smul.u32 32, %s18
      %p209 = scmp.lt.s32.totalorder %s19, 0
      %s210 = scalar_select %p209, %s19, 0
      %s211 = smul.addr %s210, 4
      %s212 = scalar_lea.vmem %s1, %s211
      %p213 = scmp.lt.s32.totalorder %s19, 0
      %s214 = scalar_select %p213, %s19, 0
      %s215 = scalar_lea.vmem %s2, %s214
      %s216 = smul.u32 32, %s18
      %p217 = scmp.lt.s32.totalorder %s216, 63
      %s218 = scalar_select %p217, %s216, 63
      %p219 = scmp.lt.s32.totalorder %s19, 0
      %s220 = scalar_select %p219, %s19, 0
      %s221 = sadd.s32 %s220, %s218
      %s222 = smul.addr %s221, 4
      %s223 = scalar_lea.vmem %s3, %s222
      %s224 = smul.u32 32, %s18
      %v225 = vld [vmem:[%s207] sm:$0xf]
      %v226 = vld [vmem:[%s207 + $0x4] sm:$0xf]
      %v227 = vld [vmem:[%s207 + $0x8] sm:$0xf]
      %v228 = vld [vmem:[%s207 + $0xc] sm:$0xf]
      %v229 = vld [vmem:[%s207 + $0x10] sm:$0xf]
      %v230 = vld [vmem:[%s207 + $0x14] sm:$0xf]
      %v231 = vld [vmem:[%s207 + $0x18] sm:$0xf]
      %v232 = vld [vmem:[%s207 + $0x1c] sm:$0xf]
      %v233 = vld [vmem:[%s207 + $0x20] sm:$0xf]
      %v234 = vld [vmem:[%s207 + $0x24] sm:$0xf]
      %v235 = vld [vmem:[%s207 + $0x28] sm:$0xf]
      %v236 = vld [vmem:[%s207 + $0x2c] sm:$0xf]
      %v237 = vld [vmem:[%s207 + $0x30] sm:$0xf]
      %v238 = vld [vmem:[%s207 + $0x34] sm:$0xf]
      %v239 = vld [vmem:[%s207 + $0x38] sm:$0xf]
      %v240 = vld [vmem:[%s207 + $0x3c] sm:$0xf]
      %v241 = vld [vmem:[%s207 + $0x40] sm:$0xf]
      %v242 = vld [vmem:[%s207 + $0x44] sm:$0xf]
      %v243 = vld [vmem:[%s207 + $0x48] sm:$0xf]
      %v244 = vld [vmem:[%s207 + $0x4c] sm:$0xf]
      %v245 = vld [vmem:[%s207 + $0x50] sm:$0xf]
      %v246 = vld [vmem:[%s207 + $0x54] sm:$0xf]
      %v247 = vld [vmem:[%s207 + $0x58] sm:$0xf]
      %v248 = vld [vmem:[%s207 + $0x5c] sm:$0xf]
      %v249 = vld [vmem:[%s207 + $0x60] sm:$0xf]
      %v250 = vld [vmem:[%s207 + $0x64] sm:$0xf]
      %v251 = vld [vmem:[%s207 + $0x68] sm:$0xf]
      %v252 = vld [vmem:[%s207 + $0x6c] sm:$0xf]
      %v253 = vld [vmem:[%s207 + $0x70] sm:$0xf]
      %v254 = vld [vmem:[%s207 + $0x74] sm:$0xf]
      %v255 = vld [vmem:[%s207 + $0x78] sm:$0xf]
      %v256 = vld [vmem:[%s207 + $0x7c] sm:$0xf]
      %v257 = vld [vmem:[%s212] sm:$0xf]
      %v258 = vld [vmem:[%s212 + $0x4] sm:$0xf]
      %v259 = vld [vmem:[%s212 + $0x8] sm:$0xf]
      %v260 = vld [vmem:[%s212 + $0xc] sm:$0xf]
      %v261 = vld [vmem:[%s212 + $0x10] sm:$0xf]
      %v262 = vld [vmem:[%s212 + $0x14] sm:$0xf]
      %v263 = vld [vmem:[%s212 + $0x18] sm:$0xf]
      %v264 = vld [vmem:[%s212 + $0x1c] sm:$0xf]
      %v265 = vld [vmem:[%s212 + $0x20] sm:$0xf]
      %v266 = vld [vmem:[%s212 + $0x24] sm:$0xf]
      %v267 = vld [vmem:[%s212 + $0x28] sm:$0xf]
      %v268 = vld [vmem:[%s212 + $0x2c] sm:$0xf]
      %v269 = vld [vmem:[%s212 + $0x30] sm:$0xf]
      %v270 = vld [vmem:[%s212 + $0x34] sm:$0xf]
      %v271 = vld [vmem:[%s212 + $0x38] sm:$0xf]
      %v272 = vld [vmem:[%s212 + $0x3c] sm:$0xf]
      %v273 = vld [vmem:[%s215] sm:$0x1]
      %v275 = vperm.slane %v273, 0
      %v309 = vunpack.c.l.b16 %v225
      %v310 = vunpack.c.l.b16 %v226
      %v311 = vunpack.c.l.b16 %v227
      %v312 = vunpack.c.l.b16 %v228
      %v313 = vunpack.c.l.b16 %v229
      %v314 = vunpack.c.l.b16 %v230
      %v315 = vunpack.c.l.b16 %v231
      %v316 = vunpack.c.l.b16 %v232
      %v317 = vunpack.c.l.b16 %v233
      %v318 = vunpack.c.l.b16 %v234
      %v319 = vunpack.c.l.b16 %v235
      %v320 = vunpack.c.l.b16 %v236
      %v321 = vunpack.c.l.b16 %v237
      %v322 = vunpack.c.l.b16 %v238
      %v323 = vunpack.c.l.b16 %v239
      %v324 = vunpack.c.l.b16 %v240
      %v325 = vunpack.c.l.b16 %v241
      %v326 = vunpack.c.l.b16 %v242
      %v327 = vunpack.c.l.b16 %v243
      %v328 = vunpack.c.l.b16 %v244
      %v329 = vunpack.c.l.b16 %v245
      %v330 = vunpack.c.l.b16 %v246
      %v331 = vunpack.c.l.b16 %v247
      %v332 = vunpack.c.l.b16 %v248
      %v333 = vunpack.c.l.b16 %v249
      %v334 = vunpack.c.l.b16 %v250
      %v335 = vunpack.c.l.b16 %v251
      %v336 = vunpack.c.l.b16 %v252
      %v337 = vunpack.c.l.b16 %v253
      %v338 = vunpack.c.l.b16 %v254
      %v339 = vunpack.c.l.b16 %v255
      %v340 = vunpack.c.l.b16 %v256
      %v341 = vpack.c.b16 %v310, %v309
      %v342 = vpack.c.b16 %v312, %v311
      %v343 = vpack.c.b16 %v314, %v313
      %v344 = vpack.c.b16 %v316, %v315
      %v345 = vpack.c.b16 %v318, %v317
      %v346 = vpack.c.b16 %v320, %v319
      %v347 = vpack.c.b16 %v322, %v321
      %v348 = vpack.c.b16 %v324, %v323
      %v349 = vpack.c.b16 %v326, %v325
      %v350 = vpack.c.b16 %v328, %v327
      %v351 = vpack.c.b16 %v330, %v329
      %v352 = vpack.c.b16 %v332, %v331
      %v353 = vpack.c.b16 %v334, %v333
      %v354 = vpack.c.b16 %v336, %v335
      %v355 = vpack.c.b16 %v338, %v337
      %v356 = vpack.c.b16 %v340, %v339
      %v389 = vunpack.c.l.b16 %v257
      %v390 = vunpack.c.l.b16 %v258
      %v391 = vunpack.c.l.b16 %v259
      %v392 = vunpack.c.l.b16 %v260
      %v393 = vunpack.c.l.b16 %v261
      %v394 = vunpack.c.l.b16 %v262
      %v395 = vunpack.c.l.b16 %v263
      %v396 = vunpack.c.l.b16 %v264
      %v397 = vunpack.c.l.b16 %v265
      %v398 = vunpack.c.l.b16 %v266
      %v399 = vunpack.c.l.b16 %v267
      %v400 = vunpack.c.l.b16 %v268
      %v401 = vunpack.c.l.b16 %v269
      %v402 = vunpack.c.l.b16 %v270
      %v403 = vunpack.c.l.b16 %v271
      %v404 = vunpack.c.l.b16 %v272
      %v405 = vpack.c.b16 %v390, %v389
      %v406 = vpack.c.b16 %v392, %v391
      %v407 = vpack.c.b16 %v394, %v393
      %v408 = vpack.c.b16 %v396, %v395
      %v409 = vpack.c.b16 %v398, %v397
      %v410 = vpack.c.b16 %v400, %v399
      %v411 = vpack.c.b16 %v402, %v401
      %v412 = vpack.c.b16 %v404, %v403
      %421 = vmatpush.bf16.msra.mxu0 %v412
      %422 = vmatpush.bf16.msra.mxu0 %v411
      %423 = vmatpush.bf16.msra.mxu0 %v410
      %424 = vmatpush.bf16.msra.mxu0 %v409
      %425 = vmatpush.bf16.msra.mxu0 %v408
      %426 = vmatpush.bf16.msra.mxu0 %v407
      %427 = vmatpush.bf16.msra.mxu0 %v406
      %428 = vmatpush.bf16.msra.mxu0 %v405
      %429 = vmatmul.bf16.gmra.mxu0 %v341
      %v430 = vpop.f32.mrf.mxu0
      %v431 = vadd.f32 %v275, %v430
      %v432 = vpop.f32.mrf.mxu0
      %v433 = vadd.f32 %v275, %v432
      %434 = vmatmul.bf16.gmra.mxu0 %v342
      %v435 = vpop.f32.mrf.mxu0
      %v436 = vadd.f32 %v275, %v435
      %v437 = vpop.f32.mrf.mxu0
      %v438 = vadd.f32 %v275, %v437
      %439 = vmatmul.bf16.gmra.mxu0 %v343
      %v440 = vpop.f32.mrf.mxu0
      %v441 = vadd.f32 %v275, %v440
      %v442 = vpop.f32.mrf.mxu0
      %v443 = vadd.f32 %v275, %v442
      %444 = vmatmul.bf16.gmra.mxu0 %v344
      %v445 = vpop.f32.mrf.mxu0
      %v446 = vadd.f32 %v275, %v445
      %v447 = vpop.f32.mrf.mxu0
      %v448 = vadd.f32 %v275, %v447
      %449 = vmatmul.bf16.gmra.mxu0 %v345
      %v450 = vpop.f32.mrf.mxu0
      %v451 = vadd.f32 %v275, %v450
      %v452 = vpop.f32.mrf.mxu0
      %v453 = vadd.f32 %v275, %v452
      %454 = vmatmul.bf16.gmra.mxu0 %v346
      %v455 = vpop.f32.mrf.mxu0
      %v456 = vadd.f32 %v275, %v455
      %v457 = vpop.f32.mrf.mxu0
      %v458 = vadd.f32 %v275, %v457
      %459 = vmatmul.bf16.gmra.mxu0 %v347
      %v460 = vpop.f32.mrf.mxu0
      %v461 = vadd.f32 %v275, %v460
      %v462 = vpop.f32.mrf.mxu0
      %v463 = vadd.f32 %v275, %v462
      %464 = vmatmul.bf16.gmra.mxu0 %v348
      %v465 = vpop.f32.mrf.mxu0
      %v466 = vadd.f32 %v275, %v465
      %v467 = vpop.f32.mrf.mxu0
      %v468 = vadd.f32 %v275, %v467
      %469 = vmatmul.bf16.gmra.mxu0 %v349
      %v470 = vpop.f32.mrf.mxu0
      %v471 = vadd.f32 %v275, %v470
      %v472 = vpop.f32.mrf.mxu0
      %v473 = vadd.f32 %v275, %v472
      %474 = vmatmul.bf16.gmra.mxu0 %v350
      %v475 = vpop.f32.mrf.mxu0
      %v476 = vadd.f32 %v275, %v475
      %v477 = vpop.f32.mrf.mxu0
      %v478 = vadd.f32 %v275, %v477
      %479 = vmatmul.bf16.gmra.mxu0 %v351
      %v480 = vpop.f32.mrf.mxu0
      %v481 = vadd.f32 %v275, %v480
      %v482 = vpop.f32.mrf.mxu0
      %v483 = vadd.f32 %v275, %v482
      %484 = vmatmul.bf16.gmra.mxu0 %v352
      %v485 = vpop.f32.mrf.mxu0
      %v486 = vadd.f32 %v275, %v485
      %v487 = vpop.f32.mrf.mxu0
      %v488 = vadd.f32 %v275, %v487
      %489 = vmatmul.bf16.gmra.mxu0 %v353
      %v490 = vpop.f32.mrf.mxu0
      %v491 = vadd.f32 %v275, %v490
      %v492 = vpop.f32.mrf.mxu0
      %v493 = vadd.f32 %v275, %v492
      %494 = vmatmul.bf16.gmra.mxu0 %v354
      %v495 = vpop.f32.mrf.mxu0
      %v496 = vadd.f32 %v275, %v495
      %v497 = vpop.f32.mrf.mxu0
      %v498 = vadd.f32 %v275, %v497
      %499 = vmatmul.bf16.gmra.mxu0 %v355
      %v500 = vpop.f32.mrf.mxu0
      %v501 = vadd.f32 %v275, %v500
      %v502 = vpop.f32.mrf.mxu0
      %v503 = vadd.f32 %v275, %v502
      %504 = vmatmul.bf16.gmra.mxu0 %v356
      %v505 = vpop.f32.mrf.mxu0
      %v506 = vadd.f32 %v275, %v505
      %v507 = vpop.f32.mrf.mxu0
      %v508 = vadd.f32 %v275, %v507
      %509 = vdwg.mxu0
      %v510 = vmax.f32 %v431, 0.0
      %v511 = vmax.f32 %v433, 0.0
      %v512 = vmax.f32 %v436, 0.0
      %v513 = vmax.f32 %v438, 0.0
      %v514 = vmax.f32 %v441, 0.0
      %v515 = vmax.f32 %v443, 0.0
      %v516 = vmax.f32 %v446, 0.0
      %v517 = vmax.f32 %v448, 0.0
      %v518 = vmax.f32 %v451, 0.0
      %v519 = vmax.f32 %v453, 0.0
      %v520 = vmax.f32 %v456, 0.0
      %v521 = vmax.f32 %v458, 0.0
      %v522 = vmax.f32 %v461, 0.0
      %v523 = vmax.f32 %v463, 0.0
      %v524 = vmax.f32 %v466, 0.0
      %v525 = vmax.f32 %v468, 0.0
      %v526 = vmax.f32 %v471, 0.0
      %v527 = vmax.f32 %v473, 0.0
      %v528 = vmax.f32 %v476, 0.0
      %v529 = vmax.f32 %v478, 0.0
      %v530 = vmax.f32 %v481, 0.0
      %v531 = vmax.f32 %v483, 0.0
      %v532 = vmax.f32 %v486, 0.0
      %v533 = vmax.f32 %v488, 0.0
      %v534 = vmax.f32 %v491, 0.0
      %v535 = vmax.f32 %v493, 0.0
      %v536 = vmax.f32 %v496, 0.0
      %v537 = vmax.f32 %v498, 0.0
      %v538 = vmax.f32 %v501, 0.0
      %v539 = vmax.f32 %v503, 0.0
      %v540 = vmax.f32 %v506, 0.0
      %v541 = vmax.f32 %v508, 0.0
      %v542 = vpack.c.bf16 %v510, %v510
      %v543 = vpack.c.bf16 %v511, %v511
      %v544 = vpack.c.bf16 %v512, %v512
      %v545 = vpack.c.bf16 %v513, %v513
      %v546 = vpack.c.bf16 %v514, %v514
      %v547 = vpack.c.bf16 %v515, %v515
      %v548 = vpack.c.bf16 %v516, %v516
      %v549 = vpack.c.bf16 %v517, %v517
      %v550 = vpack.c.bf16 %v518, %v518
      %v551 = vpack.c.bf16 %v519, %v519
      %v552 = vpack.c.bf16 %v520, %v520
      %v553 = vpack.c.bf16 %v521, %v521
      %v554 = vpack.c.bf16 %v522, %v522
      %v555 = vpack.c.bf16 %v523, %v523
      %v556 = vpack.c.bf16 %v524, %v524
      %v557 = vpack.c.bf16 %v525, %v525
      %v558 = vpack.c.bf16 %v526, %v526
      %v559 = vpack.c.bf16 %v527, %v527
      %v560 = vpack.c.bf16 %v528, %v528
      %v561 = vpack.c.bf16 %v529, %v529
      %v562 = vpack.c.bf16 %v530, %v530
      %v563 = vpack.c.bf16 %v531, %v531
      %v564 = vpack.c.bf16 %v532, %v532
      %v565 = vpack.c.bf16 %v533, %v533
      %v566 = vpack.c.bf16 %v534, %v534
      %v567 = vpack.c.bf16 %v535, %v535
      %v568 = vpack.c.bf16 %v536, %v536
      %v569 = vpack.c.bf16 %v537, %v537
      %v570 = vpack.c.bf16 %v538, %v538
      %v571 = vpack.c.bf16 %v539, %v539
      %v572 = vpack.c.bf16 %v540, %v540
      %v573 = vpack.c.bf16 %v541, %v541
      %574 = vst [vmem:[%s223] sm:$0xf] %v542
      %575 = vst [vmem:[%s223 + $0x4] sm:$0xf] %v543
      %576 = vst [vmem:[%s223 + $0x8] sm:$0xf] %v544
      %577 = vst [vmem:[%s223 + $0xc] sm:$0xf] %v545
      %578 = vst [vmem:[%s223 + $0x10] sm:$0xf] %v546
      %579 = vst [vmem:[%s223 + $0x14] sm:$0xf] %v547
      %580 = vst [vmem:[%s223 + $0x18] sm:$0xf] %v548
      %581 = vst [vmem:[%s223 + $0x1c] sm:$0xf] %v549
      %582 = vst [vmem:[%s223 + $0x20] sm:$0xf] %v550
      %583 = vst [vmem:[%s223 + $0x24] sm:$0xf] %v551
      %584 = vst [vmem:[%s223 + $0x28] sm:$0xf] %v552
      %585 = vst [vmem:[%s223 + $0x2c] sm:$0xf] %v553
      %586 = vst [vmem:[%s223 + $0x30] sm:$0xf] %v554
      %587 = vst [vmem:[%s223 + $0x34] sm:$0xf] %v555
      %588 = vst [vmem:[%s223 + $0x38] sm:$0xf] %v556
      %589 = vst [vmem:[%s223 + $0x3c] sm:$0xf] %v557
      %590 = vst [vmem:[%s223 + $0x40] sm:$0xf] %v558
      %591 = vst [vmem:[%s223 + $0x44] sm:$0xf] %v559
      %592 = vst [vmem:[%s223 + $0x48] sm:$0xf] %v560
      %593 = vst [vmem:[%s223 + $0x4c] sm:$0xf] %v561
      %594 = vst [vmem:[%s223 + $0x50] sm:$0xf] %v562
      %595 = vst [vmem:[%s223 + $0x54] sm:$0xf] %v563
      %596 = vst [vmem:[%s223 + $0x58] sm:$0xf] %v564
      %597 = vst [vmem:[%s223 + $0x5c] sm:$0xf] %v565
      %598 = vst [vmem:[%s223 + $0x60] sm:$0xf] %v566
      %599 = vst [vmem:[%s223 + $0x64] sm:$0xf] %v567
      %600 = vst [vmem:[%s223 + $0x68] sm:$0xf] %v568
      %601 = vst [vmem:[%s223 + $0x6c] sm:$0xf] %v569
      %602 = vst [vmem:[%s223 + $0x70] sm:$0xf] %v570
      %603 = vst [vmem:[%s223 + $0x74] sm:$0xf] %v571
      %604 = vst [vmem:[%s223 + $0x78] sm:$0xf] %v572
      %605 = vst [vmem:[%s223 + $0x7c] sm:$0xf] %v573
      %s606 = smul.u32 32, %s18
      %p607 = scmp.lt.s32.totalorder %s606, 63
      %s608 = scalar_select %p607, %s606, 63
      %p609 = scmp.lt.s32.totalorder %s19, 0
      %s610 = scalar_select %p609, %s19, 0
      %s611 = sadd.s32 %s610, %s608
      %s612 = smul.addr %s611, 4
      %s613 = scalar_lea.vmem %s3, %s612
      // Predicated region
      $region33: #{slowfast_forward.6} parent=31 // pred_check
        %p614 = pneg %p124
      $region34: #{slowfast_forward.6} parent=31 // pred_check_branch
        %616 = sbr.rel (%p614) target = $region36
      $region35: #{slowfast_forward.6} parent=31 // pred_region
        %s617 = smul.u32 32, %s18
      $region36: #{slowfast_forward.6} parent=31 // pred_fallthru
        _
    $region32: #{slowfast_forward.6} parent=5 // pred_fallthru
      _
    %p618 = scmp.le.s32.totalorder 2, %s9
    // Predicated region
    $region37: #{slowfast_forward.6} parent=5 // pred_check
      %p619 = pneg %p618
    $region38: #{slowfast_forward.6} parent=5 // pred_check_branch
      %621 = sbr.rel (%p619) target = $region40
    $region39: #{slowfast_forward.6} parent=5 // pred_region
      %s622 = ssub.s32 %s9, 2
      // Predicated region
      $region41: #{slowfast_forward.6} parent=39 // pred_check
        %p623 = pneg %p130
      $region42: #{slowfast_forward.6} parent=39 // pred_check_branch
        %625 = sbr.rel (%p623) target = $region44
      $region43: #{slowfast_forward.6} parent=39 // pred_region
        %s626 = smul.u32 32, %s20
        %p627 = scmp.lt.s32.totalorder %s626, 63
        %s628 = scalar_select %p627, %s626, 63
        %p629 = scmp.lt.s32.totalorder %s21, 0
        %s630 = scalar_select %p629, %s21, 0
        %s631 = sadd.s32 %s630, %s628
        %s632 = smul.addr %s631, 4
        %s633 = scalar_lea.vmem %s3, %s632
      $region44: #{slowfast_forward.6} parent=39 // pred_fallthru
        _
    $region40: #{slowfast_forward.6} parent=5 // pred_fallthru
      _
  $region6: #{slowfast_forward.6} parent=0 // loop_footer
    %s13 = sadd.s32 1, %s9
  $region7: #{slowfast_forward.6} parent=0 // loop_footer_branch
    %8 = sbr.rel target = $region3
  $region8: #{slowfast_forward.6} parent=0 // loop_exit
    _

// kernel: slowfast_forward.7
$region0: #{slowfast_forward.7}
  #allocation0 [shape = 'u32[]', space=smem, size = 0x4, offset = 0x4, fixed_abs, tag = 'smem constant byte address 0x4 - core index']
  #allocation1 [shape = 'u32[72,128]{1,0:T(1,128)}', space=vmem, size = 0x9000, scoped, tag = 'internal scratch']
  %s0 = inlined_call_operand.vmem [shape: bf16[128,640], index: 0, kind: input, shape index: {}]
  %s1 = inlined_call_operand.vmem [shape: bf16[640,256], index: 1, kind: input, shape index: {}]
  %s2 = inlined_call_operand.vmem [shape: f32[1,256], index: 2, kind: input, shape index: {}]
  %s3 = inlined_call_operand.vmem [shape: bf16[128,256], index: 3, kind: output, shape index: {}]
  %s4 = sld [smem:[#allocation0]]
  $region123: #{slowfast_forward.7} parent=0
    _
  %s6 = ssub.s32 1, %s4
  %s7 = scalar_select 0, %s6, %s4
  $region1: #{slowfast_forward.7} parent=0
    #allocation2 [shape = 'u8[327680]{0}', space=vmem, size = 0x50000, scoped, tag = 'input window, operand 1']
    #allocation3 [shape = 'u8[65536]{0}', space=vmem, size = 0x10000, scoped, tag = 'output window, operand 0']
    loop: start=0, step=1, limit=4
    $region2: #{slowfast_forward.7} parent=1 // loop_pre_header
      _
    $region3: #{slowfast_forward.7} parent=1 // loop_header
      %s9 = sphi 0, %s13
      %p10 = scmp.ge.s32.totalorder %s9, 4
      %s16 = sphi 0, %s28
      %s17 = sphi 0, %s24
      %s18 = sphi 0, %s16
      %s19 = sphi 0, %s17
      %s20 = sphi 0, %s18
      %s21 = sphi 0, %s19
      %s31 = sphi 0, %s33
      %s34 = sphi 0, %s31
      %s35 = sphi 0, %s34
      %s51 = sphi 0, %s35
      %s57 = sphi 0, %s59
      %s60 = sphi 0, %s57
      %s61 = sphi 0, %s60
      %s77 = sphi 0, %s61
      %s83 = sphi 0, %s85
      %s86 = sphi 0, %s83
      %s87 = sphi 0, %s86
      %s103 = sphi 0, %s87
      %s111 = sphi 0, %s113
      %s114 = sphi 0, %s111
      %s115 = sphi 0, %s114
      %s131 = sphi 0, %s115
    $region4: #{slowfast_forward.7} parent=1 // loop_header_branch
      %12 = sbr.rel (%p10) target = $region8
    $region5: #{slowfast_forward.7} parent=1 // loop_body
      %s14 = ssub.s32 %s9, 1
      %s15 = ssub.s32 %s9, 2
      %s22 = sadd.s32 1, %s17
      %p23 = scmp.ge.s32.totalorder %s22, 2
      %s24 = scalar_select %p23, 0, %s22
      %s25 = sadd.s32 1, %s16
      %s26 = scalar_select %p23, %s25, %s16
      %p27 = scmp.ge.s32.totalorder %s26, 1
      %s28 = scalar_select %p27, 0, %s26
      %s29 = ssub.s32 %s16, %s28
      %p30 = scmp.eq.s32.totalorder %s29, 0
      %s32 = sadd.s32 %s31, 1
      %s33 = scalar_select %p30, %s31, %s32
      %p36 = pneg %p30
      %p37 = scmp.eq.s32.totalorder %s9, 1
      %p38 = por %p36, %p37
      %p39 = scmp.ne.s32.totalorder %s31, %s34
      %p40 = scmp.eq.s32.totalorder %s9, 0
      %p41 = por %p39, %p40
      %p42 = scmp.ne.s32.totalorder %s31, %s34
      %p43 = scmp.eq.s32.totalorder %s14, 1
      %p44 = por %p42, %p43
      %p45 = scmp.ne.s32.totalorder %s34, %s35
      %p46 = scmp.eq.s32.totalorder %s14, 0
      %p47 = por %p45, %p46
      %p48 = scmp.ne.s32.totalorder %s34, %s35
      %p49 = scmp.eq.s32.totalorder %s15, 1
      %p50 = por %p48, %p49
      %p52 = scmp.ne.s32.totalorder %s35, %s51
      %p53 = scmp.eq.s32.totalorder %s15, 0
      %p54 = por %p52, %p53
      %s55 = ssub.s32 %s17, %s24
      %p56 = scmp.eq.s32.totalorder %s55, 0
      %s58 = sadd.s32 %s57, 1
      %s59 = scalar_select %p56, %s57, %s58
      %p62 = pneg %p56
      %p63 = scmp.eq.s32.totalorder %s9, 1
      %p64 = por %p62, %p63
      %p65 = scmp.ne.s32.totalorder %s57, %s60
      %p66 = scmp.eq.s32.totalorder %s9, 0
      %p67 = por %p65, %p66
      %p68 = scmp.ne.s32.totalorder %s57, %s60
      %p69 = scmp.eq.s32.totalorder %s14, 1
      %p70 = por %p68, %p69
      %p71 = scmp.ne.s32.totalorder %s60, %s61
      %p72 = scmp.eq.s32.totalorder %s14, 0
      %p73 = por %p71, %p72
      %p74 = scmp.ne.s32.totalorder %s60, %s61
      %p75 = scmp.eq.s32.totalorder %s15, 1
      %p76 = por %p74, %p75
      %p78 = scmp.ne.s32.totalorder %s61, %s77
      %p79 = scmp.eq.s32.totalorder %s15, 0
      %p80 = por %p78, %p79
      %s81 = ssub.s32 %s17, %s24
      %p82 = scmp.eq.s32.totalorder %s81, 0
      %s84 = sadd.s32 %s83, 1
      %s85 = scalar_select %p82, %s83, %s84
      %p88 = pneg %p82
      %p89 = scmp.eq.s32.totalorder %s9, 1
      %p90 = por %p88, %p89
      %p91 = scmp.ne.s32.totalorder %s83, %s86
      %p92 = scmp.eq.s32.totalorder %s9, 0
      %p93 = por %p91, %p92
      %p94 = scmp.ne.s32.totalorder %s83, %s86
      %p95 = scmp.eq.s32.totalorder %s14, 1
      %p96 = por %p94, %p95
      %p97 = scmp.ne.s32.totalorder %s86, %s87
      %p98 = scmp.eq.s32.totalorder %s14, 0
      %p99 = por %p97, %p98
      %p100 = scmp.ne.s32.totalorder %s86, %s87
      %p101 = scmp.eq.s32.totalorder %s15, 1
      %p102 = por %p100, %p101
      %p104 = scmp.ne.s32.totalorder %s87, %s103
      %p105 = scmp.eq.s32.totalorder %s15, 0
      %p106 = por %p104, %p105
      %s107 = ssub.s32 %s16, %s28
      %s108 = ssub.s32 %s17, %s24
      %s109 = sor.u32 %s107, %s108
      %p110 = scmp.eq.s32.totalorder %s109, 0
      %s112 = sadd.s32 %s111, 1
      %s113 = scalar_select %p110, %s111, %s112
      %p116 = pneg %p110
      %p117 = scmp.eq.s32.totalorder %s9, 1
      %p118 = por %p116, %p117
      %p119 = scmp.ne.s32.totalorder %s111, %s114
      %p120 = scmp.eq.s32.totalorder %s9, 0
      %p121 = por %p119, %p120
      %p122 = scmp.ne.s32.totalorder %s111, %s114
      %p123 = scmp.eq.s32.totalorder %s14, 1
      %p124 = por %p122, %p123
      %p125 = scmp.ne.s32.totalorder %s114, %s115
      %p126 = scmp.eq.s32.totalorder %s14, 0
      %p127 = por %p125, %p126
      %p128 = scmp.ne.s32.totalorder %s114, %s115
      %p129 = scmp.eq.s32.totalorder %s15, 1
      %p130 = por %p128, %p129
      %p132 = scmp.ne.s32.totalorder %s115, %s131
      %p133 = scmp.eq.s32.totalorder %s15, 0
      %p134 = por %p132, %p133
      %p135 = scmp.le.s32.totalorder 1, %s9
      %p136 = scmp.lt.s32.totalorder %s9, 3
      %p137 = pnand %p135, %p136
      %p138 = pneg %p137
      // Predicated region
      $region9: #{slowfast_forward.7} parent=5 // pred_check
        _
      $region10: #{slowfast_forward.7} parent=5 // pred_check_branch
        %140 = sbr.rel (%p137) target = $region12
      $region11: #{slowfast_forward.7} parent=5 // pred_region
        %s141 = ssub.s32 %s9, 1
        // Predicated region
        $region13: #{slowfast_forward.7} parent=11 // pred_check
          %p142 = pneg %p47
        $region14: #{slowfast_forward.7} parent=11 // pred_check_branch
          %144 = sbr.rel (%p142) target = $region16
        $region15: #{slowfast_forward.7} parent=11 // pred_region
          %s145 = smul.u32 16, %s18
          %p146 = scmp.lt.s32.totalorder %s145, 15
          %s147 = scalar_select %p146, %s145, 15
          %s148 = smul.addr %s147, 5
          %s149 = smul.addr %s148, 4
          %s150 = scalar_lea.vmem %s0, %s149
          %s151 = smul.u32 16, %s18
        $region16: #{slowfast_forward.7} parent=11 // pred_fallthru
          _
      $region12: #{slowfast_forward.7} parent=5 // pred_fallthru
        _
      %p152 = scmp.lt.s32.totalorder %s9, 2
      // Predicated region
      $region17: #{slowfast_forward.7} parent=5 // pred_check
        %p153 = pneg %p152
      $region18: #{slowfast_forward.7} parent=5 // pred_check_branch
        %155 = sbr.rel (%p153) target = $region20
      $region19: #{slowfast_forward.7} parent=5 // pred_region
        // Predicated region
        $region21: #{slowfast_forward.7} parent=19 // pred_check
          %p156 = pneg %p67
        $region22: #{slowfast_forward.7} parent=19 // pred_check_branch
          %158 = sbr.rel (%p156) target = $region24
        $region23: #{slowfast_forward.7} parent=19 // pred_region
          %s159 = sand.u32 %s57, 1
          %s160 = sand.u32 %s57, 1
          %s161 = smul.addr %s160, 320
          %s162 = scalar_lea.vmem [#allocation2], %s161
          %s163 = smul.addr %s17, 4
          %s164 = scalar_lea.vmem %s1, %s163
          // Predicated region
          $region25: #{slowfast_forward.7} parent=23 // pred_check
            _
          $region26: #{slowfast_forward.7} parent=23 // pred_check_branch
            %166 = sbr.rel (0) target = $region28
          $region27: #{slowfast_forward.7} parent=23 // pred_region
            // Predicated region
            $region29: #{slowfast_forward.7} parent=27 // pred_check
              _
            $region30: #{slowfast_forward.7} parent=27 // pred_check_branch
              %168 = sbr.rel target = $region32
            $region31: #{slowfast_forward.7} parent=27 // pred_region
              // Predicated region
              $region44: #{slowfast_forward.7} parent=31 // pred_check
                _
              $region45: #{slowfast_forward.7} parent=31 // pred_check_branch
                %342 = sbr.rel (0) target = $region47
              $region46: #{slowfast_forward.7} parent=31 // pred_region
                loop: start=0, step=1, limit=1
                $region48: #{slowfast_forward.7} parent=46 // loop_pre_header
                  _
                $region49: #{slowfast_forward.7} parent=46 // loop_header
                  %s344 = sphi 0, %s348
                  %p345 = scmp.ge.s32.totalorder %s344, 1
                  %s349 = sphi %s164, %s164
                  %s350 = sphi %s162, %s162
                $region50: #{slowfast_forward.7} parent=46 // loop_header_branch
                  %347 = sbr.rel (%p345) target = $region54
                $region51: #{slowfast_forward.7} parent=46 // loop_body
                  _
                $region52: #{slowfast_forward.7} parent=46 // loop_footer
                  %s348 = sadd.s32 1, %s344
                $region53: #{slowfast_forward.7} parent=46 // loop_footer_branch
                  %343 = sbr.rel target = $region49
                $region54: #{slowfast_forward.7} parent=46 // loop_exit
                  _
                %s352 = ssub.s32 16, 1
                loop: start=0, step=1, limit=1
                $region55: #{slowfast_forward.7} parent=46 // loop_pre_header
                  _
                $region56: #{slowfast_forward.7} parent=46 // loop_header
                  %s354 = sphi 0, %s358
                  %p355 = scmp.ge.s32.totalorder %s354, 1
                  %s359 = sphi %s164, %s164
                  %s360 = sphi %s162, %s162
                $region57: #{slowfast_forward.7} parent=46 // loop_header_branch
                  %357 = sbr.rel (%p355) target = $region61
                $region58: #{slowfast_forward.7} parent=46 // loop_body
                  %v361 = vld [vmem:[%s359] sm:%s352]
                  %362 = vst [vmem:[%s360] sm:%s352] %v361
                  %v363 = vld [vmem:[%s359 + $0x8] sm:%s352]
                  %364 = vst [vmem:[%s360 + $0x4] sm:%s352] %v363
                  %v365 = vld [vmem:[%s359 + $0x10] sm:%s352]
                  %366 = vst [vmem:[%s360 + $0x8] sm:%s352] %v365
                  %v367 = vld [vmem:[%s359 + $0x18] sm:%s352]
                  %368 = vst [vmem:[%s360 + $0xc] sm:%s352] %v367
                  %v369 = vld [vmem:[%s359 + $0x20] sm:%s352]
                  %370 = vst [vmem:[%s360 + $0x10] sm:%s352] %v369
                  %v371 = vld [vmem:[%s359 + $0x28] sm:%s352]
                  %372 = vst [vmem:[%s360 + $0x14] sm:%s352] %v371
                  %v373 = vld [vmem:[%s359 + $0x30] sm:%s352]
                  %374 = vst [vmem:[%s360 + $0x18] sm:%s352] %v373
                  %v375 = vld [vmem:[%s359 + $0x38] sm:%s352]
                  %376 = vst [vmem:[%s360 + $0x1c] sm:%s352] %v375
                  %v377 = vld [vmem:[%s359 + $0x40] sm:%s352]
                  %378 = vst [vmem:[%s360 + $0x20] sm:%s352] %v377
                  %v379 = vld [vmem:[%s359 + $0x48] sm:%s352]
                  %380 = vst [vmem:[%s360 + $0x24] sm:%s352] %v379
                  %v381 = vld [vmem:[%s359 + $0x50] sm:%s352]
                  %382 = vst [vmem:[%s360 + $0x28] sm:%s352] %v381
                  %v383 = vld [vmem:[%s359 + $0x58] sm:%s352]
                  %384 = vst [vmem:[%s360 + $0x2c] sm:%s352] %v383
                  %v385 = vld [vmem:[%s359 + $0x60] sm:%s352]
                  %386 = vst [vmem:[%s360 + $0x30] sm:%s352] %v385
                  %v387 = vld [vmem:[%s359 + $0x68] sm:%s352]
                  %388 = vst [vmem:[%s360 + $0x34] sm:%s352] %v387
                  %v389 = vld [vmem:[%s359 + $0x70] sm:%s352]
                  %390 = vst [vmem:[%s360 + $0x38] sm:%s352] %v389
                  %v391 = vld [vmem:[%s359 + $0x78] sm:%s352]
                  %392 = vst [vmem:[%s360 + $0x3c] sm:%s352] %v391
                  %v393 = vld [vmem:[%s359 + $0x80] sm:%s352]
                  %394 = vst [vmem:[%s360 + $0x40] sm:%s352] %v393
                  %v395 = vld [vmem:[%s359 + $0x88] sm:%s352]
                  %396 = vst [vmem:[%s360 + $0x44] sm:%s352] %v395
                  %v397 = vld [vmem:[%s359 + $0x90] sm:%s352]
                  %398 = vst [vmem:[%s360 + $0x48] sm:%s352] %v397
                  %v399 = vld [vmem:[%s359 + $0x98] sm:%s352]
                  %400 = vst [vmem:[%s360 + $0x4c] sm:%s352] %v399
                  %v401 = vld [vmem:[%s359 + $0xa0] sm:%s352]
                  %402 = vst [vmem:[%s360 + $0x50] sm:%s352] %v401
                  %v403 = vld [vmem:[%s359 + $0xa8] sm:%s352]
                  %404 = vst [vmem:[%s360 + $0x54] sm:%s352] %v403
                  %v405 = vld [vmem:[%s359 + $0xb0] sm:%s352]
                  %406 = vst [vmem:[%s360 + $0x58] sm:%s352] %v405
                  %v407 = vld [vmem:[%s359 + $0xb8] sm:%s352]
                  %408 = vst [vmem:[%s360 + $0x5c] sm:%s352] %v407
                  %v409 = vld [vmem:[%s359 + $0xc0] sm:%s352]
                  %410 = vst [vmem:[%s360 + $0x60] sm:%s352] %v409
                  %v411 = vld [vmem:[%s359 + $0xc8] sm:%s352]
                  %412 = vst [vmem:[%s360 + $0x64] sm:%s352] %v411
                  %v413 = vld [vmem:[%s359 + $0xd0] sm:%s352]
                  %414 = vst [vmem:[%s360 + $0x68] sm:%s352] %v413
                  %v415 = vld [vmem:[%s359 + $0xd8] sm:%s352]
                  %416 = vst [vmem:[%s360 + $0x6c] sm:%s352] %v415
                  %v417 = vld [vmem:[%s359 + $0xe0] sm:%s352]
                  %418 = vst [vmem:[%s360 + $0x70] sm:%s352] %v417
                  %v419 = vld [vmem:[%s359 + $0xe8] sm:%s352]
                  %420 = vst [vmem:[%s360 + $0x74] sm:%s352] %v419
                  %v421 = vld [vmem:[%s359 + $0xf0] sm:%s352]
                  %422 = vst [vmem:[%s360 + $0x78] sm:%s352] %v421
                  %v423 = vld [vmem:[%s359 + $0xf8] sm:%s352]
                  %424 = vst [vmem:[%s360 + $0x7c] sm:%s352] %v423
                  %v425 = vld [vmem:[%s359 + $0x100] sm:%s352]
                  %426 = vst [vmem:[%s360 + $0x80] sm:%s352] %v425
                  %v427 = vld [vmem:[%s359 + $0x108] sm:%s352]
                  %428 = vst [vmem:[%s360 + $0x84] sm:%s352] %v427
                  %v429 = vld [vmem:[%s359 + $0x110] sm:%s352]
                  %430 = vst [vmem:[%s360 + $0x88] sm:%s352] %v429
                  %v431 = vld [vmem:[%s359 + $0x118] sm:%s352]
                  %432 = vst [vmem:[%s360 + $0x8c] sm:%s352] %v431
                  %v433 = vld [vmem:[%s359 + $0x120] sm:%s352]
                  %434 = vst [vmem:[%s360 + $0x90] sm:%s352] %v433
                  %v435 = vld [vmem:[%s359 + $0x128] sm:%s352]
                  %436 = vst [vmem:[%s360 + $0x94] sm:%s352] %v435
                  %v437 = vld [vmem:[%s359 + $0x130] sm:%s352]
                  %438 = vst [vmem:[%s360 + $0x98] sm:%s352] %v437
                  %v439 = vld [vmem:[%s359 + $0x138] sm:%s352]
                  %440 = vst [vmem:[%s360 + $0x9c] sm:%s352] %v439
                  %v441 = vld [vmem:[%s359 + $0x140] sm:%s352]
                  %442 = vst [vmem:[%s360 + $0xa0] sm:%s352] %v441
                  %v443 = vld [vmem:[%s359 + $0x148] sm:%s352]
                  %444 = vst [vmem:[%s360 + $0xa4] sm:%s352] %v443
                  %v445 = vld [vmem:[%s359 + $0x150] sm:%s352]
                  %446 = vst [vmem:[%s360 + $0xa8] sm:%s352] %v445
                  %v447 = vld [vmem:[%s359 + $0x158] sm:%s352]
                  %448 = vst [vmem:[%s360 + $0xac] sm:%s352] %v447
                  %v449 = vld [vmem:[%s359 + $0x160] sm:%s352]
                  %450 = vst [vmem:[%s360 + $0xb0] sm:%s352] %v449
                  %v451 = vld [vmem:[%s359 + $0x168] sm:%s352]
                  %452 = vst [vmem:[%s360 + $0xb4] sm:%s352] %v451
                  %v453 = vld [vmem:[%s359 + $0x170] sm:%s352]
                  %454 = vst [vmem:[%s360 + $0xb8] sm:%s352] %v453
                  %v455 = vld [vmem:[%s359 + $0x178] sm:%s352]
                  %456 = vst [vmem:[%s360 + $0xbc] sm:%s352] %v455
                  %v457 = vld [vmem:[%s359 + $0x180] sm:%s352]
                  %458 = vst [vmem:[%s360 + $0xc0] sm:%s352] %v457
                  %v459 = vld [vmem:[%s359 + $0x188] sm:%s352]
                  %460 = vst [vmem:[%s360 + $0xc4] sm:%s352] %v459
                  %v461 = vld [vmem:[%s359 + $0x190] sm:%s352]
                  %462 = vst [vmem:[%s360 + $0xc8] sm:%s352] %v461
                  %v463 = vld [vmem:[%s359 + $0x198] sm:%s352]
                  %464 = vst [vmem:[%s360 + $0xcc] sm:%s352] %v463
                  %v465 = vld [vmem:[%s359 + $0x1a0] sm:%s352]
                  %466 = vst [vmem:[%s360 + $0xd0] sm:%s352] %v465
                  %v467 = vld [vmem:[%s359 + $0x1a8] sm:%s352]
                  %468 = vst [vmem:[%s360 + $0xd4] sm:%s352] %v467
                  %v469 = vld [vmem:[%s359 + $0x1b0] sm:%s352]
                  %470 = vst [vmem:[%s360 + $0xd8] sm:%s352] %v469
                  %v471 = vld [vmem:[%s359 + $0x1b8] sm:%s352]
                  %472 = vst [vmem:[%s360 + $0xdc] sm:%s352] %v471
                  %v473 = vld [vmem:[%s359 + $0x1c0] sm:%s352]
                  %474 = vst [vmem:[%s360 + $0xe0] sm:%s352] %v473
                  %v475 = vld [vmem:[%s359 + $0x1c8] sm:%s352]
                  %476 = vst [vmem:[%s360 + $0xe4] sm:%s352] %v475
                  %v477 = vld [vmem:[%s359 + $0x1d0] sm:%s352]
                  %478 = vst [vmem:[%s360 + $0xe8] sm:%s352] %v477
                  %v479 = vld [vmem:[%s359 + $0x1d8] sm:%s352]
                  %480 = vst [vmem:[%s360 + $0xec] sm:%s352] %v479
                  %v481 = vld [vmem:[%s359 + $0x1e0] sm:%s352]
                  %482 = vst [vmem:[%s360 + $0xf0] sm:%s352] %v481
                  %v483 = vld [vmem:[%s359 + $0x1e8] sm:%s352]
                  %484 = vst [vmem:[%s360 + $0xf4] sm:%s352] %v483
                  %v485 = vld [vmem:[%s359 + $0x1f0] sm:%s352]
                  %486 = vst [vmem:[%s360 + $0xf8] sm:%s352] %v485
                  %v487 = vld [vmem:[%s359 + $0x1f8] sm:%s352]
                  %488 = vst [vmem:[%s360 + $0xfc] sm:%s352] %v487
                  %v489 = vld [vmem:[%s359 + $0x200] sm:%s352]
                  %490 = vst [vmem:[%s360 + $0x100] sm:%s352] %v489
                  %v491 = vld [vmem:[%s359 + $0x208] sm:%s352]
                  %492 = vst [vmem:[%s360 + $0x104] sm:%s352] %v491
                  %v493 = vld [vmem:[%s359 + $0x210] sm:%s352]
                  %494 = vst [vmem:[%s360 + $0x108] sm:%s352] %v493
                  %v495 = vld [vmem:[%s359 + $0x218] sm:%s352]
                  %496 = vst [vmem:[%s360 + $0x10c] sm:%s352] %v495
                  %v497 = vld [vmem:[%s359 + $0x220] sm:%s352]
                  %498 = vst [vmem:[%s360 + $0x110] sm:%s352] %v497
                  %v499 = vld [vmem:[%s359 + $0x228] sm:%s352]
                  %500 = vst [vmem:[%s360 + $0x114] sm:%s352] %v499
                  %v501 = vld [vmem:[%s359 + $0x230] sm:%s352]
                  %502 = vst [vmem:[%s360 + $0x118] sm:%s352] %v501
                  %v503 = vld [vmem:[%s359 + $0x238] sm:%s352]
                  %504 = vst [vmem:[%s360 + $0x11c] sm:%s352] %v503
                  %v505 = vld [vmem:[%s359 + $0x240] sm:%s352]
                  %506 = vst [vmem:[%s360 + $0x120] sm:%s352] %v505
                  %v507 = vld [vmem:[%s359 + $0x248] sm:%s352]
                  %508 = vst [vmem:[%s360 + $0x124] sm:%s352] %v507
                  %v509 = vld [vmem:[%s359 + $0x250] sm:%s352]
                  %510 = vst [vmem:[%s360 + $0x128] sm:%s352] %v509
                  %v511 = vld [vmem:[%s359 + $0x258] sm:%s352]
                  %512 = vst [vmem:[%s360 + $0x12c] sm:%s352] %v511
                  %v513 = vld [vmem:[%s359 + $0x260] sm:%s352]
                  %514 = vst [vmem:[%s360 + $0x130] sm:%s352] %v513
                  %v515 = vld [vmem:[%s359 + $0x268] sm:%s352]
                  %516 = vst [vmem:[%s360 + $0x134] sm:%s352] %v515
                  %v517 = vld [vmem:[%s359 + $0x270] sm:%s352]
                  %518 = vst [vmem:[%s360 + $0x138] sm:%s352] %v517
                  %v519 = vld [vmem:[%s359 + $0x278] sm:%s352]
                  %520 = vst [vmem:[%s360 + $0x13c] sm:%s352] %v519
                $region59: #{slowfast_forward.7} parent=46 // loop_footer
                  %s358 = sadd.s32 1, %s354
                $region60: #{slowfast_forward.7} parent=46 // loop_footer_branch
                  %353 = sbr.rel target = $region56
                $region61: #{slowfast_forward.7} parent=46 // loop_exit
                  _
              $region47: #{slowfast_forward.7} parent=31 // pred_fallthru
                _
            $region32: #{slowfast_forward.7} parent=27 // pred_fallthru
              _
            // Predicated region
            $region33: #{slowfast_forward.7} parent=27 // pred_check
              _
            $region34: #{slowfast_forward.7} parent=27 // pred_check_branch
              %170 = sbr.rel (0) target = $region36
            $region35: #{slowfast_forward.7} parent=27 // pred_region
              %s172 = ssub.s32 16, 1
              loop: start=0, step=1, limit=1
              $region37: #{slowfast_forward.7} parent=35 // loop_pre_header
                _
              $region38: #{slowfast_forward.7} parent=35 // loop_header
                %s174 = sphi 0, %s178
                %p175 = scmp.ge.s32.totalorder %s174, 1
                %s179 = sphi %s164, %s164
                %s180 = sphi %s162, %s162
              $region39: #{slowfast_forward.7} parent=35 // loop_header_branch
                %177 = sbr.rel (%p175) target = $region43
              $region40: #{slowfast_forward.7} parent=35 // loop_body
                %v181 = vld [vmem:[%s179] sm:%s172]
                %182 = vst [vmem:[%s180] sm:%s172] %v181
                %v183 = vld [vmem:[%s179 + $0x8] sm:%s172]
                %184 = vst [vmem:[%s180 + $0x4] sm:%s172] %v183
                %v185 = vld [vmem:[%s179 + $0x10] sm:%s172]
                %186 = vst [vmem:[%s180 + $0x8] sm:%s172] %v185
                %v187 = vld [vmem:[%s179 + $0x18] sm:%s172]
                %188 = vst [vmem:[%s180 + $0xc] sm:%s172] %v187
                %v189 = vld [vmem:[%s179 + $0x20] sm:%s172]
                %190 = vst [vmem:[%s180 + $0x10] sm:%s172] %v189
                %v191 = vld [vmem:[%s179 + $0x28] sm:%s172]
                %192 = vst [vmem:[%s180 + $0x14] sm:%s172] %v191
                %v193 = vld [vmem:[%s179 + $0x30] sm:%s172]
                %194 = vst [vmem:[%s180 + $0x18] sm:%s172] %v193
                %v195 = vld [vmem:[%s179 + $0x38] sm:%s172]
                %196 = vst [vmem:[%s180 + $0x1c] sm:%s172] %v195
                %v197 = vld [vmem:[%s179 + $0x40] sm:%s172]
                %198 = vst [vmem:[%s180 + $0x20] sm:%s172] %v197
                %v199 = vld [vmem:[%s179 + $0x48] sm:%s172]
                %200 = vst [vmem:[%s180 + $0x24] sm:%s172] %v199
                %v201 = vld [vmem:[%s179 + $0x50] sm:%s172]
                %202 = vst [vmem:[%s180 + $0x28] sm:%s172] %v201
                %v203 = vld [vmem:[%s179 + $0x58] sm:%s172]
                %204 = vst [vmem:[%s180 + $0x2c] sm:%s172] %v203
                %v205 = vld [vmem:[%s179 + $0x60] sm:%s172]
                %206 = vst [vmem:[%s180 + $0x30] sm:%s172] %v205
                %v207 = vld [vmem:[%s179 + $0x68] sm:%s172]
                %208 = vst [vmem:[%s180 + $0x34] sm:%s172] %v207
                %v209 = vld [vmem:[%s179 + $0x70] sm:%s172]
                %210 = vst [vmem:[%s180 + $0x38] sm:%s172] %v209
                %v211 = vld [vmem:[%s179 + $0x78] sm:%s172]
                %212 = vst [vmem:[%s180 + $0x3c] sm:%s172] %v211
                %v213 = vld [vmem:[%s179 + $0x80] sm:%s172]
                %214 = vst [vmem:[%s180 + $0x40] sm:%s172] %v213
                %v215 = vld [vmem:[%s179 + $0x88] sm:%s172]
                %216 = vst [vmem:[%s180 + $0x44] sm:%s172] %v215
                %v217 = vld [vmem:[%s179 + $0x90] sm:%s172]
                %218 = vst [vmem:[%s180 + $0x48] sm:%s172] %v217
                %v219 = vld [vmem:[%s179 + $0x98] sm:%s172]
                %220 = vst [vmem:[%s180 + $0x4c] sm:%s172] %v219
                %v221 = vld [vmem:[%s179 + $0xa0] sm:%s172]
                %222 = vst [vmem:[%s180 + $0x50] sm:%s172] %v221
                %v223 = vld [vmem:[%s179 + $0xa8] sm:%s172]
                %224 = vst [vmem:[%s180 + $0x54] sm:%s172] %v223
                %v225 = vld [vmem:[%s179 + $0xb0] sm:%s172]
                %226 = vst [vmem:[%s180 + $0x58] sm:%s172] %v225
                %v227 = vld [vmem:[%s179 + $0xb8] sm:%s172]
                %228 = vst [vmem:[%s180 + $0x5c] sm:%s172] %v227
                %v229 = vld [vmem:[%s179 + $0xc0] sm:%s172]
                %230 = vst [vmem:[%s180 + $0x60] sm:%s172] %v229
                %v231 = vld [vmem:[%s179 + $0xc8] sm:%s172]
                %232 = vst [vmem:[%s180 + $0x64] sm:%s172] %v231
                %v233 = vld [vmem:[%s179 + $0xd0] sm:%s172]
                %234 = vst [vmem:[%s180 + $0x68] sm:%s172] %v233
                %v235 = vld [vmem:[%s179 + $0xd8] sm:%s172]
                %236 = vst [vmem:[%s180 + $0x6c] sm:%s172] %v235
                %v237 = vld [vmem:[%s179 + $0xe0] sm:%s172]
                %238 = vst [vmem:[%s180 + $0x70] sm:%s172] %v237
                %v239 = vld [vmem:[%s179 + $0xe8] sm:%s172]
                %240 = vst [vmem:[%s180 + $0x74] sm:%s172] %v239
                %v241 = vld [vmem:[%s179 + $0xf0] sm:%s172]
                %242 = vst [vmem:[%s180 + $0x78] sm:%s172] %v241
                %v243 = vld [vmem:[%s179 + $0xf8] sm:%s172]
                %244 = vst [vmem:[%s180 + $0x7c] sm:%s172] %v243
                %v245 = vld [vmem:[%s179 + $0x100] sm:%s172]
                %246 = vst [vmem:[%s180 + $0x80] sm:%s172] %v245
                %v247 = vld [vmem:[%s179 + $0x108] sm:%s172]
                %248 = vst [vmem:[%s180 + $0x84] sm:%s172] %v247
                %v249 = vld [vmem:[%s179 + $0x110] sm:%s172]
                %250 = vst [vmem:[%s180 + $0x88] sm:%s172] %v249
                %v251 = vld [vmem:[%s179 + $0x118] sm:%s172]
                %252 = vst [vmem:[%s180 + $0x8c] sm:%s172] %v251
                %v253 = vld [vmem:[%s179 + $0x120] sm:%s172]
                %254 = vst [vmem:[%s180 + $0x90] sm:%s172] %v253
                %v255 = vld [vmem:[%s179 + $0x128] sm:%s172]
                %256 = vst [vmem:[%s180 + $0x94] sm:%s172] %v255
                %v257 = vld [vmem:[%s179 + $0x130] sm:%s172]
                %258 = vst [vmem:[%s180 + $0x98] sm:%s172] %v257
                %v259 = vld [vmem:[%s179 + $0x138] sm:%s172]
                %260 = vst [vmem:[%s180 + $0x9c] sm:%s172] %v259
                %v261 = vld [vmem:[%s179 + $0x140] sm:%s172]
                %262 = vst [vmem:[%s180 + $0xa0] sm:%s172] %v261
                %v263 = vld [vmem:[%s179 + $0x148] sm:%s172]
                %264 = vst [vmem:[%s180 + $0xa4] sm:%s172] %v263
                %v265 = vld [vmem:[%s179 + $0x150] sm:%s172]
                %266 = vst [vmem:[%s180 + $0xa8] sm:%s172] %v265
                %v267 = vld [vmem:[%s179 + $0x158] sm:%s172]
                %268 = vst [vmem:[%s180 + $0xac] sm:%s172] %v267
                %v269 = vld [vmem:[%s179 + $0x160] sm:%s172]
                %270 = vst [vmem:[%s180 + $0xb0] sm:%s172] %v269
                %v271 = vld [vmem:[%s179 + $0x168] sm:%s172]
                %272 = vst [vmem:[%s180 + $0xb4] sm:%s172] %v271
                %v273 = vld [vmem:[%s179 + $0x170] sm:%s172]
                %274 = vst [vmem:[%s180 + $0xb8] sm:%s172] %v273
                %v275 = vld [vmem:[%s179 + $0x178] sm:%s172]
                %276 = vst [vmem:[%s180 + $0xbc] sm:%s172] %v275
                %v277 = vld [vmem:[%s179 + $0x180] sm:%s172]
                %278 = vst [vmem:[%s180 + $0xc0] sm:%s172] %v277
                %v279 = vld [vmem:[%s179 + $0x188] sm:%s172]
                %280 = vst [vmem:[%s180 + $0xc4] sm:%s172] %v279
                %v281 = vld [vmem:[%s179 + $0x190] sm:%s172]
                %282 = vst [vmem:[%s180 + $0xc8] sm:%s172] %v281
                %v283 = vld [vmem:[%s179 + $0x198] sm:%s172]
                %284 = vst [vmem:[%s180 + $0xcc] sm:%s172] %v283
                %v285 = vld [vmem:[%s179 + $0x1a0] sm:%s172]
                %286 = vst [vmem:[%s180 + $0xd0] sm:%s172] %v285
                %v287 = vld [vmem:[%s179 + $0x1a8] sm:%s172]
                %288 = vst [vmem:[%s180 + $0xd4] sm:%s172] %v287
                %v289 = vld [vmem:[%s179 + $0x1b0] sm:%s172]
                %290 = vst [vmem:[%s180 + $0xd8] sm:%s172] %v289
                %v291 = vld [vmem:[%s179 + $0x1b8] sm:%s172]
                %292 = vst [vmem:[%s180 + $0xdc] sm:%s172] %v291
                %v293 = vld [vmem:[%s179 + $0x1c0] sm:%s172]
                %294 = vst [vmem:[%s180 + $0xe0] sm:%s172] %v293
                %v295 = vld [vmem:[%s179 + $0x1c8] sm:%s172]
                %296 = vst [vmem:[%s180 + $0xe4] sm:%s172] %v295
                %v297 = vld [vmem:[%s179 + $0x1d0] sm:%s172]
                %298 = vst [vmem:[%s180 + $0xe8] sm:%s172] %v297
                %v299 = vld [vmem:[%s179 + $0x1d8] sm:%s172]
                %300 = vst [vmem:[%s180 + $0xec] sm:%s172] %v299
                %v301 = vld [vmem:[%s179 + $0x1e0] sm:%s172]
                %302 = vst [vmem:[%s180 + $0xf0] sm:%s172] %v301
                %v303 = vld [vmem:[%s179 + $0x1e8] sm:%s172]
                %304 = vst [vmem:[%s180 + $0xf4] sm:%s172] %v303
                %v305 = vld [vmem:[%s179 + $0x1f0] sm:%s172]
                %306 = vst [vmem:[%s180 + $0xf8] sm:%s172] %v305
                %v307 = vld [vmem:[%s179 + $0x1f8] sm:%s172]
                %308 = vst [vmem:[%s180 + $0xfc] sm:%s172] %v307
                %v309 = vld [vmem:[%s179 + $0x200] sm:%s172]
                %310 = vst [vmem:[%s180 + $0x100] sm:%s172] %v309
                %v311 = vld [vmem:[%s179 + $0x208] sm:%s172]
                %312 = vst [vmem:[%s180 + $0x104] sm:%s172] %v311
                %v313 = vld [vmem:[%s179 + $0x210] sm:%s172]
                %314 = vst [vmem:[%s180 + $0x108] sm:%s172] %v313
                %v315 = vld [vmem:[%s179 + $0x218] sm:%s172]
                %316 = vst [vmem:[%s180 + $0x10c] sm:%s172] %v315
                %v317 = vld [vmem:[%s179 + $0x220] sm:%s172]
                %318 = vst [vmem:[%s180 + $0x110] sm:%s172] %v317
                %v319 = vld [vmem:[%s179 + $0x228] sm:%s172]
                %320 = vst [vmem:[%s180 + $0x114] sm:%s172] %v319
                %v321 = vld [vmem:[%s179 + $0x230] sm:%s172]
                %322 = vst [vmem:[%s180 + $0x118] sm:%s172] %v321
                %v323 = vld [vmem:[%s179 + $0x238] sm:%s172]
                %324 = vst [vmem:[%s180 + $0x11c] sm:%s172] %v323
                %v325 = vld [vmem:[%s179 + $0x240] sm:%s172]
                %326 = vst [vmem:[%s180 + $0x120] sm:%s172] %v325
                %v327 = vld [vmem:[%s179 + $0x248] sm:%s172]
                %328 = vst [vmem:[%s180 + $0x124] sm:%s172] %v327
                %v329 = vld [vmem:[%s179 + $0x250] sm:%s172]
                %330 = vst [vmem:[%s180 + $0x128] sm:%s172] %v329
                %v331 = vld [vmem:[%s179 + $0x258] sm:%s172]
                %332 = vst [vmem:[%s180 + $0x12c] sm:%s172] %v331
                %v333 = vld [vmem:[%s179 + $0x260] sm:%s172]
                %334 = vst [vmem:[%s180 + $0x130] sm:%s172] %v333
                %v335 = vld [vmem:[%s179 + $0x268] sm:%s172]
                %336 = vst [vmem:[%s180 + $0x134] sm:%s172] %v335
                %v337 = vld [vmem:[%s179 + $0x270] sm:%s172]
                %338 = vst [vmem:[%s180 + $0x138] sm:%s172] %v337
                %v339 = vld [vmem:[%s179 + $0x278] sm:%s172]
                %340 = vst [vmem:[%s180 + $0x13c] sm:%s172] %v339
              $region41: #{slowfast_forward.7} parent=35 // loop_footer
                %s178 = sadd.s32 1, %s174
              $region42: #{slowfast_forward.7} parent=35 // loop_footer_branch
                %173 = sbr.rel target = $region38
              $region43: #{slowfast_forward.7} parent=35 // loop_exit
                _
            $region36: #{slowfast_forward.7} parent=27 // pred_fallthru
              _
          $region28: #{slowfast_forward.7} parent=23 // pred_fallthru
            _
          %521 = vnop
        $region24: #{slowfast_forward.7} parent=19 // pred_fallthru
          _
        // Predicated region
        $region62: #{slowfast_forward.7} parent=19 // pred_check
          %p522 = pneg %p93
        $region63: #{slowfast_forward.7} parent=19 // pred_check_branch
          %524 = sbr.rel (%p522) target = $region65
        $region64: #{slowfast_forward.7} parent=19 // pred_region
          %p525 = scmp.lt.s32.totalorder %s17, 1
          %s526 = scalar_select %p525, %s17, 1
          %s527 = scalar_lea.vmem %s2, %s526
        $region65: #{slowfast_forward.7} parent=19 // pred_fallthru
          _
      $region20: #{slowfast_forward.7} parent=5 // pred_fallthru
        _
      %p528 = scmp.le.s32.totalorder 1, %s9
      %p529 = scmp.lt.s32.totalorder %s9, 3
      %p530 = pnand %p528, %p529
      %p531 = pneg %p530
      // Predicated region
      $region66: #{slowfast_forward.7} parent=5 // pred_check
        _
      $region67: #{slowfast_forward.7} parent=5 // pred_check_branch
        %533 = sbr.rel (%p530) target = $region69
      $region68: #{slowfast_forward.7} parent=5 // pred_region
        %s534 = ssub.s32 %s9, 1
        %s535 = sand.u32 %s60, 1
        %s536 = sand.u32 %s60, 1
        %s537 = smul.addr %s536, 320
        %s538 = scalar_lea.vmem [#allocation2], %s537
        // Predicated region
        $region70: #{slowfast_forward.7} parent=68 // pred_check
          %p539 = pneg %p73
        $region71: #{slowfast_forward.7} parent=68 // pred_check_branch
          %541 = sbr.rel (%p539) target = $region73
        $region72: #{slowfast_forward.7} parent=68 // pred_region
          _
        $region73: #{slowfast_forward.7} parent=68 // pred_fallthru
          _
        %s542 = smul.u32 16, %s18
        %p543 = scmp.lt.s32.totalorder %s542, 15
        %s544 = scalar_select %p543, %s542, 15
        %s545 = smul.addr %s544, 5
        %s546 = smul.addr %s545, 4
        %s547 = scalar_lea.vmem %s0, %s546
        %p548 = pneg %p47
        %p549 = pneg %p44
        %s550 = sand.u32 %s60, 1
        %s551 = sand.u32 %s60, 1
        %s552 = smul.addr %s551, 320
        %s553 = scalar_lea.vmem [#allocation2], %s552
        %p554 = pneg %p73
        %p555 = pneg %p70
        %p556 = scmp.lt.s32.totalorder %s19, 1
        %s557 = scalar_select %p556, %s19, 1
        %s558 = scalar_lea.vmem %s2, %s557
        %p559 = pneg %p99
        %p560 = pneg %p96
        %p561 = pneg %p127
        %p562 = pneg %p124
        %s563 = sand.u32 %s114, 1
        %s564 = sand.u32 %s114, 1
        %s565 = smul.addr %s564, 64
        %s566 = scalar_lea.vmem [#allocation3], %s565
        %s567 = smul.u32 16, %s18
        %p568 = scmp.lt.s32.totalorder %s567, 15
        %s569 = scalar_select %p568, %s567, 15
        %s570 = smul.addr %s569, 5
        %s571 = smul.addr %s570, 4
        %s572 = scalar_lea.vmem %s0, %s571
        %s573 = smul.u32 16, %s18
        %p574 = scmp.lt.s32.totalorder %s19, 1
        %s575 = scalar_select %p574, %s19, 1
        %s576 = scalar_lea.vmem %s2, %s575
        %s577 = smul.u32 16, %s18
        %v578 = vld [vmem:[%s572] sm:$0xff]
        %v579 = vld [vmem:[%s572 + $0x8] sm:$0xff]
        %v580 = vld [vmem:[%s572 + $0x10] sm:$0xf]
        %v581 = vld [vmem:[%s572 + $0x14] sm:$0xff]
        %v582 = vld [vmem:[%s572 + $0x1c] sm:$0xff]
        %v583 = vld [vmem:[%s572 + $0x24] sm:$0xf]
        %v584 = vld [vmem:[%s572 + $0x28] sm:$0xff]
        %v585 = vld [vmem:[%s572 + $0x30] sm:$0xff]
        %v586 = vld [vmem:[%s572 + $0x38] sm:$0xf]
        %v587 = vld [vmem:[%s572 + $0x3c] sm:$0xff]
        %v588 = vld [vmem:[%s572 + $0x44] sm:$0xff]
        %v589 = vld [vmem:[%s572 + $0x4c] sm:$0xf]
        %v590 = vld [vmem:[%s572 + $0x50] sm:$0xff]
        %v591 = vld [vmem:[%s572 + $0x58] sm:$0xff]
        %v592 = vld [vmem:[%s572 + $0x60] sm:$0xf]
        %v593 = vld [vmem:[%s572 + $0x64] sm:$0xff]
        %v594 = vld [vmem:[%s572 + $0x6c] sm:$0xff]
        %v595 = vld [vmem:[%s572 + $0x74] sm:$0xf]
        %v596 = vld [vmem:[%s572 + $0x78] sm:$0xff]
        %v597 = vld [vmem:[%s572 + $0x80] sm:$0xff]
        %v598 = vld [vmem:[%s572 + $0x88] sm:$0xf]
        %v599 = vld [vmem:[%s572 + $0x8c] sm:$0xff]
        %v600 = vld [vmem:[%s572 + $0x94] sm:$0xff]
        %v601 = vld [vmem:[%s572 + $0x9c] sm:$0xf]
        %v602 = vld [vmem:[%s572 + $0xa0] sm:$0xff]
        %v603 = vld [vmem:[%s572 + $0xa8] sm:$0xff]
        %v604 = vld [vmem:[%s572 + $0xb0] sm:$0xf]
        %v605 = vld [vmem:[%s572 + $0xb4] sm:$0xff]
        %v606 = vld [vmem:[%s572 + $0xbc] sm:$0xff]
        %v607 = vld [vmem:[%s572 + $0xc4] sm:$0xf]
        %v608 = vld [vmem:[%s572 + $0xc8] sm:$0xff]
        %v609 = vld [vmem:[%s572 + $0xd0] sm:$0xff]
        %v610 = vld [vmem:[%s572 + $0xd8] sm:$0xf]
        %v611 = vld [vmem:[%s572 + $0xdc] sm:$0xff]
        %v612 = vld [vmem:[%s572 + $0xe4] sm:$0xff]
        %v613 = vld [vmem:[%s572 + $0xec] sm:$0xf]
        %v614 = vld [vmem:[%s572 + $0xf0] sm:$0xff]
        %v615 = vld [vmem:[%s572 + $0xf8] sm:$0xff]
        %v616 = vld [vmem:[%s572 + $0x100] sm:$0xf]
        %v617 = vld [vmem:[%s572 + $0x104] sm:$0xff]
        %v618 = vld [vmem:[%s572 + $0x10c] sm:$0xff]
        %v619 = vld [vmem:[%s572 + $0x114] sm:$0xf]
        %v620 = vld [vmem:[%s572 + $0x118] sm:$0xff]
        %v621 = vld [vmem:[%s572 + $0x120] sm:$0xff]
        %v622 = vld [vmem:[%s572 + $0x128] sm:$0xf]
        %v623 = vld [vmem:[%s572 + $0x12c] sm:$0xff]
        %v624 = vld [vmem:[%s572 + $0x134] sm:$0xff]
        %v625 = vld [vmem:[%s572 + $0x13c] sm:$0xf]
        %v626 = vld [vmem:[%s538] sm:$0xf]
        %v627 = vld [vmem:[%s538 + $0x4] sm:$0xf]
        %v628 = vld [vmem:[%s538 + $0x8] sm:$0xf]
        %v629 = vld [vmem:[%s538 + $0xc] sm:$0xf]
        %v630 = vld [vmem:[%s538 + $0x10] sm:$0xf]
        %v631 = vld [vmem:[%s538 + $0x14] sm:$0xf]
        %v632 = vld [vmem:[%s538 + $0x18] sm:$0xf]
        %v633 = vld [vmem:[%s538 + $0x1c] sm:$0xf]
        %v634 = vld [vmem:[%s538 + $0x20] sm:$0xf]
        %v635 = vld [vmem:[%s538 + $0x24] sm:$0xf]
        %v636 = vld [vmem:[%s538 + $0x28] sm:$0xf]
        %v637 = vld [vmem:[%s538 + $0x2c] sm:$0xf]
        %v638 = vld [vmem:[%s538 + $0x30] sm:$0xf]
        %v639 = vld [vmem:[%s538 + $0x34] sm:$0xf]
        %v640 = vld [vmem:[%s538 + $0x38] sm:$0xf]
        %v641 = vld [vmem:[%s538 + $0x3c] sm:$0xf]
        %v642 = vld [vmem:[%s538 + $0x40] sm:$0xf]
        %v643 = vld [vmem:[%s538 + $0x44] sm:$0xf]
        %v644 = vld [vmem:[%s538 + $0x48] sm:$0xf]
        %v645 = vld [vmem:[%s538 + $0x4c] sm:$0xf]
        %v646 = vld [vmem:[%s538 + $0x50] sm:$0xf]
        %v647 = vld [vmem:[%s538 + $0x54] sm:$0xf]
        %v648 = vld [vmem:[%s538 + $0x58] sm:$0xf]
        %v649 = vld [vmem:[%s538 + $0x5c] sm:$0xf]
        %v650 = vld [vmem:[%s538 + $0x60] sm:$0xf]
        %v651 = vld [vmem:[%s538 + $0x64] sm:$0xf]
        %v652 = vld [vmem:[%s538 + $0x68] sm:$0xf]
        %v653 = vld [vmem:[%s538 + $0x6c] sm:$0xf]
        %v654 = vld [vmem:[%s538 + $0x70] sm:$0xf]
        %v655 = vld [vmem:[%s538 + $0x74] sm:$0xf]
        %v656 = vld [vmem:[%s538 + $0x78] sm:$0xf]
        %v657 = vld [vmem:[%s538 + $0x7c] sm:$0xf]
        %v658 = vld [vmem:[%s538 + $0x80] sm:$0xf]
        %v659 = vld [vmem:[%s538 + $0x84] sm:$0xf]
        %v660 = vld [vmem:[%s538 + $0x88] sm:$0xf]
        %v661 = vld [vmem:[%s538 + $0x8c] sm:$0xf]
        %v662 = vld [vmem:[%s538 + $0x90] sm:$0xf]
        %v663 = vld [vmem:[%s538 + $0x94] sm:$0xf]
        %v664 = vld [vmem:[%s538 + $0x98] sm:$0xf]
        %v665 = vld [vmem:[%s538 + $0x9c] sm:$0xf]
        %v666 = vld [vmem:[%s538 + $0xa0] sm:$0xf]
        %v667 = vld [vmem:[%s538 + $0xa4] sm:$0xf]
        %v668 = vld [vmem:[%s538 + $0xa8] sm:$0xf]
        %v669 = vld [vmem:[%s538 + $0xac] sm:$0xf]
        %v670 = vld [vmem:[%s538 + $0xb0] sm:$0xf]
        %v671 = vld [vmem:[%s538 + $0xb4] sm:$0xf]
        %v672 = vld [vmem:[%s538 + $0xb8] sm:$0xf]
        %v673 = vld [vmem:[%s538 + $0xbc] sm:$0xf]
        %v674 = vld [vmem:[%s538 + $0xc0] sm:$0xf]
        %v675 = vld [vmem:[%s538 + $0xc4] sm:$0xf]
        %v676 = vld [vmem:[%s538 + $0xc8] sm:$0xf]
        %v677 = vld [vmem:[%s538 + $0xcc] sm:$0xf]
        %v678 = vld [vmem:[%s538 + $0xd0] sm:$0xf]
        %v679 = vld [vmem:[%s538 + $0xd4] sm:$0xf]
        %v680 = vld [vmem:[%s538 + $0xd8] sm:$0xf]
        %v681 = vld [vmem:[%s538 + $0xdc] sm:$0xf]
        %v682 = vld [vmem:[%s538 + $0xe0] sm:$0xf]
        %v683 = vld [vmem:[%s538 + $0xe4] sm:$0xf]
        %v684 = vld [vmem:[%s538 + $0xe8] sm:$0xf]
        %v685 = vld [vmem:[%s538 + $0xec] sm:$0xf]
        %v686 = vld [vmem:[%s538 + $0xf0] sm:$0xf]
        %v687 = vld [vmem:[%s538 + $0xf4] sm:$0xf]
        %v688 = vld [vmem:[%s538 + $0xf8] sm:$0xf]
        %v689 = vld [vmem:[%s538 + $0xfc] sm:$0xf]
        %v690 = vld [vmem:[%s538 + $0x100] sm:$0xf]
        %v691 = vld [vmem:[%s538 + $0x104] sm:$0xf]
        %v692 = vld [vmem:[%s538 + $0x108] sm:$0xf]
        %v693 = vld [vmem:[%s538 + $0x10c] sm:$0xf]
        %v694 = vld [vmem:[%s538 + $0x110] sm:$0xf]
        %v695 = vld [vmem:[%s538 + $0x114] sm:$0xf]
        %v696 = vld [vmem:[%s538 + $0x118] sm:$0xf]
        %v697 = vld [vmem:[%s538 + $0x11c] sm:$0xf]
        %v698 = vld [vmem:[%s538 + $0x120] sm:$0xf]
        %v699 = vld [vmem:[%s538 + $0x124] sm:$0xf]
        %v700 = vld [vmem:[%s538 + $0x128] sm:$0xf]
        %v701 = vld [vmem:[%s538 + $0x12c] sm:$0xf]
        %v702 = vld [vmem:[%s538 + $0x130] sm:$0xf]
        %v703 = vld [vmem:[%s538 + $0x134] sm:$0xf]
        %v704 = vld [vmem:[%s538 + $0x138] sm:$0xf]
        %v705 = vld [vmem:[%s538 + $0x13c] sm:$0xf]
        %v706 = vld [vmem:[%s576] sm:$0x1]
        %v708 = vperm.slane %v706, 0
        %v758 = vunpack.c.l.b16 %v578
        %v759 = vunpack.c.h.b16 %v578
        %v760 = vunpack.c.l.b16 %v579
        %v761 = vunpack.c.h.b16 %v579
        %v762 = vunpack.c.l.b16 %v580
        %v763 = vunpack.c.l.b16 %v581
        %v764 = vunpack.c.h.b16 %v581
        %v765 = vunpack.c.l.b16 %v582
        %v766 = vunpack.c.h.b16 %v582
        %v767 = vunpack.c.l.b16 %v583
        %v768 = vunpack.c.l.b16 %v584
        %v769 = vunpack.c.h.b16 %v584
        %v770 = vunpack.c.l.b16 %v585
        %v771 = vunpack.c.h.b16 %v585
        %v772 = vunpack.c.l.b16 %v586
        %v773 = vunpack.c.l.b16 %v587
        %v774 = vunpack.c.h.b16 %v587
        %v775 = vunpack.c.l.b16 %v588
        %v776 = vunpack.c.h.b16 %v588
        %v777 = vunpack.c.l.b16 %v589
        %v778 = vunpack.c.l.b16 %v590
        %v779 = vunpack.c.h.b16 %v590
        %v780 = vunpack.c.l.b16 %v591
        %v781 = vunpack.c.h.b16 %v591
        %v782 = vunpack.c.l.b16 %v592
        %v783 = vunpack.c.l.b16 %v593
        %v784 = vunpack.c.h.b16 %v593
        %v785 = vunpack.c.l.b16 %v594
        %v786 = vunpack.c.h.b16 %v594
        %v787 = vunpack.c.l.b16 %v595
        %v788 = vunpack.c.l.b16 %v596
        %v789 = vunpack.c.h.b16 %v596
        %v790 = vunpack.c.l.b16 %v597
        %v791 = vunpack.c.h.b16 %v597
        %v792 = vunpack.c.l.b16 %v598
        %v793 = vunpack.c.l.b16 %v599
        %v794 = vunpack.c.h.b16 %v599
        %v795 = vunpack.c.l.b16 %v600
        %v796 = vunpack.c.h.b16 %v600
        %v797 = vunpack.c.l.b16 %v601
        %v798 = vunpack.c.l.b16 %v602
        %v799 = vunpack.c.h.b16 %v602
        %v800 = vunpack.c.l.b16 %v603
        %v801 = vunpack.c.h.b16 %v603
        %v802 = vunpack.c.l.b16 %v604
        %v803 = vunpack.c.l.b16 %v605
        %v804 = vunpack.c.h.b16 %v605
        %v805 = vunpack.c.l.b16 %v606
        %v806 = vunpack.c.h.b16 %v606
        %v807 = vunpack.c.l.b16 %v607
        %v808 = vunpack.c.l.b16 %v608
        %v809 = vunpack.c.h.b16 %v608
        %v810 = vunpack.c.l.b16 %v609
        %v811 = vunpack.c.h.b16 %v609
        %v812 = vunpack.c.l.b16 %v610
        %v813 = vunpack.c.l.b16 %v611
        %v814 = vunpack.c.h.b16 %v611
        %v815 = vunpack.c.l.b16 %v612
        %v816 = vunpack.c.h.b16 %v612
        %v817 = vunpack.c.l.b16 %v613
        %v818 = vunpack.c.l.b16 %v614
        %v819 = vunpack.c.h.b16 %v614
        %v820 = vunpack.c.l.b16 %v615
        %v821 = vunpack.c.h.b16 %v615
        %v822 = vunpack.c.l.b16 %v616
        %v823 = vunpack.c.l.b16 %v617
        %v824 = vunpack.c.h.b16 %v617
        %v825 = vunpack.c.l.b16 %v618
        %v826 = vunpack.c.h.b16 %v618
        %v827 = vunpack.c.l.b16 %v619
        %v828 = vunpack.c.l.b16 %v620
        %v829 = vunpack.c.h.b16 %v620
        %v830 = vunpack.c.l.b16 %v621
        %v831 = vunpack.c.h.b16 %v621
        %v832 = vunpack.c.l.b16 %v622
        %v833 = vunpack.c.l.b16 %v623
        %v834 = vunpack.c.h.b16 %v623
        %v835 = vunpack.c.l.b16 %v624
        %v836 = vunpack.c.h.b16 %v624
        %v837 = vunpack.c.l.b16 %v625
        %v838 = vpack.c.b16 %v763, %v758
        %v839 = vpack.c.b16 %v764, %v759
        %v840 = vpack.c.b16 %v765, %v760
        %v841 = vpack.c.b16 %v766, %v761
        %v842 = vpack.c.b16 %v767, %v762
        %v843 = vpack.c.b16 %v773, %v768
        %v844 = vpack.c.b16 %v774, %v769
        %v845 = vpack.c.b16 %v775, %v770
        %v846 = vpack.c.b16 %v776, %v771
        %v847 = vpack.c.b16 %v777, %v772
        %v848 = vpack.c.b16 %v783, %v778
        %v849 = vpack.c.b16 %v784, %v779
        %v850 = vpack.c.b16 %v785, %v780
        %v851 = vpack.c.b16 %v786, %v781
        %v852 = vpack.c.b16 %v787, %v782
        %v853 = vpack.c.b16 %v793, %v788
        %v854 = vpack.c.b16 %v794, %v789
        %v855 = vpack.c.b16 %v795, %v790
        %v856 = vpack.c.b16 %v796, %v791
        %v857 = vpack.c.b16 %v797, %v792
        %v858 = vpack.c.b16 %v803, %v798
        %v859 = vpack.c.b16 %v804, %v799
        %v860 = vpack.c.b16 %v805, %v800
        %v861 = vpack.c.b16 %v806, %v801
        %v862 = vpack.c.b16 %v807, %v802
        %v863 = vpack.c.b16 %v813, %v808
        %v864 = vpack.c.b16 %v814, %v809
        %v865 = vpack.c.b16 %v815, %v810
        %v866 = vpack.c.b16 %v816, %v811
        %v867 = vpack.c.b16 %v817, %v812
        %v868 = vpack.c.b16 %v823, %v818
        %v869 = vpack.c.b16 %v824, %v819
        %v870 = vpack.c.b16 %v825, %v820
        %v871 = vpack.c.b16 %v826, %v821
        %v872 = vpack.c.b16 %v827, %v822
        %v873 = vpack.c.b16 %v833, %v828
        %v874 = vpack.c.b16 %v834, %v829
        %v875 = vpack.c.b16 %v835, %v830
        %v876 = vpack.c.b16 %v836, %v831
        %v877 = vpack.c.b16 %v837, %v832
        %v998 = vunpack.c.l.b16 %v626
        %v999 = vunpack.c.l.b16 %v627
        %v1000 = vunpack.c.l.b16 %v628
        %v1001 = vunpack.c.l.b16 %v629
        %v1002 = vunpack.c.l.b16 %v630
        %v1003 = vunpack.c.l.b16 %v631
        %v1004 = vunpack.c.l.b16 %v632
        %v1005 = vunpack.c.l.b16 %v633
        %v1006 = vunpack.c.l.b16 %v634
        %v1007 = vunpack.c.l.b16 %v635
        %v1008 = vunpack.c.l.b16 %v636
        %v1009 = vunpack.c.l.b16 %v637
        %v1010 = vunpack.c.l.b16 %v638
        %v1011 = vunpack.c.l.b16 %v639
        %v1012 = vunpack.c.l.b16 %v640
        %v1013 = vunpack.c.l.b16 %v641
        %v1014 = vunpack.c.l.b16 %v642
        %v1015 = vunpack.c.l.b16 %v643
        %v1016 = vunpack.c.l.b16 %v644
        %v1017 = vunpack.c.l.b16 %v645
        %v1018 = vunpack.c.l.b16 %v646
        %v1019 = vunpack.c.l.b16 %v647
        %v1020 = vunpack.c.l.b16 %v648
        %v1021 = vunpack.c.l.b16 %v649
        %v1022 = vunpack.c.l.b16 %v650
        %v1023 = vunpack.c.l.b16 %v651
        %v1024 = vunpack.c.l.b16 %v652
        %v1025 = vunpack.c.l.b16 %v653
        %v1026 = vunpack.c.l.b16 %v654
        %v1027 = vunpack.c.l.b16 %v655
        %v1028 = vunpack.c.l.b16 %v656
        %v1029 = vunpack.c.l.b16 %v657
        %v1030 = vunpack.c.l.b16 %v658
        %v1031 = vunpack.c.l.b16 %v659
        %v1032 = vunpack.c.l.b16 %v660
        %v1033 = vunpack.c.l.b16 %v661
        %v1034 = vunpack.c.l.b16 %v662
        %v1035 = vunpack.c.l.b16 %v663
        %v1036 = vunpack.c.l.b16 %v664
        %v1037 = vunpack.c.l.b16 %v665
        %v1038 = vunpack.c.l.b16 %v666
        %v1039 = vunpack.c.l.b16 %v667
        %v1040 = vunpack.c.l.b16 %v668
        %v1041 = vunpack.c.l.b16 %v669
        %v1042 = vunpack.c.l.b16 %v670
        %v1043 = vunpack.c.l.b16 %v671
        %v1044 = vunpack.c.l.b16 %v672
        %v1045 = vunpack.c.l.b16 %v673
        %v1046 = vunpack.c.l.b16 %v674
        %v1047 = vunpack.c.l.b16 %v675
        %v1048 = vunpack.c.l.b16 %v676
        %v1049 = vunpack.c.l.b16 %v677
        %v1050 = vunpack.c.l.b16 %v678
        %v1051 = vunpack.c.l.b16 %v679
        %v1052 = vunpack.c.l.b16 %v680
        %v1053 = vunpack.c.l.b16 %v681
        %v1054 = vunpack.c.l.b16 %v682
        %v1055 = vunpack.c.l.b16 %v683
        %v1056 = vunpack.c.l.b16 %v684
        %v1057 = vunpack.c.l.b16 %v685
        %v1058 = vunpack.c.l.b16 %v686
        %v1059 = vunpack.c.l.b16 %v687
        %v1060 = vunpack.c.l.b16 %v688
        %v1061 = vunpack.c.l.b16 %v689
        %v1062 = vunpack.c.l.b16 %v690
        %v1063 = vunpack.c.l.b16 %v691
        %v1064 = vunpack.c.l.b16 %v692
        %v1065 = vunpack.c.l.b16 %v693
        %v1066 = vunpack.c.l.b16 %v694
        %v1067 = vunpack.c.l.b16 %v695
        %v1068 = vunpack.c.l.b16 %v696
        %v1069 = vunpack.c.l.b16 %v697
        %v1070 = vunpack.c.l.b16 %v698
        %v1071 = vunpack.c.l.b16 %v699
        %v1072 = vunpack.c.l.b16 %v700
        %v1073 = vunpack.c.l.b16 %v701
        %v1074 = vunpack.c.l.b16 %v702
        %v1075 = vunpack.c.l.b16 %v703
        %v1076 = vunpack.c.l.b16 %v704
        %v1077 = vunpack.c.l.b16 %v705
        %v1078 = vpack.c.b16 %v999, %v998
        %v1079 = vpack.c.b16 %v1001, %v1000
        %v1080 = vpack.c.b16 %v1003, %v1002
        %v1081 = vpack.c.b16 %v1005, %v1004
        %v1082 = vpack.c.b16 %v1007, %v1006
        %v1083 = vpack.c.b16 %v1009, %v1008
        %v1084 = vpack.c.b16 %v1011, %v1010
        %v1085 = vpack.c.b16 %v1013, %v1012
        %v1086 = vpack.c.b16 %v1015, %v1014
        %v1087 = vpack.c.b16 %v1017, %v1016
        %v1088 = vpack.c.b16 %v1019, %v1018
        %v1089 = vpack.c.b16 %v1021, %v1020
        %v1090 = vpack.c.b16 %v1023, %v1022
        %v1091 = vpack.c.b16 %v1025, %v1024
        %v1092 = vpack.c.b16 %v1027, %v1026
        %v1093 = vpack.c.b16 %v1029, %v1028
        %v1094 = vpack.c.b16 %v1031, %v1030
        %v1095 = vpack.c.b16 %v1033, %v1032
        %v1096 = vpack.c.b16 %v1035, %v1034
        %v1097 = vpack.c.b16 %v1037, %v1036
        %v1098 = vpack.c.b16 %v1039, %v1038
        %v1099 = vpack.c.b16 %v1041, %v1040
        %v1100 = vpack.c.b16 %v1043, %v1042
        %v1101 = vpack.c.b16 %v1045, %v1044
        %v1102 = vpack.c.b16 %v1047, %v1046
        %v1103 = vpack.c.b16 %v1049, %v1048
        %v1104 = vpack.c.b16 %v1051, %v1050
        %v1105 = vpack.c.b16 %v1053, %v1052
        %v1106 = vpack.c.b16 %v1055, %v1054
        %v1107 = vpack.c.b16 %v1057, %v1056
        %v1108 = vpack.c.b16 %v1059, %v1058
        %v1109 = vpack.c.b16 %v1061, %v1060
        %v1110 = vpack.c.b16 %v1063, %v1062
        %v1111 = vpack.c.b16 %v1065, %v1064
        %v1112 = vpack.c.b16 %v1067, %v1066
        %v1113 = vpack.c.b16 %v1069, %v1068
        %v1114 = vpack.c.b16 %v1071, %v1070
        %v1115 = vpack.c.b16 %v1073, %v1072
        %v1116 = vpack.c.b16 %v1075, %v1074
        %v1117 = vpack.c.b16 %v1077, %v1076
        %1158 = vmatpush.bf16.msra.mxu0 %v1085
        %1159 = vmatpush.bf16.msra.mxu0 %v1084
        %1160 = vmatpush.bf16.msra.mxu0 %v1083
        %1161 = vmatpush.bf16.msra.mxu0 %v1082
        %1162 = vmatpush.bf16.msra.mxu0 %v1081
        %1163 = vmatpush.bf16.msra.mxu0 %v1080
        %1164 = vmatpush.bf16.msra.mxu0 %v1079
        %1165 = vmatpush.bf16.msra.mxu0 %v1078
        %1166 = vmatmul.bf16.gmra.mxu0 %v838
        %v1167 = vpop.f32.mrf.mxu0
        %v1168 = vadd.f32 %v708, %v1167
        %v1169 = vpop.f32.mrf.mxu0
        %v1170 = vadd.f32 %v708, %v1169
        %1171 = vmatmul.bf16.gmra.mxu0 %v843
        %v1172 = vpop.f32.mrf.mxu0
        %v1173 = vadd.f32 %v708, %v1172
        %v1174 = vpop.f32.mrf.mxu0
        %v1175 = vadd.f32 %v708, %v1174
        %1176 = vmatmul.bf16.gmra.mxu0 %v848
        %v1177 = vpop.f32.mrf.mxu0
        %v1178 = vadd.f32 %v708, %v1177
        %v1179 = vpop.f32.mrf.mxu0
        %v1180 = vadd.f32 %v708, %v1179
        %1181 = vmatmul.bf16.gmra.mxu0 %v853
        %v1182 = vpop.f32.mrf.mxu0
        %v1183 = vadd.f32 %v708, %v1182
        %v1184 = vpop.f32.mrf.mxu0
        %v1185 = vadd.f32 %v708, %v1184
        %1186 = vmatmul.bf16.gmra.mxu0 %v858
        %v1187 = vpop.f32.mrf.mxu0
        %v1188 = vadd.f32 %v708, %v1187
        %v1189 = vpop.f32.mrf.mxu0
        %v1190 = vadd.f32 %v708, %v1189
        %1191 = vmatmul.bf16.gmra.mxu0 %v863
        %v1192 = vpop.f32.mrf.mxu0
        %v1193 = vadd.f32 %v708, %v1192
        %v1194 = vpop.f32.mrf.mxu0
        %v1195 = vadd.f32 %v708, %v1194
        %1196 = vmatmul.bf16.gmra.mxu0 %v868
        %v1197 = vpop.f32.mrf.mxu0
        %v1198 = vadd.f32 %v708, %v1197
        %v1199 = vpop.f32.mrf.mxu0
        %v1200 = vadd.f32 %v708, %v1199
        %1201 = vmatmul.bf16.gmra.mxu0 %v873
        %v1202 = vpop.f32.mrf.mxu0
        %v1203 = vadd.f32 %v708, %v1202
        %v1204 = vpop.f32.mrf.mxu0
        %v1205 = vadd.f32 %v708, %v1204
        %1206 = vdwg.mxu0
        %1207 = vmatpush.bf16.msra.mxu0 %v1093
        %1208 = vmatpush.bf16.msra.mxu0 %v1092
        %1209 = vmatpush.bf16.msra.mxu0 %v1091
        %1210 = vmatpush.bf16.msra.mxu0 %v1090
        %1211 = vmatpush.bf16.msra.mxu0 %v1089
        %1212 = vmatpush.bf16.msra.mxu0 %v1088
        %1213 = vmatpush.bf16.msra.mxu0 %v1087
        %1214 = vmatpush.bf16.msra.mxu0 %v1086
        %1215 = vmatmul.bf16.gmra.mxu0 %v839
        %v1216 = vpop.f32.mrf.mxu0
        %v1217 = vadd.f32 %v1168, %v1216
        %v1218 = vpop.f32.mrf.mxu0
        %v1219 = vadd.f32 %v1170, %v1218
        %1220 = vmatmul.bf16.gmra.mxu0 %v844
        %v1221 = vpop.f32.mrf.mxu0
        %v1222 = vadd.f32 %v1173, %v1221
        %v1223 = vpop.f32.mrf.mxu0
        %v1224 = vadd.f32 %v1175, %v1223
        %1225 = vmatmul.bf16.gmra.mxu0 %v849
        %v1226 = vpop.f32.mrf.mxu0
        %v1227 = vadd.f32 %v1178, %v1226
        %v1228 = vpop.f32.mrf.mxu0
        %v1229 = vadd.f32 %v1180, %v1228
        %1230 = vmatmul.bf16.gmra.mxu0 %v854
        %v1231 = vpop.f32.mrf.mxu0
        %v1232 = vadd.f32 %v1183, %v1231
        %v1233 = vpop.f32.mrf.mxu0
        %v1234 = vadd.f32 %v1185, %v1233
        %1235 = vmatmul.bf16.gmra.mxu0 %v859
        %v1236 = vpop.f32.mrf.mxu0
        %v1237 = vadd.f32 %v1188, %v1236
        %v1238 = vpop.f32.mrf.mxu0
        %v1239 = vadd.f32 %v1190, %v1238
        %1240 = vmatmul.bf16.gmra.mxu0 %v864
        %v1241 = vpop.f32.mrf.mxu0
        %v1242 = vadd.f32 %v1193, %v1241
        %v1243 = vpop.f32.mrf.mxu0
        %v1244 = vadd.f32 %v1195, %v1243
        %1245 = vmatmul.bf16.gmra.mxu0 %v869
        %v1246 = vpop.f32.mrf.mxu0
        %v1247 = vadd.f32 %v1198, %v1246
        %v1248 = vpop.f32.mrf.mxu0
        %v1249 = vadd.f32 %v1200, %v1248
        %1250 = vmatmul.bf16.gmra.mxu0 %v874
        %v1251 = vpop.f32.mrf.mxu0
        %v1252 = vadd.f32 %v1203, %v1251
        %v1253 = vpop.f32.mrf.mxu0
        %v1254 = vadd.f32 %v1205, %v1253
        %1255 = vdwg.mxu0
        %1256 = vmatpush.bf16.msra.mxu0 %v1101
        %1257 = vmatpush.bf16.msra.mxu0 %v1100
        %1258 = vmatpush.bf16.msra.mxu0 %v1099
        %1259 = vmatpush.bf16.msra.mxu0 %v1098
        %1260 = vmatpush.bf16.msra.mxu0 %v1097
        %1261 = vmatpush.bf16.msra.mxu0 %v1096
        %1262 = vmatpush.bf16.msra.mxu0 %v1095
        %1263 = vmatpush.bf16.msra.mxu0 %v1094
        %1264 = vmatmul.bf16.gmra.mxu0 %v840
        %v1265 = vpop.f32.mrf.mxu0
        %v1266 = vadd.f32 %v1217, %v1265
        %v1267 = vpop.f32.mrf.mxu0
        %v1268 = vadd.f32 %v1219, %v1267
        %1269 = vmatmul.bf16.gmra.mxu0 %v845
        %v1270 = vpop.f32.mrf.mxu0
        %v1271 = vadd.f32 %v1222, %v1270
        %v1272 = vpop.f32.mrf.mxu0
        %v1273 = vadd.f32 %v1224, %v1272
        %1274 = vmatmul.bf16.gmra.mxu0 %v850
        %v1275 = vpop.f32.mrf.mxu0
        %v1276 = vadd.f32 %v1227, %v1275
        %v1277 = vpop.f32.mrf.mxu0
        %v1278 = vadd.f32 %v1229, %v1277
        %1279 = vmatmul.bf16.gmra.mxu0 %v855
        %v1280 = vpop.f32.mrf.mxu0
        %v1281 = vadd.f32 %v1232, %v1280
        %v1282 = vpop.f32.mrf.mxu0
        %v1283 = vadd.f32 %v1234, %v1282
        %1284 = vmatmul.bf16.gmra.mxu0 %v860
        %v1285 = vpop.f32.mrf.mxu0
        %v1286 = vadd.f32 %v1237, %v1285
        %v1287 = vpop.f32.mrf.mxu0
        %v1288 = vadd.f32 %v1239, %v1287
        %1289 = vmatmul.bf16.gmra.mxu0 %v865
        %v1290 = vpop.f32.mrf.mxu0
        %v1291 = vadd.f32 %v1242, %v1290
        %v1292 = vpop.f32.mrf.mxu0
        %v1293 = vadd.f32 %v1244, %v1292
        %1294 = vmatmul.bf16.gmra.mxu0 %v870
        %v1295 = vpop.f32.mrf.mxu0
        %v1296 = vadd.f32 %v1247, %v1295
        %v1297 = vpop.f32.mrf.mxu0
        %v1298 = vadd.f32 %v1249, %v1297
        %1299 = vmatmul.bf16.gmra.mxu0 %v875
        %v1300 = vpop.f32.mrf.mxu0
        %v1301 = vadd.f32 %v1252, %v1300
        %v1302 = vpop.f32.mrf.mxu0
        %v1303 = vadd.f32 %v1254, %v1302
        %1304 = vdwg.mxu0
        %1305 = vmatpush.bf16.msra.mxu0 %v1109
        %1306 = vmatpush.bf16.msra.mxu0 %v1108
        %1307 = vmatpush.bf16.msra.mxu0 %v1107
        %1308 = vmatpush.bf16.msra.mxu0 %v1106
        %1309 = vmatpush.bf16.msra.mxu0 %v1105
        %1310 = vmatpush.bf16.msra.mxu0 %v1104
        %1311 = vmatpush.bf16.msra.mxu0 %v1103
        %1312 = vmatpush.bf16.msra.mxu0 %v1102
        %1313 = vmatmul.bf16.gmra.mxu0 %v841
        %v1314 = vpop.f32.mrf.mxu0
        %v1315 = vadd.f32 %v1266, %v1314
        %v1316 = vpop.f32.mrf.mxu0
        %v1317 = vadd.f32 %v1268, %v1316
        %1318 = vmatmul.bf16.gmra.mxu0 %v846
        %v1319 = vpop.f32.mrf.mxu0
        %v1320 = vadd.f32 %v1271, %v1319
        %v1321 = vpop.f32.mrf.mxu0
        %v1322 = vadd.f32 %v1273, %v1321
        %1323 = vmatmul.bf16.gmra.mxu0 %v851
        %v1324 = vpop.f32.mrf.mxu0
        %v1325 = vadd.f32 %v1276, %v1324
        %v1326 = vpop.f32.mrf.mxu0
        %v1327 = vadd.f32 %v1278, %v1326
        %1328 = vmatmul.bf16.gmra.mxu0 %v856
        %v1329 = vpop.f32.mrf.mxu0
        %v1330 = vadd.f32 %v1281, %v1329
        %v1331 = vpop.f32.mrf.mxu0
        %v1332 = vadd.f32 %v1283, %v1331
        %1333 = vmatmul.bf16.gmra.mxu0 %v861
        %v1334 = vpop.f32.mrf.mxu0
        %v1335 = vadd.f32 %v1286, %v1334
        %v1336 = vpop.f32.mrf.mxu0
        %v1337 = vadd.f32 %v1288, %v1336
        %1338 = vmatmul.bf16.gmra.mxu0 %v866
        %v1339 = vpop.f32.mrf.mxu0
        %v1340 = vadd.f32 %v1291, %v1339
        %v1341 = vpop.f32.mrf.mxu0
        %v1342 = vadd.f32 %v1293, %v1341
        %1343 = vmatmul.bf16.gmra.mxu0 %v871
        %v1344 = vpop.f32.mrf.mxu0
        %v1345 = vadd.f32 %v1296, %v1344
        %v1346 = vpop.f32.mrf.mxu0
        %v1347 = vadd.f32 %v1298, %v1346
        %1348 = vmatmul.bf16.gmra.mxu0 %v876
        %v1349 = vpop.f32.mrf.mxu0
        %v1350 = vadd.f32 %v1301, %v1349
        %v1351 = vpop.f32.mrf.mxu0
        %v1352 = vadd.f32 %v1303, %v1351
        %1353 = vdwg.mxu0
        %1354 = vmatpush.bf16.msra.mxu0 %v1117
        %1355 = vmatpush.bf16.msra.mxu0 %v1116
        %1356 = vmatpush.bf16.msra.mxu0 %v1115
        %1357 = vmatpush.bf16.msra.mxu0 %v1114
        %1358 = vmatpush.bf16.msra.mxu0 %v1113
        %1359 = vmatpush.bf16.msra.mxu0 %v1112
        %1360 = vmatpush.bf16.msra.mxu0 %v1111
        %1361 = vmatpush.bf16.msra.mxu0 %v1110
        %1362 = vmatmul.bf16.gmra.mxu0 %v842
        %v1363 = vpop.f32.mrf.mxu0
        %v1364 = vadd.f32 %v1315, %v1363
        %v1365 = vpop.f32.mrf.mxu0
        %v1366 = vadd.f32 %v1317, %v1365
        %1367 = vmatmul.bf16.gmra.mxu0 %v847
        %v1368 = vpop.f32.mrf.mxu0
        %v1369 = vadd.f32 %v1320, %v1368
        %v1370 = vpop.f32.mrf.mxu0
        %v1371 = vadd.f32 %v1322, %v1370
        %1372 = vmatmul.bf16.gmra.mxu0 %v852
        %v1373 = vpop.f32.mrf.mxu0
        %v1374 = vadd.f32 %v1325, %v1373
        %v1375 = vpop.f32.mrf.mxu0
        %v1376 = vadd.f32 %v1327, %v1375
        %1377 = vmatmul.bf16.gmra.mxu0 %v857
        %v1378 = vpop.f32.mrf.mxu0
        %v1379 = vadd.f32 %v1330, %v1378
        %v1380 = vpop.f32.mrf.mxu0
        %v1381 = vadd.f32 %v1332, %v1380
        %1382 = vmatmul.bf16.gmra.mxu0 %v862
        %v1383 = vpop.f32.mrf.mxu0
        %v1384 = vadd.f32 %v1335, %v1383
        %v1385 = vpop.f32.mrf.mxu0
        %v1386 = vadd.f32 %v1337, %v1385
        %1387 = vmatmul.bf16.gmra.mxu0 %v867
        %v1388 = vpop.f32.mrf.mxu0
        %v1389 = vadd.f32 %v1340, %v1388
        %v1390 = vpop.f32.mrf.mxu0
        %v1391 = vadd.f32 %v1342, %v1390
        %1392 = vmatmul.bf16.gmra.mxu0 %v872
        %v1393 = vpop.f32.mrf.mxu0
        %v1394 = vadd.f32 %v1345, %v1393
        %v1395 = vpop.f32.mrf.mxu0
        %v1396 = vadd.f32 %v1347, %v1395
        %1397 = vmatmul.bf16.gmra.mxu0 %v877
        %v1398 = vpop.f32.mrf.mxu0
        %v1399 = vadd.f32 %v1350, %v1398
        %v1400 = vpop.f32.mrf.mxu0
        %v1401 = vadd.f32 %v1352, %v1400
        %1402 = vdwg.mxu0
        %v1403 = vmax.f32 %v1364, 0.0
        %v1404 = vmax.f32 %v1366, 0.0
        %v1405 = vmax.f32 %v1369, 0.0
        %v1406 = vmax.f32 %v1371, 0.0
        %v1407 = vmax.f32 %v1374, 0.0
        %v1408 = vmax.f32 %v1376, 0.0
        %v1409 = vmax.f32 %v1379, 0.0
        %v1410 = vmax.f32 %v1381, 0.0
        %v1411 = vmax.f32 %v1384, 0.0
        %v1412 = vmax.f32 %v1386, 0.0
        %v1413 = vmax.f32 %v1389, 0.0
        %v1414 = vmax.f32 %v1391, 0.0
        %v1415 = vmax.f32 %v1394, 0.0
        %v1416 = vmax.f32 %v1396, 0.0
        %v1417 = vmax.f32 %v1399, 0.0
        %v1418 = vmax.f32 %v1401, 0.0
        %v1419 = vpack.c.bf16 %v1403, %v1403
        %v1420 = vpack.c.bf16 %v1404, %v1404
        %v1421 = vpack.c.bf16 %v1405, %v1405
        %v1422 = vpack.c.bf16 %v1406, %v1406
        %v1423 = vpack.c.bf16 %v1407, %v1407
        %v1424 = vpack.c.bf16 %v1408, %v1408
        %v1425 = vpack.c.bf16 %v1409, %v1409
        %v1426 = vpack.c.bf16 %v1410, %v1410
        %v1427 = vpack.c.bf16 %v1411, %v1411
        %v1428 = vpack.c.bf16 %v1412, %v1412
        %v1429 = vpack.c.bf16 %v1413, %v1413
        %v1430 = vpack.c.bf16 %v1414, %v1414
        %v1431 = vpack.c.bf16 %v1415, %v1415
        %v1432 = vpack.c.bf16 %v1416, %v1416
        %v1433 = vpack.c.bf16 %v1417, %v1417
        %v1434 = vpack.c.bf16 %v1418, %v1418
        %1435 = vst [vmem:[%s566] sm:$0xf] %v1419
        %1436 = vst [vmem:[%s566 + $0x4] sm:$0xf] %v1420
        %1437 = vst [vmem:[%s566 + $0x8] sm:$0xf] %v1421
        %1438 = vst [vmem:[%s566 + $0xc] sm:$0xf] %v1422
        %1439 = vst [vmem:[%s566 + $0x10] sm:$0xf] %v1423
        %1440 = vst [vmem:[%s566 + $0x14] sm:$0xf] %v1424
        %1441 = vst [vmem:[%s566 + $0x18] sm:$0xf] %v1425
        %1442 = vst [vmem:[%s566 + $0x1c] sm:$0xf] %v1426
        %1443 = vst [vmem:[%s566 + $0x20] sm:$0xf] %v1427
        %1444 = vst [vmem:[%s566 + $0x24] sm:$0xf] %v1428
        %1445 = vst [vmem:[%s566 + $0x28] sm:$0xf] %v1429
        %1446 = vst [vmem:[%s566 + $0x2c] sm:$0xf] %v1430
        %1447 = vst [vmem:[%s566 + $0x30] sm:$0xf] %v1431
        %1448 = vst [vmem:[%s566 + $0x34] sm:$0xf] %v1432
        %1449 = vst [vmem:[%s566 + $0x38] sm:$0xf] %v1433
        %1450 = vst [vmem:[%s566 + $0x3c] sm:$0xf] %v1434
        %s1451 = sand.u32 %s114, 1
        %s1452 = sand.u32 %s114, 1
        %s1453 = smul.addr %s1452, 64
        %s1454 = scalar_lea.vmem [#allocation3], %s1453
        // Predicated region
        $region74: #{slowfast_forward.7} parent=68 // pred_check
          %p1455 = pneg %p124
        $region75: #{slowfast_forward.7} parent=68 // pred_check_branch
          %1457 = sbr.rel (%p1455) target = $region77
        $region76: #{slowfast_forward.7} parent=68 // pred_region
          %s1458 = smul.u32 16, %s18
          %s1459 = smul.addr %s1458, 2
          %s1460 = sadd.s32 %s19, %s1459
          %s1461 = smul.addr %s1460, 4
          %s1462 = scalar_lea.vmem %s3, %s1461
          // Predicated region
          $region78: #{slowfast_forward.7} parent=76 // pred_check
            _
          $region79: #{slowfast_forward.7} parent=76 // pred_check_branch
            %1464 = sbr.rel (0) target = $region81
          $region80: #{slowfast_forward.7} parent=76 // pred_region
            // Predicated region
            $region82: #{slowfast_forward.7} parent=80 // pred_check
              _
            $region83: #{slowfast_forward.7} parent=80 // pred_check_branch
              %1466 = sbr.rel target = $region85
            $region84: #{slowfast_forward.7} parent=80 // pred_region
              // Predicated region
              $region97: #{slowfast_forward.7} parent=84 // pred_check
                _
              $region98: #{slowfast_forward.7} parent=84 // pred_check_branch
                %1512 = sbr.rel (0) target = $region100
              $region99: #{slowfast_forward.7} parent=84 // pred_region
                loop: start=0, step=1, limit=1
                $region101: #{slowfast_forward.7} parent=99 // loop_pre_header
                  _
                $region102: #{slowfast_forward.7} parent=99 // loop_header
                  %s1514 = sphi 0, %s1518
                  %p1515 = scmp.ge.s32.totalorder %s1514, 1
                  %s1519 = sphi %s1454, %s1454
                  %s1520 = sphi %s1462, %s1462
                $region103: #{slowfast_forward.7} parent=99 // loop_header_branch
                  %1517 = sbr.rel (%p1515) target = $region107
                $region104: #{slowfast_forward.7} parent=99 // loop_body
                  _
                $region105: #{slowfast_forward.7} parent=99 // loop_footer
                  %s1518 = sadd.s32 1, %s1514
                $region106: #{slowfast_forward.7} parent=99 // loop_footer_branch
                  %1513 = sbr.rel target = $region102
                $region107: #{slowfast_forward.7} parent=99 // loop_exit
                  _
                %s1522 = ssub.s32 16, 1
                loop: start=0, step=1, limit=1
                $region108: #{slowfast_forward.7} parent=99 // loop_pre_header
                  _
                $region109: #{slowfast_forward.7} parent=99 // loop_header
                  %s1524 = sphi 0, %s1528
                  %p1525 = scmp.ge.s32.totalorder %s1524, 1
                  %s1529 = sphi %s1454, %s1454
                  %s1530 = sphi %s1462, %s1462
                $region110: #{slowfast_forward.7} parent=99 // loop_header_branch
                  %1527 = sbr.rel (%p1525) target = $region114
                $region111: #{slowfast_forward.7} parent=99 // loop_body
                  %v1531 = vld [vmem:[%s1529] sm:%s1522]
                  %1532 = vst [vmem:[%s1530] sm:%s1522] %v1531
                  %v1533 = vld [vmem:[%s1529 + $0x4] sm:%s1522]
                  %1534 = vst [vmem:[%s1530 + $0x8] sm:%s1522] %v1533
                  %v1535 = vld [vmem:[%s1529 + $0x8] sm:%s1522]
                  %1536 = vst [vmem:[%s1530 + $0x10] sm:%s1522] %v1535
                  %v1537 = vld [vmem:[%s1529 + $0xc] sm:%s1522]
                  %1538 = vst [vmem:[%s1530 + $0x18] sm:%s1522] %v1537
                  %v1539 = vld [vmem:[%s1529 + $0x10] sm:%s1522]
                  %1540 = vst [vmem:[%s1530 + $0x20] sm:%s1522] %v1539
                  %v1541 = vld [vmem:[%s1529 + $0x14] sm:%s1522]
                  %1542 = vst [vmem:[%s1530 + $0x28] sm:%s1522] %v1541
                  %v1543 = vld [vmem:[%s1529 + $0x18] sm:%s1522]
                  %1544 = vst [vmem:[%s1530 + $0x30] sm:%s1522] %v1543
                  %v1545 = vld [vmem:[%s1529 + $0x1c] sm:%s1522]
                  %1546 = vst [vmem:[%s1530 + $0x38] sm:%s1522] %v1545
                  %v1547 = vld [vmem:[%s1529 + $0x20] sm:%s1522]
                  %1548 = vst [vmem:[%s1530 + $0x40] sm:%s1522] %v1547
                  %v1549 = vld [vmem:[%s1529 + $0x24] sm:%s1522]
                  %1550 = vst [vmem:[%s1530 + $0x48] sm:%s1522] %v1549
                  %v1551 = vld [vmem:[%s1529 + $0x28] sm:%s1522]
                  %1552 = vst [vmem:[%s1530 + $0x50] sm:%s1522] %v1551
                  %v1553 = vld [vmem:[%s1529 + $0x2c] sm:%s1522]
                  %1554 = vst [vmem:[%s1530 + $0x58] sm:%s1522] %v1553
                  %v1555 = vld [vmem:[%s1529 + $0x30] sm:%s1522]
                  %1556 = vst [vmem:[%s1530 + $0x60] sm:%s1522] %v1555
                  %v1557 = vld [vmem:[%s1529 + $0x34] sm:%s1522]
                  %1558 = vst [vmem:[%s1530 + $0x68] sm:%s1522] %v1557
                  %v1559 = vld [vmem:[%s1529 + $0x38] sm:%s1522]
                  %1560 = vst [vmem:[%s1530 + $0x70] sm:%s1522] %v1559
                  %v1561 = vld [vmem:[%s1529 + $0x3c] sm:%s1522]
                  %1562 = vst [vmem:[%s1530 + $0x78] sm:%s1522] %v1561
                $region112: #{slowfast_forward.7} parent=99 // loop_footer
                  %s1528 = sadd.s32 1, %s1524
                $region113: #{slowfast_forward.7} parent=99 // loop_footer_branch
                  %1523 = sbr.rel target = $region109
                $region114: #{slowfast_forward.7} parent=99 // loop_exit
                  _
              $region100: #{slowfast_forward.7} parent=84 // pred_fallthru
                _
            $region85: #{slowfast_forward.7} parent=80 // pred_fallthru
              _
            // Predicated region
            $region86: #{slowfast_forward.7} parent=80 // pred_check
              _
            $region87: #{slowfast_forward.7} parent=80 // pred_check_branch
              %1468 = sbr.rel (0) target = $region89
            $region88: #{slowfast_forward.7} parent=80 // pred_region
              %s1470 = ssub.s32 16, 1
              loop: start=0, step=1, limit=1
              $region90: #{slowfast_forward.7} parent=88 // loop_pre_header
                _
              $region91: #{slowfast_forward.7} parent=88 // loop_header
                %s1472 = sphi 0, %s1476
                %p1473 = scmp.ge.s32.totalorder %s1472, 1
                %s1477 = sphi %s1454, %s1454
                %s1478 = sphi %s1462, %s1462
              $region92: #{slowfast_forward.7} parent=88 // loop_header_branch
                %1475 = sbr.rel (%p1473) target = $region96
              $region93: #{slowfast_forward.7} parent=88 // loop_body
                %v1479 = vld [vmem:[%s1477] sm:%s1470]
                %1480 = vst [vmem:[%s1478] sm:%s1470] %v1479
                %v1481 = vld [vmem:[%s1477 + $0x4] sm:%s1470]
                %1482 = vst [vmem:[%s1478 + $0x8] sm:%s1470] %v1481
                %v1483 = vld [vmem:[%s1477 + $0x8] sm:%s1470]
                %1484 = vst [vmem:[%s1478 + $0x10] sm:%s1470] %v1483
                %v1485 = vld [vmem:[%s1477 + $0xc] sm:%s1470]
                %1486 = vst [vmem:[%s1478 + $0x18] sm:%s1470] %v1485
                %v1487 = vld [vmem:[%s1477 + $0x10] sm:%s1470]
                %1488 = vst [vmem:[%s1478 + $0x20] sm:%s1470] %v1487
                %v1489 = vld [vmem:[%s1477 + $0x14] sm:%s1470]
                %1490 = vst [vmem:[%s1478 + $0x28] sm:%s1470] %v1489
                %v1491 = vld [vmem:[%s1477 + $0x18] sm:%s1470]
                %1492 = vst [vmem:[%s1478 + $0x30] sm:%s1470] %v1491
                %v1493 = vld [vmem:[%s1477 + $0x1c] sm:%s1470]
                %1494 = vst [vmem:[%s1478 + $0x38] sm:%s1470] %v1493
                %v1495 = vld [vmem:[%s1477 + $0x20] sm:%s1470]
                %1496 = vst [vmem:[%s1478 + $0x40] sm:%s1470] %v1495
                %v1497 = vld [vmem:[%s1477 + $0x24] sm:%s1470]
                %1498 = vst [vmem:[%s1478 + $0x48] sm:%s1470] %v1497
                %v1499 = vld [vmem:[%s1477 + $0x28] sm:%s1470]
                %1500 = vst [vmem:[%s1478 + $0x50] sm:%s1470] %v1499
                %v1501 = vld [vmem:[%s1477 + $0x2c] sm:%s1470]
                %1502 = vst [vmem:[%s1478 + $0x58] sm:%s1470] %v1501
                %v1503 = vld [vmem:[%s1477 + $0x30] sm:%s1470]
                %1504 = vst [vmem:[%s1478 + $0x60] sm:%s1470] %v1503
                %v1505 = vld [vmem:[%s1477 + $0x34] sm:%s1470]
                %1506 = vst [vmem:[%s1478 + $0x68] sm:%s1470] %v1505
                %v1507 = vld [vmem:[%s1477 + $0x38] sm:%s1470]
                %1508 = vst [vmem:[%s1478 + $0x70] sm:%s1470] %v1507
                %v1509 = vld [vmem:[%s1477 + $0x3c] sm:%s1470]
                %1510 = vst [vmem:[%s1478 + $0x78] sm:%s1470] %v1509
              $region94: #{slowfast_forward.7} parent=88 // loop_footer
                %s1476 = sadd.s32 1, %s1472
              $region95: #{slowfast_forward.7} parent=88 // loop_footer_branch
                %1471 = sbr.rel target = $region91
              $region96: #{slowfast_forward.7} parent=88 // loop_exit
                _
            $region89: #{slowfast_forward.7} parent=80 // pred_fallthru
              _
          $region81: #{slowfast_forward.7} parent=76 // pred_fallthru
            _
          %1563 = vnop
        $region77: #{slowfast_forward.7} parent=68 // pred_fallthru
          _
      $region69: #{slowfast_forward.7} parent=5 // pred_fallthru
        _
      %p1564 = scmp.le.s32.totalorder 2, %s9
      // Predicated region
      $region115: #{slowfast_forward.7} parent=5 // pred_check
        %p1565 = pneg %p1564
      $region116: #{slowfast_forward.7} parent=5 // pred_check_branch
        %1567 = sbr.rel (%p1565) target = $region118
      $region117: #{slowfast_forward.7} parent=5 // pred_region
        %s1568 = ssub.s32 %s9, 2
        // Predicated region
        $region119: #{slowfast_forward.7} parent=117 // pred_check
          %p1569 = pneg %p130
        $region120: #{slowfast_forward.7} parent=117 // pred_check_branch
          %1571 = sbr.rel (%p1569) target = $region122
        $region121: #{slowfast_forward.7} parent=117 // pred_region
          %s1572 = sand.u32 %s115, 1
          %s1573 = sand.u32 %s115, 1
          %s1574 = smul.addr %s1573, 64
          %s1575 = scalar_lea.vmem [#allocation3], %s1574
        $region122: #{slowfast_forward.7} parent=117 // pred_fallthru
          _
      $region118: #{slowfast_forward.7} parent=5 // pred_fallthru
        _
    $region6: #{slowfast_forward.7} parent=1 // loop_footer
      %s13 = sadd.s32 1, %s9
    $region7: #{slowfast_forward.7} parent=1 // loop_footer_branch
      %8 = sbr.rel target = $region3
    $region8: #{slowfast_forward.7} parent=1 // loop_exit
      _

// kernel: slowfast_forward.11
$region0: #{slowfast_forward.11}
  #allocation0 [shape = 'u32[]', space=smem, size = 0x4, offset = 0x4, fixed_abs, tag = 'smem constant byte address 0x4 - core index']
  #allocation1 [shape = 'u32[72,128]{1,0:T(1,128)}', space=vmem, size = 0x9000, scoped, tag = 'internal scratch']
  %s0 = inlined_call_operand.vmem [shape: bf16[2,64,256], index: 0, kind: input, shape index: {}]
  %s1 = inlined_call_operand.vmem [shape: bf16[2,64,128], index: 1, kind: input, shape index: {}]
  %s2 = inlined_call_operand.vmem [shape: bf16[256,512], index: 2, kind: input, shape index: {}]
  %s3 = inlined_call_operand.vmem [shape: bf16[128,512], index: 3, kind: input, shape index: {}]
  %s4 = inlined_call_operand.vmem [shape: f32[1,512], index: 4, kind: input, shape index: {}]
  %s5 = inlined_call_operand.vmem [shape: f32[512,128], index: 5, kind: input, shape index: {}]
  %s6 = inlined_call_operand.vmem [shape: f32[1,128], index: 6, kind: input, shape index: {}]
  %s7 = inlined_call_operand.hbm [shape: f32[2,1,128], index: 7, kind: output, shape index: {}]
  %s8 = sld [smem:[#allocation0]]
  $region61: #{slowfast_forward.11} parent=0
    _
  %s10 = ssub.s32 1, %s8
  %s11 = scalar_select 0, %s10, %s8
  $region1: #{slowfast_forward.11} parent=0
    #allocation2 [shape = 'u8[1024]{0}', space=vmem, size = 0x400, scoped, tag = 'output window, operand 0']
    #allocation3 [shape = 's32[2]{0}', space=sflag, size = 0x8, scoped, tag = 'scoped memory for slowfast_forward.11']
    %12 = vsyncpa [#allocation3], 0
    %s13 = scalar_lea.sflag [#allocation3], 1
    %14 = vsyncpa %s13, 0
    loop: start=0, step=1, limit=4
    $region2: #{slowfast_forward.11} parent=1 // loop_pre_header
      _
    $region3: #{slowfast_forward.11} parent=1 // loop_header
      %s16 = sphi 0, %s20
      %p17 = scmp.ge.s32.totalorder %s16, 4
      %s26 = sphi 0, %s28
      %s29 = sphi 0, %s26
      %s30 = sphi 0, %s29
      %s46 = sphi 0, %s30
      %s52 = sphi 0, %s54
      %s55 = sphi 0, %s52
      %s56 = sphi 0, %s55
      %s72 = sphi 0, %s56
      %s76 = sphi 0, %s76
      %s78 = sphi 0, %s76
      %s79 = sphi 0, %s78
      %s93 = sphi 0, %s79
      %s97 = sphi 0, %s97
      %s99 = sphi 0, %s97
      %s100 = sphi 0, %s99
      %s114 = sphi 0, %s100
      %s118 = sphi 0, %s118
      %s120 = sphi 0, %s118
      %s121 = sphi 0, %s120
      %s135 = sphi 0, %s121
      %s139 = sphi 0, %s139
      %s141 = sphi 0, %s139
      %s142 = sphi 0, %s141
      %s156 = sphi 0, %s142
      %s160 = sphi 0, %s160
      %s162 = sphi 0, %s160
      %s163 = sphi 0, %s162
      %s177 = sphi 0, %s163
      %s183 = sphi 0, %s185
      %s186 = sphi 0, %s183
      %s187 = sphi 0, %s186
      %s203 = sphi 0, %s187
    $region4: #{slowfast_forward.11} parent=1 // loop_header_branch
      %19 = sbr.rel (%p17) target = $region8
    $region5: #{slowfast_forward.11} parent=1 // loop_body
      %s21 = ssub.s32 %s16, 1
      %s22 = ssub.s32 %s16, 2
      %s23 = sadd.s32 %s16, 1
      %s24 = ssub.s32 %s16, %s23
      %p25 = scmp.eq.s32.totalorder %s24, 0
      %s27 = sadd.s32 %s26, 1
      %s28 = scalar_select %p25, %s26, %s27
      %p31 = pneg %p25
      %p32 = scmp.eq.s32.totalorder %s16, 1
      %p33 = por %p31, %p32
      %p34 = scmp.ne.s32.totalorder %s26, %s29
      %p35 = scmp.eq.s32.totalorder %s16, 0
      %p36 = por %p34, %p35
      %p37 = scmp.ne.s32.totalorder %s26, %s29
      %p38 = scmp.eq.s32.totalorder %s21, 1
      %p39 = por %p37, %p38
      %p40 = scmp.ne.s32.totalorder %s29, %s30
      %p41 = scmp.eq.s32.totalorder %s21, 0
      %p42 = por %p40, %p41
      %p43 = scmp.ne.s32.totalorder %s29, %s30
      %p44 = scmp.eq.s32.totalorder %s22, 1
      %p45 = por %p43, %p44
      %p47 = scmp.ne.s32.totalorder %s30, %s46
      %p48 = scmp.eq.s32.totalorder %s22, 0
      %p49 = por %p47, %p48
      %s50 = ssub.s32 %s16, %s23
      %p51 = scmp.eq.s32.totalorder %s50, 0
      %s53 = sadd.s32 %s52, 1
      %s54 = scalar_select %p51, %s52, %s53
      %p57 = pneg %p51
      %p58 = scmp.eq.s32.totalorder %s16, 1
      %p59 = por %p57, %p58
      %p60 = scmp.ne.s32.totalorder %s52, %s55
      %p61 = scmp.eq.s32.totalorder %s16, 0
      %p62 = por %p60, %p61
      %p63 = scmp.ne.s32.totalorder %s52, %s55
      %p64 = scmp.eq.s32.totalorder %s21, 1
      %p65 = por %p63, %p64
      %p66 = scmp.ne.s32.totalorder %s55, %s56
      %p67 = scmp.eq.s32.totalorder %s21, 0
      %p68 = por %p66, %p67
      %p69 = scmp.ne.s32.totalorder %s55, %s56
      %p70 = scmp.eq.s32.totalorder %s22, 1
      %p71 = por %p69, %p70
      %p73 = scmp.ne.s32.totalorder %s56, %s72
      %p74 = scmp.eq.s32.totalorder %s22, 0
      %p75 = por %p73, %p74
      %s77 = sadd.s32 %s76, 1
      %p80 = scmp.eq.s32.totalorder %s16, 1
      %p81 = scmp.ne.s32.totalorder %s76, %s78
      %p82 = scmp.eq.s32.totalorder %s16, 0
      %p83 = por %p81, %p82
      %p84 = scmp.ne.s32.totalorder %s76, %s78
      %p85 = scmp.eq.s32.totalorder %s21, 1
      %p86 = por %p84, %p85
      %p87 = scmp.ne.s32.totalorder %s78, %s79
      %p88 = scmp.eq.s32.totalorder %s21, 0
      %p89 = por %p87, %p88
      %p90 = scmp.ne.s32.totalorder %s78, %s79
      %p91 = scmp.eq.s32.totalorder %s22, 1
      %p92 = por %p90, %p91
      %p94 = scmp.ne.s32.totalorder %s79, %s93
      %p95 = scmp.eq.s32.totalorder %s22, 0
      %p96 = por %p94, %p95
      %s98 = sadd.s32 %s97, 1
      %p101 = scmp.eq.s32.totalorder %s16, 1
      %p102 = scmp.ne.s32.totalorder %s97, %s99
      %p103 = scmp.eq.s32.totalorder %s16, 0
      %p104 = por %p102, %p103
      %p105 = scmp.ne.s32.totalorder %s97, %s99
      %p106 = scmp.eq.s32.totalorder %s21, 1
      %p107 = por %p105, %p106
      %p108 = scmp.ne.s32.totalorder %s99, %s100
      %p109 = scmp.eq.s32.totalorder %s21, 0
      %p110 = por %p108, %p109
      %p111 = scmp.ne.s32.totalorder %s99, %s100
      %p112 = scmp.eq.s32.totalorder %s22, 1
      %p113 = por %p111, %p112
      %p115 = scmp.ne.s32.totalorder %s100, %s114
      %p116 = scmp.eq.s32.totalorder %s22, 0
      %p117 = por %p115, %p116
      %s119 = sadd.s32 %s118, 1
      %p122 = scmp.eq.s32.totalorder %s16, 1
      %p123 = scmp.ne.s32.totalorder %s118, %s120
      %p124 = scmp.eq.s32.totalorder %s16, 0
      %p125 = por %p123, %p124
      %p126 = scmp.ne.s32.totalorder %s118, %s120
      %p127 = scmp.eq.s32.totalorder %s21, 1
      %p128 = por %p126, %p127
      %p129 = scmp.ne.s32.totalorder %s120, %s121
      %p130 = scmp.eq.s32.totalorder %s21, 0
      %p131 = por %p129, %p130
      %p132 = scmp.ne.s32.totalorder %s120, %s121
      %p133 = scmp.eq.s32.totalorder %s22, 1
      %p134 = por %p132, %p133
      %p136 = scmp.ne.s32.totalorder %s121, %s135
      %p137 = scmp.eq.s32.totalorder %s22, 0
      %p138 = por %p136, %p137
      %s140 = sadd.s32 %s139, 1
      %p143 = scmp.eq.s32.totalorder %s16, 1
      %p144 = scmp.ne.s32.totalorder %s139, %s141
      %p145 = scmp.eq.s32.totalorder %s16, 0
      %p146 = por %p144, %p145
      %p147 = scmp.ne.s32.totalorder %s139, %s141
      %p148 = scmp.eq.s32.totalorder %s21, 1
      %p149 = por %p147, %p148
      %p150 = scmp.ne.s32.totalorder %s141, %s142
      %p151 = scmp.eq.s32.totalorder %s21, 0
      %p152 = por %p150, %p151
      %p153 = scmp.ne.s32.totalorder %s141, %s142
      %p154 = scmp.eq.s32.totalorder %s22, 1
      %p155 = por %p153, %p154
      %p157 = scmp.ne.s32.totalorder %s142, %s156
      %p158 = scmp.eq.s32.totalorder %s22, 0
      %p159 = por %p157, %p158
      %s161 = sadd.s32 %s160, 1
      %p164 = scmp.eq.s32.totalorder %s16, 1
      %p165 = scmp.ne.s32.totalorder %s160, %s162
      %p166 = scmp.eq.s32.totalorder %s16, 0
      %p167 = por %p165, %p166
      %p168 = scmp.ne.s32.totalorder %s160, %s162
      %p169 = scmp.eq.s32.totalorder %s21, 1
      %p170 = por %p168, %p169
      %p171 = scmp.ne.s32.totalorder %s162, %s163
      %p172 = scmp.eq.s32.totalorder %s21, 0
      %p173 = por %p171, %p172
      %p174 = scmp.ne.s32.totalorder %s162, %s163
      %p175 = scmp.eq.s32.totalorder %s22, 1
      %p176 = por %p174, %p175
      %p178 = scmp.ne.s32.totalorder %s163, %s177
      %p179 = scmp.eq.s32.totalorder %s22, 0
      %p180 = por %p178, %p179
      %s181 = ssub.s32 %s16, %s23
      %p182 = scmp.eq.s32.totalorder %s181, 0
      %s184 = sadd.s32 %s183, 1
      %s185 = scalar_select %p182, %s183, %s184
      %p188 = pneg %p182
      %p189 = scmp.eq.s32.totalorder %s16, 1
      %p190 = por %p188, %p189
      %p191 = scmp.ne.s32.totalorder %s183, %s186
      %p192 = scmp.eq.s32.totalorder %s16, 0
      %p193 = por %p191, %p192
      %p194 = scmp.ne.s32.totalorder %s183, %s186
      %p195 = scmp.eq.s32.totalorder %s21, 1
      %p196 = por %p194, %p195
      %p197 = scmp.ne.s32.totalorder %s186, %s187
      %p198 = scmp.eq.s32.totalorder %s21, 0
      %p199 = por %p197, %p198
      %p200 = scmp.ne.s32.totalorder %s186, %s187
      %p201 = scmp.eq.s32.totalorder %s22, 1
      %p202 = por %p200, %p201
      %p204 = scmp.ne.s32.totalorder %s187, %s203
      %p205 = scmp.eq.s32.totalorder %s22, 0
      %p206 = por %p204, %p205
      %p207 = scmp.le.s32.totalorder 1, %s16
      %p208 = scmp.lt.s32.totalorder %s16, 3
      %p209 = pnand %p207, %p208
      %p210 = pneg %p209
      // Predicated region
      $region9: #{slowfast_forward.11} parent=5 // pred_check
        _
      $region10: #{slowfast_forward.11} parent=5 // pred_check_branch
        %212 = sbr.rel (%p209) target = $region12
      $region11: #{slowfast_forward.11} parent=5 // pred_region
        %s213 = ssub.s32 %s16, 1
        // Predicated region
        $region13: #{slowfast_forward.11} parent=11 // pred_check
          %p214 = pneg %p89
        $region14: #{slowfast_forward.11} parent=11 // pred_check_branch
          %216 = sbr.rel (%p214) target = $region16
        $region15: #{slowfast_forward.11} parent=11 // pred_region
          _
        $region16: #{slowfast_forward.11} parent=11 // pred_fallthru
          _
        // Predicated region
        $region17: #{slowfast_forward.11} parent=11 // pred_check
          %p217 = pneg %p110
        $region18: #{slowfast_forward.11} parent=11 // pred_check_branch
          %219 = sbr.rel (%p217) target = $region20
        $region19: #{slowfast_forward.11} parent=11 // pred_region
          _
        $region20: #{slowfast_forward.11} parent=11 // pred_fallthru
          _
        // Predicated region
        $region21: #{slowfast_forward.11} parent=11 // pred_check
          %p220 = pneg %p131
        $region22: #{slowfast_forward.11} parent=11 // pred_check_branch
          %222 = sbr.rel (%p220) target = $region24
        $region23: #{slowfast_forward.11} parent=11 // pred_region
          _
        $region24: #{slowfast_forward.11} parent=11 // pred_fallthru
          _
        // Predicated region
        $region25: #{slowfast_forward.11} parent=11 // pred_check
          %p223 = pneg %p152
        $region26: #{slowfast_forward.11} parent=11 // pred_check_branch
          %225 = sbr.rel (%p223) target = $region28
        $region27: #{slowfast_forward.11} parent=11 // pred_region
          _
        $region28: #{slowfast_forward.11} parent=11 // pred_fallthru
          _
        // Predicated region
        $region29: #{slowfast_forward.11} parent=11 // pred_check
          %p226 = pneg %p173
        $region30: #{slowfast_forward.11} parent=11 // pred_check_branch
          %228 = sbr.rel (%p226) target = $region32
        $region31: #{slowfast_forward.11} parent=11 // pred_region
          _
        $region32: #{slowfast_forward.11} parent=11 // pred_fallthru
          _
      $region12: #{slowfast_forward.11} parent=5 // pred_fallthru
        _
      %p229 = scmp.lt.s32.totalorder %s16, 2
      // Predicated region
      $region33: #{slowfast_forward.11} parent=5 // pred_check
        %p230 = pneg %p229
      $region34: #{slowfast_forward.11} parent=5 // pred_check_branch
        %232 = sbr.rel (%p230) target = $region36
      $region35: #{slowfast_forward.11} parent=5 // pred_region
        // Predicated region
        $region37: #{slowfast_forward.11} parent=35 // pred_check
          %p233 = pneg %p36
        $region38: #{slowfast_forward.11} parent=35 // pred_check_branch
          %235 = sbr.rel (%p233) target = $region40
        $region39: #{slowfast_forward.11} parent=35 // pred_region
          %p236 = scmp.lt.s32.totalorder %s16, 1
          %s237 = scalar_select %p236, %s16, 1
          %s238 = smul.addr %s237, 16
          %s239 = smul.addr %s238, 4
          %s240 = scalar_lea.vmem %s0, %s239
        $region40: #{slowfast_forward.11} parent=35 // pred_fallthru
          _
        // Predicated region
        $region41: #{slowfast_forward.11} parent=35 // pred_check
          %p241 = pneg %p62
        $region42: #{slowfast_forward.11} parent=35 // pred_check_branch
          %243 = sbr.rel (%p241) target = $region44
        $region43: #{slowfast_forward.11} parent=35 // pred_region
          %p244 = scmp.lt.s32.totalorder %s16, 1
          %s245 = scalar_select %p244, %s16, 1
          %s246 = smul.addr %s245, 8
          %s247 = smul.addr %s246, 4
          %s248 = scalar_lea.vmem %s1, %s247
        $region44: #{slowfast_forward.11} parent=35 // pred_fallthru
          _
      $region36: #{slowfast_forward.11} parent=5 // pred_fallthru
        _
      %p249 = scmp.le.s32.totalorder 1, %s16
      %p250 = scmp.lt.s32.totalorder %s16, 3
      %p251 = pnand %p249, %p250
      %p252 = pneg %p251
      // Predicated region
      $region45: #{slowfast_forward.11} parent=5 // pred_check
        _
      $region46: #{slowfast_forward.11} parent=5 // pred_check_branch
        %254 = sbr.rel (%p251) target = $region48
      $region47: #{slowfast_forward.11} parent=5 // pred_region
        %s255 = ssub.s32 %s16, 1
        %p256 = scmp.lt.s32.totalorder %s21, 1
        %s257 = scalar_select %p256, %s21, 1
        %s258 = smul.addr %s257, 16
        %s259 = smul.addr %s258, 4
        %s260 = scalar_lea.vmem %s0, %s259
        %p261 = pneg %p42
        %p262 = pneg %p39
        %p263 = scmp.lt.s32.totalorder %s21, 1
        %s264 = scalar_select %p263, %s21, 1
        %s265 = smul.addr %s264, 8
        %s266 = smul.addr %s265, 4
        %s267 = scalar_lea.vmem %s1, %s266
        %p268 = pneg %p68
        %p269 = pneg %p65
        %p270 = pneg %p89
        %p271 = pneg %p86
        %p272 = pneg %p110
        %p273 = pneg %p107
        %p274 = pneg %p131
        %p275 = pneg %p128
        %p276 = pneg %p152
        %p277 = pneg %p149
        %p278 = pneg %p173
        %p279 = pneg %p170
        %p280 = pneg %p199
        %p281 = pneg %p196
        %s282 = sand.u32 %s186, 1
        %s283 = scalar_lea.sflag [#allocation3], %s282
        %s284 = sand.u32 %s186, 1
        %s285 = scalar_lea.vmem [#allocation2], %s284
        %p286 = scmp.lt.s32.totalorder %s21, 1
        %s287 = scalar_select %p286, %s21, 1
        %s288 = smul.addr %s287, 16
        %s289 = smul.addr %s288, 4
        %s290 = scalar_lea.vmem %s0, %s289
        %p291 = scmp.lt.s32.totalorder %s21, 1
        %s292 = scalar_select %p291, %s21, 1
        %s293 = smul.addr %s292, 8
        %s294 = smul.addr %s293, 4
        %s295 = scalar_lea.vmem %s1, %s294
        %v296 = vld [vmem:[%s290] sm:$0xff]
        %v297 = vld [vmem:[%s290 + $0x8] sm:$0xff]
        %v298 = vld [vmem:[%s290 + $0x10] sm:$0xff]
        %v299 = vld [vmem:[%s290 + $0x18] sm:$0xff]
        %v300 = vld [vmem:[%s290 + $0x20] sm:$0xff]
        %v301 = vld [vmem:[%s290 + $0x28] sm:$0xff]
        %v302 = vld [vmem:[%s290 + $0x30] sm:$0xff]
        %v303 = vld [vmem:[%s290 + $0x38] sm:$0xff]
        %v304 = vld [vmem:[%s2] sm:$0xff]
        %v305 = vld [vmem:[%s2 + $0x8] sm:$0xff]
        %v306 = vld [vmem:[%s2 + $0x10] sm:$0xff]
        %v307 = vld [vmem:[%s2 + $0x18] sm:$0xff]
        %v308 = vld [vmem:[%s2 + $0x20] sm:$0xff]
        %v309 = vld [vmem:[%s2 + $0x28] sm:$0xff]
        %v310 = vld [vmem:[%s2 + $0x30] sm:$0xff]
        %v311 = vld [vmem:[%s2 + $0x38] sm:$0xff]
        %v312 = vld [vmem:[%s2 + $0x40] sm:$0xff]
        %v313 = vld [vmem:[%s2 + $0x48] sm:$0xff]
        %v314 = vld [vmem:[%s2 + $0x50] sm:$0xff]
        %v315 = vld [vmem:[%s2 + $0x58] sm:$0xff]
        %v316 = vld [vmem:[%s2 + $0x60] sm:$0xff]
        %v317 = vld [vmem:[%s2 + $0x68] sm:$0xff]
        %v318 = vld [vmem:[%s2 + $0x70] sm:$0xff]
        %v319 = vld [vmem:[%s2 + $0x78] sm:$0xff]
        %v320 = vld [vmem:[%s2 + $0x80] sm:$0xff]
        %v321 = vld [vmem:[%s2 + $0x88] sm:$0xff]
        %v322 = vld [vmem:[%s2 + $0x90] sm:$0xff]
        %v323 = vld [vmem:[%s2 + $0x98] sm:$0xff]
        %v324 = vld [vmem:[%s2 + $0xa0] sm:$0xff]
        %v325 = vld [vmem:[%s2 + $0xa8] sm:$0xff]
        %v326 = vld [vmem:[%s2 + $0xb0] sm:$0xff]
        %v327 = vld [vmem:[%s2 + $0xb8] sm:$0xff]
        %v328 = vld [vmem:[%s2 + $0xc0] sm:$0xff]
        %v329 = vld [vmem:[%s2 + $0xc8] sm:$0xff]
        %v330 = vld [vmem:[%s2 + $0xd0] sm:$0xff]
        %v331 = vld [vmem:[%s2 + $0xd8] sm:$0xff]
        %v332 = vld [vmem:[%s2 + $0xe0] sm:$0xff]
        %v333 = vld [vmem:[%s2 + $0xe8] sm:$0xff]
        %v334 = vld [vmem:[%s2 + $0xf0] sm:$0xff]
        %v335 = vld [vmem:[%s2 + $0xf8] sm:$0xff]
        %v336 = vld [vmem:[%s2 + $0x100] sm:$0xff]
        %v337 = vld [vmem:[%s2 + $0x108] sm:$0xff]
        %v338 = vld [vmem:[%s2 + $0x110] sm:$0xff]
        %v339 = vld [vmem:[%s2 + $0x118] sm:$0xff]
        %v340 = vld [vmem:[%s2 + $0x120] sm:$0xff]
        %v341 = vld [vmem:[%s2 + $0x128] sm:$0xff]
        %v342 = vld [vmem:[%s2 + $0x130] sm:$0xff]
        %v343 = vld [vmem:[%s2 + $0x138] sm:$0xff]
        %v344 = vld [vmem:[%s2 + $0x140] sm:$0xff]
        %v345 = vld [vmem:[%s2 + $0x148] sm:$0xff]
        %v346 = vld [vmem:[%s2 + $0x150] sm:$0xff]
        %v347 = vld [vmem:[%s2 + $0x158] sm:$0xff]
        %v348 = vld [vmem:[%s2 + $0x160] sm:$0xff]
        %v349 = vld [vmem:[%s2 + $0x168] sm:$0xff]
        %v350 = vld [vmem:[%s2 + $0x170] sm:$0xff]
        %v351 = vld [vmem:[%s2 + $0x178] sm:$0xff]
        %v352 = vld [vmem:[%s2 + $0x180] sm:$0xff]
        %v353 = vld [vmem:[%s2 + $0x188] sm:$0xff]
        %v354 = vld [vmem:[%s2 + $0x190] sm:$0xff]
        %v355 = vld [vmem:[%s2 + $0x198] sm:$0xff]
        %v356 = vld [vmem:[%s2 + $0x1a0] sm:$0xff]
        %v357 = vld [vmem:[%s2 + $0x1a8] sm:$0xff]
        %v358 = vld [vmem:[%s2 + $0x1b0] sm:$0xff]
        %v359 = vld [vmem:[%s2 + $0x1b8] sm:$0xff]
        %v360 = vld [vmem:[%s2 + $0x1c0] sm:$0xff]
        %v361 = vld [vmem:[%s2 + $0x1c8] sm:$0xff]
        %v362 = vld [vmem:[%s2 + $0x1d0] sm:$0xff]
        %v363 = vld [vmem:[%s2 + $0x1d8] sm:$0xff]
        %v364 = vld [vmem:[%s2 + $0x1e0] sm:$0xff]
        %v365 = vld [vmem:[%s2 + $0x1e8] sm:$0xff]
        %v366 = vld [vmem:[%s2 + $0x1f0] sm:$0xff]
        %v367 = vld [vmem:[%s2 + $0x1f8] sm:$0xff]
        %v368 = vld [vmem:[%s295] sm:$0xf]
        %v369 = vld [vmem:[%s295 + $0x4] sm:$0xf]
        %v370 = vld [vmem:[%s295 + $0x8] sm:$0xf]
        %v371 = vld [vmem:[%s295 + $0xc] sm:$0xf]
        %v372 = vld [vmem:[%s295 + $0x10] sm:$0xf]
        %v373 = vld [vmem:[%s295 + $0x14] sm:$0xf]
        %v374 = vld [vmem:[%s295 + $0x18] sm:$0xf]
        %v375 = vld [vmem:[%s295 + $0x1c] sm:$0xf]
        %v376 = vld [vmem:[%s3] sm:$0xff]
        %v377 = vld [vmem:[%s3 + $0x8] sm:$0xff]
        %v378 = vld [vmem:[%s3 + $0x10] sm:$0xff]
        %v379 = vld [vmem:[%s3 + $0x18] sm:$0xff]
        %v380 = vld [vmem:[%s3 + $0x20] sm:$0xff]
        %v381 = vld [vmem:[%s3 + $0x28] sm:$0xff]
        %v382 = vld [vmem:[%s3 + $0x30] sm:$0xff]
        %v383 = vld [vmem:[%s3 + $0x38] sm:$0xff]
        %v384 = vld [vmem:[%s3 + $0x40] sm:$0xff]
        %v385 = vld [vmem:[%s3 + $0x48] sm:$0xff]
        %v386 = vld [vmem:[%s3 + $0x50] sm:$0xff]
        %v387 = vld [vmem:[%s3 + $0x58] sm:$0xff]
        %v388 = vld [vmem:[%s3 + $0x60] sm:$0xff]
        %v389 = vld [vmem:[%s3 + $0x68] sm:$0xff]
        %v390 = vld [vmem:[%s3 + $0x70] sm:$0xff]
        %v391 = vld [vmem:[%s3 + $0x78] sm:$0xff]
        %v392 = vld [vmem:[%s3 + $0x80] sm:$0xff]
        %v393 = vld [vmem:[%s3 + $0x88] sm:$0xff]
        %v394 = vld [vmem:[%s3 + $0x90] sm:$0xff]
        %v395 = vld [vmem:[%s3 + $0x98] sm:$0xff]
        %v396 = vld [vmem:[%s3 + $0xa0] sm:$0xff]
        %v397 = vld [vmem:[%s3 + $0xa8] sm:$0xff]
        %v398 = vld [vmem:[%s3 + $0xb0] sm:$0xff]
        %v399 = vld [vmem:[%s3 + $0xb8] sm:$0xff]
        %v400 = vld [vmem:[%s3 + $0xc0] sm:$0xff]
        %v401 = vld [vmem:[%s3 + $0xc8] sm:$0xff]
        %v402 = vld [vmem:[%s3 + $0xd0] sm:$0xff]
        %v403 = vld [vmem:[%s3 + $0xd8] sm:$0xff]
        %v404 = vld [vmem:[%s3 + $0xe0] sm:$0xff]
        %v405 = vld [vmem:[%s3 + $0xe8] sm:$0xff]
        %v406 = vld [vmem:[%s3 + $0xf0] sm:$0xff]
        %v407 = vld [vmem:[%s3 + $0xf8] sm:$0xff]
        %v416 = vunpack.c.l.b16 %v368
        %v417 = vunpack.c.l.b16 %v369
        %v418 = vunpack.c.l.b16 %v370
        %v419 = vunpack.c.l.b16 %v371
        %v420 = vunpack.c.l.b16 %v372
        %v421 = vunpack.c.l.b16 %v373
        %v422 = vunpack.c.l.b16 %v374
        %v423 = vunpack.c.l.b16 %v375
        %v424 = vpack.c.b16 %v417, %v416
        %v425 = vpack.c.b16 %v419, %v418
        %v426 = vpack.c.b16 %v421, %v420
        %v427 = vpack.c.b16 %v423, %v422
        %v464 = vunpack.c.l.b16 %v376
        %v465 = vunpack.c.h.b16 %v376
        %v466 = vunpack.c.l.b16 %v377
        %v467 = vunpack.c.h.b16 %v377
        %v468 = vunpack.c.l.b16 %v378
        %v469 = vunpack.c.h.b16 %v378
        %v470 = vunpack.c.l.b16 %v379
        %v471 = vunpack.c.h.b16 %v379
        %v472 = vunpack.c.l.b16 %v380
        %v473 = vunpack.c.h.b16 %v380
        %v474 = vunpack.c.l.b16 %v381
        %v475 = vunpack.c.h.b16 %v381
        %v476 = vunpack.c.l.b16 %v382
        %v477 = vunpack.c.h.b16 %v382
        %v478 = vunpack.c.l.b16 %v383
        %v479 = vunpack.c.h.b16 %v383
        %v480 = vunpack.c.l.b16 %v384
        %v481 = vunpack.c.h.b16 %v384
        %v482 = vunpack.c.l.b16 %v385
        %v483 = vunpack.c.h.b16 %v385
        %v484 = vunpack.c.l.b16 %v386
        %v485 = vunpack.c.h.b16 %v386
        %v486 = vunpack.c.l.b16 %v387
        %v487 = vunpack.c.h.b16 %v387
        %v488 = vunpack.c.l.b16 %v388
        %v489 = vunpack.c.h.b16 %v388
        %v490 = vunpack.c.l.b16 %v389
        %v491 = vunpack.c.h.b16 %v389
        %v492 = vunpack.c.l.b16 %v390
        %v493 = vunpack.c.h.b16 %v390
        %v494 = vunpack.c.l.b16 %v391
        %v495 = vunpack.c.h.b16 %v391
        %v496 = vunpack.c.l.b16 %v392
        %v497 = vunpack.c.h.b16 %v392
        %v498 = vunpack.c.l.b16 %v393
        %v499 = vunpack.c.h.b16 %v393
        %v500 = vunpack.c.l.b16 %v394
        %v501 = vunpack.c.h.b16 %v394
        %v502 = vunpack.c.l.b16 %v395
        %v503 = vunpack.c.h.b16 %v395
        %v504 = vunpack.c.l.b16 %v396
        %v505 = vunpack.c.h.b16 %v396
        %v506 = vunpack.c.l.b16 %v397
        %v507 = vunpack.c.h.b16 %v397
        %v508 = vunpack.c.l.b16 %v398
        %v509 = vunpack.c.h.b16 %v398
        %v510 = vunpack.c.l.b16 %v399
        %v511 = vunpack.c.h.b16 %v399
        %v512 = vunpack.c.l.b16 %v400
        %v513 = vunpack.c.h.b16 %v400
        %v514 = vunpack.c.l.b16 %v401
        %v515 = vunpack.c.h.b16 %v401
        %v516 = vunpack.c.l.b16 %v402
        %v517 = vunpack.c.h.b16 %v402
        %v518 = vunpack.c.l.b16 %v403
        %v519 = vunpack.c.h.b16 %v403
        %v520 = vunpack.c.l.b16 %v404
        %v521 = vunpack.c.h.b16 %v404
        %v522 = vunpack.c.l.b16 %v405
        %v523 = vunpack.c.h.b16 %v405
        %v524 = vunpack.c.l.b16 %v406
        %v525 = vunpack.c.h.b16 %v406
        %v526 = vunpack.c.l.b16 %v407
        %v527 = vunpack.c.h.b16 %v407
        %v528 = vpack.c.b16 %v468, %v464
        %v529 = vpack.c.b16 %v469, %v465
        %v530 = vpack.c.b16 %v470, %v466
        %v531 = vpack.c.b16 %v471, %v467
        %v532 = vpack.c.b16 %v476, %v472
        %v533 = vpack.c.b16 %v477, %v473
        %v534 = vpack.c.b16 %v478, %v474
        %v535 = vpack.c.b16 %v479, %v475
        %v536 = vpack.c.b16 %v484, %v480
        %v537 = vpack.c.b16 %v485, %v481
        %v538 = vpack.c.b16 %v486, %v482
        %v539 = vpack.c.b16 %v487, %v483
        %v540 = vpack.c.b16 %v492, %v488
        %v541 = vpack.c.b16 %v493, %v489
        %v542 = vpack.c.b16 %v494, %v490
        %v543 = vpack.c.b16 %v495, %v491
        %v544 = vpack.c.b16 %v500, %v496
        %v545 = vpack.c.b16 %v501, %v497
        %v546 = vpack.c.b16 %v502, %v498
        %v547 = vpack.c.b16 %v503, %v499
        %v548 = vpack.c.b16 %v508, %v504
        %v549 = vpack.c.b16 %v509, %v505
        %v550 = vpack.c.b16 %v510, %v506
        %v551 = vpack.c.b16 %v511, %v507
        %v552 = vpack.c.b16 %v516, %v512
        %v553 = vpack.c.b16 %v517, %v513
        %v554 = vpack.c.b16 %v518, %v514
        %v555 = vpack.c.b16 %v519, %v515
        %v556 = vpack.c.b16 %v524, %v520
        %v557 = vpack.c.b16 %v525, %v521
        %v558 = vpack.c.b16 %v526, %v522
        %v559 = vpack.c.b16 %v527, %v523
        %592 = vmatpush.bf16.msra.mxu0 %v556
        %593 = vmatpush.bf16.msra.mxu0 %v552
        %594 = vmatpush.bf16.msra.mxu0 %v548
        %595 = vmatpush.bf16.msra.mxu0 %v544
        %596 = vmatpush.bf16.msra.mxu0 %v540
        %597 = vmatpush.bf16.msra.mxu0 %v536
        %598 = vmatpush.bf16.msra.mxu0 %v532
        %599 = vmatpush.bf16.msra.mxu0 %v528
        %600 = vmatmul.bf16.gmra.mxu0 %v424
        %v601 = vpop.f32.mrf.mxu0
        %v602 = vadd.f32 0.0, %v601
        %v603 = vpop.f32.mrf.mxu0
        %v604 = vadd.f32 0.0, %v603
        %605 = vmatmul.bf16.gmra.mxu0 %v425
        %v606 = vpop.f32.mrf.mxu0
        %v607 = vadd.f32 0.0, %v606
        %v608 = vpop.f32.mrf.mxu0
        %v609 = vadd.f32 0.0, %v608
        %610 = vmatmul.bf16.gmra.mxu0 %v426
        %v611 = vpop.f32.mrf.mxu0
        %v612 = vadd.f32 0.0, %v611
        %v613 = vpop.f32.mrf.mxu0
        %v614 = vadd.f32 0.0, %v613
        %615 = vmatmul.bf16.gmra.mxu0 %v427
        %v616 = vpop.f32.mrf.mxu0
        %v617 = vadd.f32 0.0, %v616
        %v618 = vpop.f32.mrf.mxu0
        %v619 = vadd.f32 0.0, %v618
        %620 = vdwg.mxu0
        %621 = vmatpush.bf16.msra.mxu0 %v557
        %622 = vmatpush.bf16.msra.mxu0 %v553
        %623 = vmatpush.bf16.msra.mxu0 %v549
        %624 = vmatpush.bf16.msra.mxu0 %v545
        %625 = vmatpush.bf16.msra.mxu0 %v541
        %626 = vmatpush.bf16.msra.mxu0 %v537
        %627 = vmatpush.bf16.msra.mxu0 %v533
        %628 = vmatpush.bf16.msra.mxu0 %v529
        %629 = vmatmul.bf16.gmra.mxu0 %v424
        %v630 = vpop.f32.mrf.mxu0
        %v631 = vadd.f32 0.0, %v630
        %v632 = vpop.f32.mrf.mxu0
        %v633 = vadd.f32 0.0, %v632
        %634 = vmatmul.bf16.gmra.mxu0 %v425
        %v635 = vpop.f32.mrf.mxu0
        %v636 = vadd.f32 0.0, %v635
        %v637 = vpop.f32.mrf.mxu0
        %v638 = vadd.f32 0.0, %v637
        %639 = vmatmul.bf16.gmra.mxu0 %v426
        %v640 = vpop.f32.mrf.mxu0
        %v641 = vadd.f32 0.0, %v640
        %v642 = vpop.f32.mrf.mxu0
        %v643 = vadd.f32 0.0, %v642
        %644 = vmatmul.bf16.gmra.mxu0 %v427
        %v645 = vpop.f32.mrf.mxu0
        %v646 = vadd.f32 0.0, %v645
        %v647 = vpop.f32.mrf.mxu0
        %v648 = vadd.f32 0.0, %v647
        %649 = vdwg.mxu0
        %650 = vmatpush.bf16.msra.mxu0 %v558
        %651 = vmatpush.bf16.msra.mxu0 %v554
        %652 = vmatpush.bf16.msra.mxu0 %v550
        %653 = vmatpush.bf16.msra.mxu0 %v546
        %654 = vmatpush.bf16.msra.mxu0 %v542
        %655 = vmatpush.bf16.msra.mxu0 %v538
        %656 = vmatpush.bf16.msra.mxu0 %v534
        %657 = vmatpush.bf16.msra.mxu0 %v530
        %658 = vmatmul.bf16.gmra.mxu0 %v424
        %v659 = vpop.f32.mrf.mxu0
        %v660 = vadd.f32 0.0, %v659
        %v661 = vpop.f32.mrf.mxu0
        %v662 = vadd.f32 0.0, %v661
        %663 = vmatmul.bf16.gmra.mxu0 %v425
        %v664 = vpop.f32.mrf.mxu0
        %v665 = vadd.f32 0.0, %v664
        %v666 = vpop.f32.mrf.mxu0
        %v667 = vadd.f32 0.0, %v666
        %668 = vmatmul.bf16.gmra.mxu0 %v426
        %v669 = vpop.f32.mrf.mxu0
        %v670 = vadd.f32 0.0, %v669
        %v671 = vpop.f32.mrf.mxu0
        %v672 = vadd.f32 0.0, %v671
        %673 = vmatmul.bf16.gmra.mxu0 %v427
        %v674 = vpop.f32.mrf.mxu0
        %v675 = vadd.f32 0.0, %v674
        %v676 = vpop.f32.mrf.mxu0
        %v677 = vadd.f32 0.0, %v676
        %678 = vdwg.mxu0
        %679 = vmatpush.bf16.msra.mxu0 %v559
        %680 = vmatpush.bf16.msra.mxu0 %v555
        %681 = vmatpush.bf16.msra.mxu0 %v551
        %682 = vmatpush.bf16.msra.mxu0 %v547
        %683 = vmatpush.bf16.msra.mxu0 %v543
        %684 = vmatpush.bf16.msra.mxu0 %v539
        %685 = vmatpush.bf16.msra.mxu0 %v535
        %686 = vmatpush.bf16.msra.mxu0 %v531
        %687 = vmatmul.bf16.gmra.mxu0 %v424
        %v688 = vpop.f32.mrf.mxu0
        %v689 = vadd.f32 0.0, %v688
        %v690 = vpop.f32.mrf.mxu0
        %v691 = vadd.f32 0.0, %v690
        %692 = vmatmul.bf16.gmra.mxu0 %v425
        %v693 = vpop.f32.mrf.mxu0
        %v694 = vadd.f32 0.0, %v693
        %v695 = vpop.f32.mrf.mxu0
        %v696 = vadd.f32 0.0, %v695
        %697 = vmatmul.bf16.gmra.mxu0 %v426
        %v698 = vpop.f32.mrf.mxu0
        %v699 = vadd.f32 0.0, %v698
        %v700 = vpop.f32.mrf.mxu0
        %v701 = vadd.f32 0.0, %v700
        %702 = vmatmul.bf16.gmra.mxu0 %v427
        %v703 = vpop.f32.mrf.mxu0
        %v704 = vadd.f32 0.0, %v703
        %v705 = vpop.f32.mrf.mxu0
        %v706 = vadd.f32 0.0, %v705
        %707 = vdwg.mxu0
        %v716 = vunpack.c.l.b16 %v296
        %v717 = vunpack.c.h.b16 %v296
        %v718 = vunpack.c.l.b16 %v297
        %v719 = vunpack.c.h.b16 %v297
        %v720 = vunpack.c.l.b16 %v298
        %v721 = vunpack.c.h.b16 %v298
        %v722 = vunpack.c.l.b16 %v299
        %v723 = vunpack.c.h.b16 %v299
        %v724 = vunpack.c.l.b16 %v300
        %v725 = vunpack.c.h.b16 %v300
        %v726 = vunpack.c.l.b16 %v301
        %v727 = vunpack.c.h.b16 %v301
        %v728 = vunpack.c.l.b16 %v302
        %v729 = vunpack.c.h.b16 %v302
        %v730 = vunpack.c.l.b16 %v303
        %v731 = vunpack.c.h.b16 %v303
        %v732 = vpack.c.b16 %v718, %v716
        %v733 = vpack.c.b16 %v719, %v717
        %v734 = vpack.c.b16 %v722, %v720
        %v735 = vpack.c.b16 %v723, %v721
        %v736 = vpack.c.b16 %v726, %v724
        %v737 = vpack.c.b16 %v727, %v725
        %v738 = vpack.c.b16 %v730, %v728
        %v739 = vpack.c.b16 %v731, %v729
        %v812 = vunpack.c.l.b16 %v304
        %v813 = vunpack.c.h.b16 %v304
        %v814 = vunpack.c.l.b16 %v305
        %v815 = vunpack.c.h.b16 %v305
        %v816 = vunpack.c.l.b16 %v306
        %v817 = vunpack.c.h.b16 %v306
        %v818 = vunpack.c.l.b16 %v307
        %v819 = vunpack.c.h.b16 %v307
        %v820 = vunpack.c.l.b16 %v308
        %v821 = vunpack.c.h.b16 %v308
        %v822 = vunpack.c.l.b16 %v309
        %v823 = vunpack.c.h.b16 %v309
        %v824 = vunpack.c.l.b16 %v310
        %v825 = vunpack.c.h.b16 %v310
        %v826 = vunpack.c.l.b16 %v311
        %v827 = vunpack.c.h.b16 %v311
        %v828 = vunpack.c.l.b16 %v312
        %v829 = vunpack.c.h.b16 %v312
        %v830 = vunpack.c.l.b16 %v313
        %v831 = vunpack.c.h.b16 %v313
        %v832 = vunpack.c.l.b16 %v314
        %v833 = vunpack.c.h.b16 %v314
        %v834 = vunpack.c.l.b16 %v315
        %v835 = vunpack.c.h.b16 %v315
        %v836 = vunpack.c.l.b16 %v316
        %v837 = vunpack.c.h.b16 %v316
        %v838 = vunpack.c.l.b16 %v317
        %v839 = vunpack.c.h.b16 %v317
        %v840 = vunpack.c.l.b16 %v318
        %v841 = vunpack.c.h.b16 %v318
        %v842 = vunpack.c.l.b16 %v319
        %v843 = vunpack.c.h.b16 %v319
        %v844 = vunpack.c.l.b16 %v320
        %v845 = vunpack.c.h.b16 %v320
        %v846 = vunpack.c.l.b16 %v321
        %v847 = vunpack.c.h.b16 %v321
        %v848 = vunpack.c.l.b16 %v322
        %v849 = vunpack.c.h.b16 %v322
        %v850 = vunpack.c.l.b16 %v323
        %v851 = vunpack.c.h.b16 %v323
        %v852 = vunpack.c.l.b16 %v324
        %v853 = vunpack.c.h.b16 %v324
        %v854 = vunpack.c.l.b16 %v325
        %v855 = vunpack.c.h.b16 %v325
        %v856 = vunpack.c.l.b16 %v326
        %v857 = vunpack.c.h.b16 %v326
        %v858 = vunpack.c.l.b16 %v327
        %v859 = vunpack.c.h.b16 %v327
        %v860 = vunpack.c.l.b16 %v328
        %v861 = vunpack.c.h.b16 %v328
        %v862 = vunpack.c.l.b16 %v329
        %v863 = vunpack.c.h.b16 %v329
        %v864 = vunpack.c.l.b16 %v330
        %v865 = vunpack.c.h.b16 %v330
        %v866 = vunpack.c.l.b16 %v331
        %v867 = vunpack.c.h.b16 %v331
        %v868 = vunpack.c.l.b16 %v332
        %v869 = vunpack.c.h.b16 %v332
        %v870 = vunpack.c.l.b16 %v333
        %v871 = vunpack.c.h.b16 %v333
        %v872 = vunpack.c.l.b16 %v334
        %v873 = vunpack.c.h.b16 %v334
        %v874 = vunpack.c.l.b16 %v335
        %v875 = vunpack.c.h.b16 %v335
        %v876 = vunpack.c.l.b16 %v336
        %v877 = vunpack.c.h.b16 %v336
        %v878 = vunpack.c.l.b16 %v337
        %v879 = vunpack.c.h.b16 %v337
        %v880 = vunpack.c.l.b16 %v338
        %v881 = vunpack.c.h.b16 %v338
        %v882 = vunpack.c.l.b16 %v339
        %v883 = vunpack.c.h.b16 %v339
        %v884 = vunpack.c.l.b16 %v340
        %v885 = vunpack.c.h.b16 %v340
        %v886 = vunpack.c.l.b16 %v341
        %v887 = vunpack.c.h.b16 %v341
        %v888 = vunpack.c.l.b16 %v342
        %v889 = vunpack.c.h.b16 %v342
        %v890 = vunpack.c.l.b16 %v343
        %v891 = vunpack.c.h.b16 %v343
        %v892 = vunpack.c.l.b16 %v344
        %v893 = vunpack.c.h.b16 %v344
        %v894 = vunpack.c.l.b16 %v345
        %v895 = vunpack.c.h.b16 %v345
        %v896 = vunpack.c.l.b16 %v346
        %v897 = vunpack.c.h.b16 %v346
        %v898 = vunpack.c.l.b16 %v347
        %v899 = vunpack.c.h.b16 %v347
        %v900 = vunpack.c.l.b16 %v348
        %v901 = vunpack.c.h.b16 %v348
        %v902 = vunpack.c.l.b16 %v349
        %v903 = vunpack.c.h.b16 %v349
        %v904 = vunpack.c.l.b16 %v350
        %v905 = vunpack.c.h.b16 %v350
        %v906 = vunpack.c.l.b16 %v351
        %v907 = vunpack.c.h.b16 %v351
        %v908 = vunpack.c.l.b16 %v352
        %v909 = vunpack.c.h.b16 %v352
        %v910 = vunpack.c.l.b16 %v353
        %v911 = vunpack.c.h.b16 %v353
        %v912 = vunpack.c.l.b16 %v354
        %v913 = vunpack.c.h.b16 %v354
        %v914 = vunpack.c.l.b16 %v355
        %v915 = vunpack.c.h.b16 %v355
        %v916 = vunpack.c.l.b16 %v356
        %v917 = vunpack.c.h.b16 %v356
        %v918 = vunpack.c.l.b16 %v357
        %v919 = vunpack.c.h.b16 %v357
        %v920 = vunpack.c.l.b16 %v358
        %v921 = vunpack.c.h.b16 %v358
        %v922 = vunpack.c.l.b16 %v359
        %v923 = vunpack.c.h.b16 %v359
        %v924 = vunpack.c.l.b16 %v360
        %v925 = vunpack.c.h.b16 %v360
        %v926 = vunpack.c.l.b16 %v361
        %v927 = vunpack.c.h.b16 %v361
        %v928 = vunpack.c.l.b16 %v362
        %v929 = vunpack.c.h.b16 %v362
        %v930 = vunpack.c.l.b16 %v363
        %v931 = vunpack.c.h.b16 %v363
        %v932 = vunpack.c.l.b16 %v364
        %v933 = vunpack.c.h.b16 %v364
        %v934 = vunpack.c.l.b16 %v365
        %v935 = vunpack.c.h.b16 %v365
        %v936 = vunpack.c.l.b16 %v366
        %v937 = vunpack.c.h.b16 %v366
        %v938 = vunpack.c.l.b16 %v367
        %v939 = vunpack.c.h.b16 %v367
        %v940 = vpack.c.b16 %v816, %v812
        %v941 = vpack.c.b16 %v817, %v813
        %v942 = vpack.c.b16 %v818, %v814
        %v943 = vpack.c.b16 %v819, %v815
        %v944 = vpack.c.b16 %v824, %v820
        %v945 = vpack.c.b16 %v825, %v821
        %v946 = vpack.c.b16 %v826, %v822
        %v947 = vpack.c.b16 %v827, %v823
        %v948 = vpack.c.b16 %v832, %v828
        %v949 = vpack.c.b16 %v833, %v829
        %v950 = vpack.c.b16 %v834, %v830
        %v951 = vpack.c.b16 %v835, %v831
        %v952 = vpack.c.b16 %v840, %v836
        %v953 = vpack.c.b16 %v841, %v837
        %v954 = vpack.c.b16 %v842, %v838
        %v955 = vpack.c.b16 %v843, %v839
        %v956 = vpack.c.b16 %v848, %v844
        %v957 = vpack.c.b16 %v849, %v845
        %v958 = vpack.c.b16 %v850, %v846
        %v959 = vpack.c.b16 %v851, %v847
        %v960 = vpack.c.b16 %v856, %v852
        %v961 = vpack.c.b16 %v857, %v853
        %v962 = vpack.c.b16 %v858, %v854
        %v963 = vpack.c.b16 %v859, %v855
        %v964 = vpack.c.b16 %v864, %v860
        %v965 = vpack.c.b16 %v865, %v861
        %v966 = vpack.c.b16 %v866, %v862
        %v967 = vpack.c.b16 %v867, %v863
        %v968 = vpack.c.b16 %v872, %v868
        %v969 = vpack.c.b16 %v873, %v869
        %v970 = vpack.c.b16 %v874, %v870
        %v971 = vpack.c.b16 %v875, %v871
        %v972 = vpack.c.b16 %v880, %v876
        %v973 = vpack.c.b16 %v881, %v877
        %v974 = vpack.c.b16 %v882, %v878
        %v975 = vpack.c.b16 %v883, %v879
        %v976 = vpack.c.b16 %v888, %v884
        %v977 = vpack.c.b16 %v889, %v885
        %v978 = vpack.c.b16 %v890, %v886
        %v979 = vpack.c.b16 %v891, %v887
        %v980 = vpack.c.b16 %v896, %v892
        %v981 = vpack.c.b16 %v897, %v893
        %v982 = vpack.c.b16 %v898, %v894
        %v983 = vpack.c.b16 %v899, %v895
        %v984 = vpack.c.b16 %v904, %v900
        %v985 = vpack.c.b16 %v905, %v901
        %v986 = vpack.c.b16 %v906, %v902
        %v987 = vpack.c.b16 %v907, %v903
        %v988 = vpack.c.b16 %v912, %v908
        %v989 = vpack.c.b16 %v913, %v909
        %v990 = vpack.c.b16 %v914, %v910
        %v991 = vpack.c.b16 %v915, %v911
        %v992 = vpack.c.b16 %v920, %v916
        %v993 = vpack.c.b16 %v921, %v917
        %v994 = vpack.c.b16 %v922, %v918
        %v995 = vpack.c.b16 %v923, %v919
        %v996 = vpack.c.b16 %v928, %v924
        %v997 = vpack.c.b16 %v929, %v925
        %v998 = vpack.c.b16 %v930, %v926
        %v999 = vpack.c.b16 %v931, %v927
        %v1000 = vpack.c.b16 %v936, %v932
        %v1001 = vpack.c.b16 %v937, %v933
        %v1002 = vpack.c.b16 %v938, %v934
        %v1003 = vpack.c.b16 %v939, %v935
        %1068 = vmatpush.bf16.msra.mxu0 %v968
        %1069 = vmatpush.bf16.msra.mxu0 %v964
        %1070 = vmatpush.bf16.msra.mxu0 %v960
        %1071 = vmatpush.bf16.msra.mxu0 %v956
        %1072 = vmatpush.bf16.msra.mxu0 %v952
        %1073 = vmatpush.bf16.msra.mxu0 %v948
        %1074 = vmatpush.bf16.msra.mxu0 %v944
        %1075 = vmatpush.bf16.msra.mxu0 %v940
        %1076 = vmatmul.bf16.gmra.mxu0 %v732
        %v1077 = vpop.f32.mrf.mxu0
        %v1078 = vadd.f32 %v602, %v1077
        %v1079 = vpop.f32.mrf.mxu0
        %v1080 = vadd.f32 %v604, %v1079
        %1081 = vmatmul.bf16.gmra.mxu0 %v734
        %v1082 = vpop.f32.mrf.mxu0
        %v1083 = vadd.f32 %v607, %v1082
        %v1084 = vpop.f32.mrf.mxu0
        %v1085 = vadd.f32 %v609, %v1084
        %1086 = vmatmul.bf16.gmra.mxu0 %v736
        %v1087 = vpop.f32.mrf.mxu0
        %v1088 = vadd.f32 %v612, %v1087
        %v1089 = vpop.f32.mrf.mxu0
        %v1090 = vadd.f32 %v614, %v1089
        %1091 = vmatmul.bf16.gmra.mxu0 %v738
        %v1092 = vpop.f32.mrf.mxu0
        %v1093 = vadd.f32 %v617, %v1092
        %v1094 = vpop.f32.mrf.mxu0
        %v1095 = vadd.f32 %v619, %v1094
        %1096 = vdwg.mxu0
        %1097 = vmatpush.bf16.msra.mxu0 %v1000
        %1098 = vmatpush.bf16.msra.mxu0 %v996
        %1099 = vmatpush.bf16.msra.mxu0 %v992
        %1100 = vmatpush.bf16.msra.mxu0 %v988
        %1101 = vmatpush.bf16.msra.mxu0 %v984
        %1102 = vmatpush.bf16.msra.mxu0 %v980
        %1103 = vmatpush.bf16.msra.mxu0 %v976
        %1104 = vmatpush.bf16.msra.mxu0 %v972
        %1105 = vmatmul.bf16.gmra.mxu0 %v733
        %v1106 = vpop.f32.mrf.mxu0
        %v1107 = vadd.f32 %v1078, %v1106
        %v1108 = vpop.f32.mrf.mxu0
        %v1109 = vadd.f32 %v1080, %v1108
        %1110 = vmatmul.bf16.gmra.mxu0 %v735
        %v1111 = vpop.f32.mrf.mxu0
        %v1112 = vadd.f32 %v1083, %v1111
        %v1113 = vpop.f32.mrf.mxu0
        %v1114 = vadd.f32 %v1085, %v1113
        %1115 = vmatmul.bf16.gmra.mxu0 %v737
        %v1116 = vpop.f32.mrf.mxu0
        %v1117 = vadd.f32 %v1088, %v1116
        %v1118 = vpop.f32.mrf.mxu0
        %v1119 = vadd.f32 %v1090, %v1118
        %1120 = vmatmul.bf16.gmra.mxu0 %v739
        %v1121 = vpop.f32.mrf.mxu0
        %v1122 = vadd.f32 %v1093, %v1121
        %v1123 = vpop.f32.mrf.mxu0
        %v1124 = vadd.f32 %v1095, %v1123
        %1125 = vdwg.mxu0
        %1126 = vmatpush.bf16.msra.mxu0 %v969
        %1127 = vmatpush.bf16.msra.mxu0 %v965
        %1128 = vmatpush.bf16.msra.mxu0 %v961
        %1129 = vmatpush.bf16.msra.mxu0 %v957
        %1130 = vmatpush.bf16.msra.mxu0 %v953
        %1131 = vmatpush.bf16.msra.mxu0 %v949
        %1132 = vmatpush.bf16.msra.mxu0 %v945
        %1133 = vmatpush.bf16.msra.mxu0 %v941
        %1134 = vmatmul.bf16.gmra.mxu0 %v732
        %v1135 = vpop.f32.mrf.mxu0
        %v1136 = vadd.f32 %v631, %v1135
        %v1137 = vpop.f32.mrf.mxu0
        %v1138 = vadd.f32 %v633, %v1137
        %1139 = vmatmul.bf16.gmra.mxu0 %v734
        %v1140 = vpop.f32.mrf.mxu0
        %v1141 = vadd.f32 %v636, %v1140
        %v1142 = vpop.f32.mrf.mxu0
        %v1143 = vadd.f32 %v638, %v1142
        %1144 = vmatmul.bf16.gmra.mxu0 %v736
        %v1145 = vpop.f32.mrf.mxu0
        %v1146 = vadd.f32 %v641, %v1145
        %v1147 = vpop.f32.mrf.mxu0
        %v1148 = vadd.f32 %v643, %v1147
        %1149 = vmatmul.bf16.gmra.mxu0 %v738
        %v1150 = vpop.f32.mrf.mxu0
        %v1151 = vadd.f32 %v646, %v1150
        %v1152 = vpop.f32.mrf.mxu0
        %v1153 = vadd.f32 %v648, %v1152
        %1154 = vdwg.mxu0
        %1155 = vmatpush.bf16.msra.mxu0 %v1001
        %1156 = vmatpush.bf16.msra.mxu0 %v997
        %1157 = vmatpush.bf16.msra.mxu0 %v993
        %1158 = vmatpush.bf16.msra.mxu0 %v989
        %1159 = vmatpush.bf16.msra.mxu0 %v985
        %1160 = vmatpush.bf16.msra.mxu0 %v981
        %1161 = vmatpush.bf16.msra.mxu0 %v977
        %1162 = vmatpush.bf16.msra.mxu0 %v973
        %1163 = vmatmul.bf16.gmra.mxu0 %v733
        %v1164 = vpop.f32.mrf.mxu0
        %v1165 = vadd.f32 %v1136, %v1164
        %v1166 = vpop.f32.mrf.mxu0
        %v1167 = vadd.f32 %v1138, %v1166
        %1168 = vmatmul.bf16.gmra.mxu0 %v735
        %v1169 = vpop.f32.mrf.mxu0
        %v1170 = vadd.f32 %v1141, %v1169
        %v1171 = vpop.f32.mrf.mxu0
        %v1172 = vadd.f32 %v1143, %v1171
        %1173 = vmatmul.bf16.gmra.mxu0 %v737
        %v1174 = vpop.f32.mrf.mxu0
        %v1175 = vadd.f32 %v1146, %v1174
        %v1176 = vpop.f32.mrf.mxu0
        %v1177 = vadd.f32 %v1148, %v1176
        %1178 = vmatmul.bf16.gmra.mxu0 %v739
        %v1179 = vpop.f32.mrf.mxu0
        %v1180 = vadd.f32 %v1151, %v1179
        %v1181 = vpop.f32.mrf.mxu0
        %v1182 = vadd.f32 %v1153, %v1181
        %1183 = vdwg.mxu0
        %1184 = vmatpush.bf16.msra.mxu0 %v970
        %1185 = vmatpush.bf16.msra.mxu0 %v966
        %1186 = vmatpush.bf16.msra.mxu0 %v962
        %1187 = vmatpush.bf16.msra.mxu0 %v958
        %1188 = vmatpush.bf16.msra.mxu0 %v954
        %1189 = vmatpush.bf16.msra.mxu0 %v950
        %1190 = vmatpush.bf16.msra.mxu0 %v946
        %1191 = vmatpush.bf16.msra.mxu0 %v942
        %1192 = vmatmul.bf16.gmra.mxu0 %v732
        %v1193 = vpop.f32.mrf.mxu0
        %v1194 = vadd.f32 %v660, %v1193
        %v1195 = vpop.f32.mrf.mxu0
        %v1196 = vadd.f32 %v662, %v1195
        %1197 = vmatmul.bf16.gmra.mxu0 %v734
        %v1198 = vpop.f32.mrf.mxu0
        %v1199 = vadd.f32 %v665, %v1198
        %v1200 = vpop.f32.mrf.mxu0
        %v1201 = vadd.f32 %v667, %v1200
        %1202 = vmatmul.bf16.gmra.mxu0 %v736
        %v1203 = vpop.f32.mrf.mxu0
        %v1204 = vadd.f32 %v670, %v1203
        %v1205 = vpop.f32.mrf.mxu0
        %v1206 = vadd.f32 %v672, %v1205
        %1207 = vmatmul.bf16.gmra.mxu0 %v738
        %v1208 = vpop.f32.mrf.mxu0
        %v1209 = vadd.f32 %v675, %v1208
        %v1210 = vpop.f32.mrf.mxu0
        %v1211 = vadd.f32 %v677, %v1210
        %1212 = vdwg.mxu0
        %1213 = vmatpush.bf16.msra.mxu0 %v1002
        %1214 = vmatpush.bf16.msra.mxu0 %v998
        %1215 = vmatpush.bf16.msra.mxu0 %v994
        %1216 = vmatpush.bf16.msra.mxu0 %v990
        %1217 = vmatpush.bf16.msra.mxu0 %v986
        %1218 = vmatpush.bf16.msra.mxu0 %v982
        %1219 = vmatpush.bf16.msra.mxu0 %v978
        %1220 = vmatpush.bf16.msra.mxu0 %v974
        %1221 = vmatmul.bf16.gmra.mxu0 %v733
        %v1222 = vpop.f32.mrf.mxu0
        %v1223 = vadd.f32 %v1194, %v1222
        %v1224 = vpop.f32.mrf.mxu0
        %v1225 = vadd.f32 %v1196, %v1224
        %1226 = vmatmul.bf16.gmra.mxu0 %v735
        %v1227 = vpop.f32.mrf.mxu0
        %v1228 = vadd.f32 %v1199, %v1227
        %v1229 = vpop.f32.mrf.mxu0
        %v1230 = vadd.f32 %v1201, %v1229
        %1231 = vmatmul.bf16.gmra.mxu0 %v737
        %v1232 = vpop.f32.mrf.mxu0
        %v1233 = vadd.f32 %v1204, %v1232
        %v1234 = vpop.f32.mrf.mxu0
        %v1235 = vadd.f32 %v1206, %v1234
        %1236 = vmatmul.bf16.gmra.mxu0 %v739
        %v1237 = vpop.f32.mrf.mxu0
        %v1238 = vadd.f32 %v1209, %v1237
        %v1239 = vpop.f32.mrf.mxu0
        %v1240 = vadd.f32 %v1211, %v1239
        %1241 = vdwg.mxu0
        %1242 = vmatpush.bf16.msra.mxu0 %v971
        %1243 = vmatpush.bf16.msra.mxu0 %v967
        %1244 = vmatpush.bf16.msra.mxu0 %v963
        %1245 = vmatpush.bf16.msra.mxu0 %v959
        %1246 = vmatpush.bf16.msra.mxu0 %v955
        %1247 = vmatpush.bf16.msra.mxu0 %v951
        %1248 = vmatpush.bf16.msra.mxu0 %v947
        %1249 = vmatpush.bf16.msra.mxu0 %v943
        %1250 = vmatmul.bf16.gmra.mxu0 %v732
        %v1251 = vpop.f32.mrf.mxu0
        %v1252 = vadd.f32 %v689, %v1251
        %v1253 = vpop.f32.mrf.mxu0
        %v1254 = vadd.f32 %v691, %v1253
        %1255 = vmatmul.bf16.gmra.mxu0 %v734
        %v1256 = vpop.f32.mrf.mxu0
        %v1257 = vadd.f32 %v694, %v1256
        %v1258 = vpop.f32.mrf.mxu0
        %v1259 = vadd.f32 %v696, %v1258
        %1260 = vmatmul.bf16.gmra.mxu0 %v736
        %v1261 = vpop.f32.mrf.mxu0
        %v1262 = vadd.f32 %v699, %v1261
        %v1263 = vpop.f32.mrf.mxu0
        %v1264 = vadd.f32 %v701, %v1263
        %1265 = vmatmul.bf16.gmra.mxu0 %v738
        %v1266 = vpop.f32.mrf.mxu0
        %v1267 = vadd.f32 %v704, %v1266
        %v1268 = vpop.f32.mrf.mxu0
        %v1269 = vadd.f32 %v706, %v1268
        %1270 = vdwg.mxu0
        %1271 = vmatpush.bf16.msra.mxu0 %v1003
        %1272 = vmatpush.bf16.msra.mxu0 %v999
        %1273 = vmatpush.bf16.msra.mxu0 %v995
        %1274 = vmatpush.bf16.msra.mxu0 %v991
        %1275 = vmatpush.bf16.msra.mxu0 %v987
        %1276 = vmatpush.bf16.msra.mxu0 %v983
        %1277 = vmatpush.bf16.msra.mxu0 %v979
        %1278 = vmatpush.bf16.msra.mxu0 %v975
        %1279 = vmatmul.bf16.gmra.mxu0 %v733
        %v1280 = vpop.f32.mrf.mxu0
        %v1281 = vadd.f32 %v1252, %v1280
        %v1282 = vpop.f32.mrf.mxu0
        %v1283 = vadd.f32 %v1254, %v1282
        %1284 = vmatmul.bf16.gmra.mxu0 %v735
        %v1285 = vpop.f32.mrf.mxu0
        %v1286 = vadd.f32 %v1257, %v1285
        %v1287 = vpop.f32.mrf.mxu0
        %v1288 = vadd.f32 %v1259, %v1287
        %1289 = vmatmul.bf16.gmra.mxu0 %v737
        %v1290 = vpop.f32.mrf.mxu0
        %v1291 = vadd.f32 %v1262, %v1290
        %v1292 = vpop.f32.mrf.mxu0
        %v1293 = vadd.f32 %v1264, %v1292
        %1294 = vmatmul.bf16.gmra.mxu0 %v739
        %v1295 = vpop.f32.mrf.mxu0
        %v1296 = vadd.f32 %v1267, %v1295
        %v1297 = vpop.f32.mrf.mxu0
        %v1298 = vadd.f32 %v1269, %v1297
        %1299 = vdwg.mxu0
        %v1300 = vld [vmem:[%s4] sm:$0xf]
        %v1302 = vperm.slane %v1300, 0
        %v1303 = vperm.slane %v1300, 1
        %v1304 = vperm.slane %v1300, 2
        %v1305 = vperm.slane %v1300, 3
        %v1310 = vadd.f32 %v1107, %v1302
        %v1311 = vadd.f32 %v1165, %v1303
        %v1312 = vadd.f32 %v1223, %v1304
        %v1313 = vadd.f32 %v1281, %v1305
        %v1314 = vadd.f32 %v1109, %v1302
        %v1315 = vadd.f32 %v1167, %v1303
        %v1316 = vadd.f32 %v1225, %v1304
        %v1317 = vadd.f32 %v1283, %v1305
        %v1318 = vadd.f32 %v1112, %v1302
        %v1319 = vadd.f32 %v1170, %v1303
        %v1320 = vadd.f32 %v1228, %v1304
        %v1321 = vadd.f32 %v1286, %v1305
        %v1322 = vadd.f32 %v1114, %v1302
        %v1323 = vadd.f32 %v1172, %v1303
        %v1324 = vadd.f32 %v1230, %v1304
        %v1325 = vadd.f32 %v1288, %v1305
        %v1326 = vadd.f32 %v1117, %v1302
        %v1327 = vadd.f32 %v1175, %v1303
        %v1328 = vadd.f32 %v1233, %v1304
        %v1329 = vadd.f32 %v1291, %v1305
        %v1330 = vadd.f32 %v1119, %v1302
        %v1331 = vadd.f32 %v1177, %v1303
        %v1332 = vadd.f32 %v1235, %v1304
        %v1333 = vadd.f32 %v1293, %v1305
        %v1334 = vadd.f32 %v1122, %v1302
        %v1335 = vadd.f32 %v1180, %v1303
        %v1336 = vadd.f32 %v1238, %v1304
        %v1337 = vadd.f32 %v1296, %v1305
        %v1338 = vadd.f32 %v1124, %v1302
        %v1339 = vadd.f32 %v1182, %v1303
        %v1340 = vadd.f32 %v1240, %v1304
        %v1341 = vadd.f32 %v1298, %v1305
        %v1342 = vmax.f32 %v1310, 0.0
        %v1343 = vmax.f32 %v1311, 0.0
        %v1344 = vmax.f32 %v1312, 0.0
        %v1345 = vmax.f32 %v1313, 0.0
        %v1346 = vmax.f32 %v1314, 0.0
        %v1347 = vmax.f32 %v1315, 0.0
        %v1348 = vmax.f32 %v1316, 0.0
        %v1349 = vmax.f32 %v1317, 0.0
        %v1350 = vmax.f32 %v1318, 0.0
        %v1351 = vmax.f32 %v1319, 0.0
        %v1352 = vmax.f32 %v1320, 0.0
        %v1353 = vmax.f32 %v1321, 0.0
        %v1354 = vmax.f32 %v1322, 0.0
        %v1355 = vmax.f32 %v1323, 0.0
        %v1356 = vmax.f32 %v1324, 0.0
        %v1357 = vmax.f32 %v1325, 0.0
        %v1358 = vmax.f32 %v1326, 0.0
        %v1359 = vmax.f32 %v1327, 0.0
        %v1360 = vmax.f32 %v1328, 0.0
        %v1361 = vmax.f32 %v1329, 0.0
        %v1362 = vmax.f32 %v1330, 0.0
        %v1363 = vmax.f32 %v1331, 0.0
        %v1364 = vmax.f32 %v1332, 0.0
        %v1365 = vmax.f32 %v1333, 0.0
        %v1366 = vmax.f32 %v1334, 0.0
        %v1367 = vmax.f32 %v1335, 0.0
        %v1368 = vmax.f32 %v1336, 0.0
        %v1369 = vmax.f32 %v1337, 0.0
        %v1370 = vmax.f32 %v1338, 0.0
        %v1371 = vmax.f32 %v1339, 0.0
        %v1372 = vmax.f32 %v1340, 0.0
        %v1373 = vmax.f32 %v1341, 0.0
        %v1374 = vadd.f32 %v1342, %v1346
        %v1375 = vadd.f32 %v1374, %v1350
        %v1376 = vadd.f32 %v1375, %v1354
        %v1377 = vadd.f32 %v1376, %v1358
        %v1378 = vadd.f32 %v1377, %v1362
        %v1379 = vadd.f32 %v1378, %v1366
        %v1380 = vadd.f32 %v1379, %v1370
        %v1381 = vrot.slane %v1380, 4
        %v1382 = vadd.f32 %v1380, %v1381
        %v1383 = vrot.slane %v1382, 2
        %v1384 = vadd.f32 %v1382, %v1383
        %v1385 = vrot.slane %v1384, 1
        %v1386 = vadd.f32 %v1384, %v1385
        %v1387 = vadd.f32 %v1343, %v1347
        %v1388 = vadd.f32 %v1387, %v1351
        %v1389 = vadd.f32 %v1388, %v1355
        %v1390 = vadd.f32 %v1389, %v1359
        %v1391 = vadd.f32 %v1390, %v1363
        %v1392 = vadd.f32 %v1391, %v1367
        %v1393 = vadd.f32 %v1392, %v1371
        %v1394 = vrot.slane %v1393, 4
        %v1395 = vadd.f32 %v1393, %v1394
        %v1396 = vrot.slane %v1395, 2
        %v1397 = vadd.f32 %v1395, %v1396
        %v1398 = vrot.slane %v1397, 1
        %v1399 = vadd.f32 %v1397, %v1398
        %v1400 = vadd.f32 %v1344, %v1348
        %v1401 = vadd.f32 %v1400, %v1352
        %v1402 = vadd.f32 %v1401, %v1356
        %v1403 = vadd.f32 %v1402, %v1360
        %v1404 = vadd.f32 %v1403, %v1364
        %v1405 = vadd.f32 %v1404, %v1368
        %v1406 = vadd.f32 %v1405, %v1372
        %v1407 = vrot.slane %v1406, 4
        %v1408 = vadd.f32 %v1406, %v1407
        %v1409 = vrot.slane %v1408, 2
        %v1410 = vadd.f32 %v1408, %v1409
        %v1411 = vrot.slane %v1410, 1
        %v1412 = vadd.f32 %v1410, %v1411
        %v1413 = vadd.f32 %v1345, %v1349
        %v1414 = vadd.f32 %v1413, %v1353
        %v1415 = vadd.f32 %v1414, %v1357
        %v1416 = vadd.f32 %v1415, %v1361
        %v1417 = vadd.f32 %v1416, %v1365
        %v1418 = vadd.f32 %v1417, %v1369
        %v1419 = vadd.f32 %v1418, %v1373
        %v1420 = vrot.slane %v1419, 4
        %v1421 = vadd.f32 %v1419, %v1420
        %v1422 = vrot.slane %v1421, 2
        %v1423 = vadd.f32 %v1421, %v1422
        %v1424 = vrot.slane %v1423, 1
        %v1425 = vadd.f32 %v1423, %v1424
        %v1426 = vmul.f32 %v1386, 0.015625
        %v1427 = vmul.f32 %v1399, 0.015625
        %v1428 = vmul.f32 %v1412, 0.015625
        %v1429 = vmul.f32 %v1425, 0.015625
        %v1430 = vld [vmem:[%s5] sm:$0xff]
        %v1431 = vld [vmem:[%s5 + $0x8] sm:$0xff]
        %v1432 = vld [vmem:[%s5 + $0x10] sm:$0xff]
        %v1433 = vld [vmem:[%s5 + $0x18] sm:$0xff]
        %v1434 = vld [vmem:[%s5 + $0x20] sm:$0xff]
        %v1435 = vld [vmem:[%s5 + $0x28] sm:$0xff]
        %v1436 = vld [vmem:[%s5 + $0x30] sm:$0xff]
        %v1437 = vld [vmem:[%s5 + $0x38] sm:$0xff]
        %v1438 = vld [vmem:[%s5 + $0x40] sm:$0xff]
        %v1439 = vld [vmem:[%s5 + $0x48] sm:$0xff]
        %v1440 = vld [vmem:[%s5 + $0x50] sm:$0xff]
        %v1441 = vld [vmem:[%s5 + $0x58] sm:$0xff]
        %v1442 = vld [vmem:[%s5 + $0x60] sm:$0xff]
        %v1443 = vld [vmem:[%s5 + $0x68] sm:$0xff]
        %v1444 = vld [vmem:[%s5 + $0x70] sm:$0xff]
        %v1445 = vld [vmem:[%s5 + $0x78] sm:$0xff]
        %v1446 = vld [vmem:[%s5 + $0x80] sm:$0xff]
        %v1447 = vld [vmem:[%s5 + $0x88] sm:$0xff]
        %v1448 = vld [vmem:[%s5 + $0x90] sm:$0xff]
        %v1449 = vld [vmem:[%s5 + $0x98] sm:$0xff]
        %v1450 = vld [vmem:[%s5 + $0xa0] sm:$0xff]
        %v1451 = vld [vmem:[%s5 + $0xa8] sm:$0xff]
        %v1452 = vld [vmem:[%s5 + $0xb0] sm:$0xff]
        %v1453 = vld [vmem:[%s5 + $0xb8] sm:$0xff]
        %v1454 = vld [vmem:[%s5 + $0xc0] sm:$0xff]
        %v1455 = vld [vmem:[%s5 + $0xc8] sm:$0xff]
        %v1456 = vld [vmem:[%s5 + $0xd0] sm:$0xff]
        %v1457 = vld [vmem:[%s5 + $0xd8] sm:$0xff]
        %v1458 = vld [vmem:[%s5 + $0xe0] sm:$0xff]
        %v1459 = vld [vmem:[%s5 + $0xe8] sm:$0xff]
        %v1460 = vld [vmem:[%s5 + $0xf0] sm:$0xff]
        %v1461 = vld [vmem:[%s5 + $0xf8] sm:$0xff]
        %v1462 = vld [vmem:[%s5 + $0x100] sm:$0xff]
        %v1463 = vld [vmem:[%s5 + $0x108] sm:$0xff]
        %v1464 = vld [vmem:[%s5 + $0x110] sm:$0xff]
        %v1465 = vld [vmem:[%s5 + $0x118] sm:$0xff]
        %v1466 = vld [vmem:[%s5 + $0x120] sm:$0xff]
        %v1467 = vld [vmem:[%s5 + $0x128] sm:$0xff]
        %v1468 = vld [vmem:[%s5 + $0x130] sm:$0xff]
        %v1469 = vld [vmem:[%s5 + $0x138] sm:$0xff]
        %v1470 = vld [vmem:[%s5 + $0x140] sm:$0xff]
        %v1471 = vld [vmem:[%s5 + $0x148] sm:$0xff]
        %v1472 = vld [vmem:[%s5 + $0x150] sm:$0xff]
        %v1473 = vld [vmem:[%s5 + $0x158] sm:$0xff]
        %v1474 = vld [vmem:[%s5 + $0x160] sm:$0xff]
        %v1475 = vld [vmem:[%s5 + $0x168] sm:$0xff]
        %v1476 = vld [vmem:[%s5 + $0x170] sm:$0xff]
        %v1477 = vld [vmem:[%s5 + $0x178] sm:$0xff]
        %v1478 = vld [vmem:[%s5 + $0x180] sm:$0xff]
        %v1479 = vld [vmem:[%s5 + $0x188] sm:$0xff]
        %v1480 = vld [vmem:[%s5 + $0x190] sm:$0xff]
        %v1481 = vld [vmem:[%s5 + $0x198] sm:$0xff]
        %v1482 = vld [vmem:[%s5 + $0x1a0] sm:$0xff]
        %v1483 = vld [vmem:[%s5 + $0x1a8] sm:$0xff]
        %v1484 = vld [vmem:[%s5 + $0x1b0] sm:$0xff]
        %v1485 = vld [vmem:[%s5 + $0x1b8] sm:$0xff]
        %v1486 = vld [vmem:[%s5 + $0x1c0] sm:$0xff]
        %v1487 = vld [vmem:[%s5 + $0x1c8] sm:$0xff]
        %v1488 = vld [vmem:[%s5 + $0x1d0] sm:$0xff]
        %v1489 = vld [vmem:[%s5 + $0x1d8] sm:$0xff]
        %v1490 = vld [vmem:[%s5 + $0x1e0] sm:$0xff]
        %v1491 = vld [vmem:[%s5 + $0x1e8] sm:$0xff]
        %v1492 = vld [vmem:[%s5 + $0x1f0] sm:$0xff]
        %v1493 = vld [vmem:[%s5 + $0x1f8] sm:$0xff]
        %1494 = vmatpush.msra.mxu0 %v1445
        %1495 = vmatpush.msra.mxu0 %v1444
        %1496 = vmatpush.msra.mxu0 %v1443
        %1497 = vmatpush.msra.mxu0 %v1442
        %1498 = vmatpush.msra.mxu0 %v1441
        %1499 = vmatpush.msra.mxu0 %v1440
        %1500 = vmatpush.msra.mxu0 %v1439
        %1501 = vmatpush.msra.mxu0 %v1438
        %1502 = vmatpush.msra.mxu0 %v1437
        %1503 = vmatpush.msra.mxu0 %v1436
        %1504 = vmatpush.msra.mxu0 %v1435
        %1505 = vmatpush.msra.mxu0 %v1434
        %1506 = vmatpush.msra.mxu0 %v1433
        %1507 = vmatpush.msra.mxu0 %v1432
        %1508 = vmatpush.msra.mxu0 %v1431
        %1509 = vmatpush.msra.mxu0 %v1430
        %1510 = vmatmul.f32.gmra.mxu0 %v1426
        %v1511 = vpop.f32.mrf.mxu0
        %v1512 = vadd.f32 0.0, %v1511
        %1513 = vdwg.mxu0
        %1514 = vmatpush.msra.mxu0 %v1461
        %1515 = vmatpush.msra.mxu0 %v1460
        %1516 = vmatpush.msra.mxu0 %v1459
        %1517 = vmatpush.msra.mxu0 %v1458
        %1518 = vmatpush.msra.mxu0 %v1457
        %1519 = vmatpush.msra.mxu0 %v1456
        %1520 = vmatpush.msra.mxu0 %v1455
        %1521 = vmatpush.msra.mxu0 %v1454
        %1522 = vmatpush.msra.mxu0 %v1453
        %1523 = vmatpush.msra.mxu0 %v1452
        %1524 = vmatpush.msra.mxu0 %v1451
        %1525 = vmatpush.msra.mxu0 %v1450
        %1526 = vmatpush.msra.mxu0 %v1449
        %1527 = vmatpush.msra.mxu0 %v1448
        %1528 = vmatpush.msra.mxu0 %v1447
        %1529 = vmatpush.msra.mxu0 %v1446
        %1530 = vmatmul.f32.gmra.mxu0 %v1427
        %v1531 = vpop.f32.mrf.mxu0
        %v1532 = vadd.f32 %v1512, %v1531
        %1533 = vdwg.mxu0
        %1534 = vmatpush.msra.mxu0 %v1477
        %1535 = vmatpush.msra.mxu0 %v1476
        %1536 = vmatpush.msra.mxu0 %v1475
        %1537 = vmatpush.msra.mxu0 %v1474
        %1538 = vmatpush.msra.mxu0 %v1473
        %1539 = vmatpush.msra.mxu0 %v1472
        %1540 = vmatpush.msra.mxu0 %v1471
        %1541 = vmatpush.msra.mxu0 %v1470
        %1542 = vmatpush.msra.mxu0 %v1469
        %1543 = vmatpush.msra.mxu0 %v1468
        %1544 = vmatpush.msra.mxu0 %v1467
        %1545 = vmatpush.msra.mxu0 %v1466
        %1546 = vmatpush.msra.mxu0 %v1465
        %1547 = vmatpush.msra.mxu0 %v1464
        %1548 = vmatpush.msra.mxu0 %v1463
        %1549 = vmatpush.msra.mxu0 %v1462
        %1550 = vmatmul.f32.gmra.mxu0 %v1428
        %v1551 = vpop.f32.mrf.mxu0
        %v1552 = vadd.f32 %v1532, %v1551
        %1553 = vdwg.mxu0
        %1554 = vmatpush.msra.mxu0 %v1493
        %1555 = vmatpush.msra.mxu0 %v1492
        %1556 = vmatpush.msra.mxu0 %v1491
        %1557 = vmatpush.msra.mxu0 %v1490
        %1558 = vmatpush.msra.mxu0 %v1489
        %1559 = vmatpush.msra.mxu0 %v1488
        %1560 = vmatpush.msra.mxu0 %v1487
        %1561 = vmatpush.msra.mxu0 %v1486
        %1562 = vmatpush.msra.mxu0 %v1485
        %1563 = vmatpush.msra.mxu0 %v1484
        %1564 = vmatpush.msra.mxu0 %v1483
        %1565 = vmatpush.msra.mxu0 %v1482
        %1566 = vmatpush.msra.mxu0 %v1481
        %1567 = vmatpush.msra.mxu0 %v1480
        %1568 = vmatpush.msra.mxu0 %v1479
        %1569 = vmatpush.msra.mxu0 %v1478
        %1570 = vmatmul.f32.gmra.mxu0 %v1429
        %v1571 = vpop.f32.mrf.mxu0
        %v1572 = vadd.f32 %v1552, %v1571
        %1573 = vdwg.mxu0
        %v1574 = vld [vmem:[%s6] sm:$0x1]
        %v1575 = vadd.f32 %v1572, %v1574
        %1576 = vst [vmem:[%s285] sm:$0x1] %v1575
        %s1577 = sand.u32 %s186, 1
        %s1578 = scalar_lea.sflag [#allocation3], %s1577
        %s1579 = sand.u32 %s186, 1
        %s1580 = scalar_lea.vmem [#allocation2], %s1579
        // Predicated region
        $region49: #{slowfast_forward.11} parent=47 // pred_check
          %p1581 = pneg %p196
        $region50: #{slowfast_forward.11} parent=47 // pred_check_branch
          %1583 = sbr.rel (%p1581) target = $region52
        $region51: #{slowfast_forward.11} parent=47 // pred_region
          %1585 = vsyncadd %s1578, 0
          %s1586 = scalar_lea.hbm %s7, %s21
          %s1588 = sshll.u32 %s1580, 4
          %s1589 = int_to_ptr.vmem [resolvable:$true] %s1588
          %s1590 = sshll.u32 %s1586, 4
          %s1591 = int_to_ptr.hbm [resolvable:$true] %s1590
          %1593 = dma.vmem_to_hbm [thread:$0]  %s1589, 16, %s1591, %s1578
        $region52: #{slowfast_forward.11} parent=47 // pred_fallthru
          _
      $region48: #{slowfast_forward.11} parent=5 // pred_fallthru
        _
      %p1594 = scmp.le.s32.totalorder 2, %s16
      // Predicated region
      $region53: #{slowfast_forward.11} parent=5 // pred_check
        %p1595 = pneg %p1594
      $region54: #{slowfast_forward.11} parent=5 // pred_check_branch
        %1597 = sbr.rel (%p1595) target = $region56
      $region55: #{slowfast_forward.11} parent=5 // pred_region
        %s1598 = ssub.s32 %s16, 2
        // Predicated region
        $region57: #{slowfast_forward.11} parent=55 // pred_check
          %p1599 = pneg %p202
        $region58: #{slowfast_forward.11} parent=55 // pred_check_branch
          %1601 = sbr.rel (%p1599) target = $region60
        $region59: #{slowfast_forward.11} parent=55 // pred_region
          %s1602 = sand.u32 %s187, 1
          %s1603 = scalar_lea.sflag [#allocation3], %s1602
          %s1604 = sand.u32 %s187, 1
          %s1605 = scalar_lea.vmem [#allocation2], %s1604
          %1607 = dma.done %s1603, 16
        $region60: #{slowfast_forward.11} parent=55 // pred_fallthru
          _
      $region56: #{slowfast_forward.11} parent=5 // pred_fallthru
        _
    $region6: #{slowfast_forward.11} parent=1 // loop_footer
      %s20 = sadd.s32 1, %s16
    $region7: #{slowfast_forward.11} parent=1 // loop_footer_branch
      %15 = sbr.rel target = $region3
    $region8: #{slowfast_forward.11} parent=1 // loop_exit
      _
    %1608 = vsyncpa [#allocation3], 1
    %s1609 = scalar_lea.sflag [#allocation3], 1
    %1610 = vsyncpa %s1609, 1

</llo_original>
